<compile_context>
chip_gen: v5e
topology: v5e:2x2
jax: 0.10.0
libtpu: 0.0.40
codegen_flags: <defaults>
</compile_context>

<pallas_src>
import math

import jax
import jax.numpy as jnp
from jax import lax
from jax.experimental import pallas as pl
from jax.experimental.pallas import tpu as pltpu

# ----- model hyperparameters (small, synthetic) -----
HID = 32           # hidden dim
N_HEADS = 4
HEAD_DIM = HID // N_HEADS
PF_DIM = 64        # position-wise FF dim
PROTEIN_DIM = 32   # raw protein feature dim
LOCAL_DIM = 32     # raw local-residue feature dim
KS = 3             # encoder conv kernel size
N_CONV_LAYERS = 2

INV_SCALE = 1.0 / math.sqrt(HEAD_DIM)
RES_SCALE = math.sqrt(0.5)

_WEIGHT_ORDER = (
    'enc_fc_w', 'enc_fc_b', 'enc_conv_w', 'enc_conv_b', 'enc_ln',
    'ft_w', 'ft_b',
    'sa_qkv_w', 'sa_qkv_b', 'sa_o_w', 'sa_o_b',
    'ea_q_w', 'ea_q_b', 'ea_kv_w', 'ea_kv_b', 'ea_o_w', 'ea_o_b',
    'dec_ln_g', 'dec_ln_b',
    'pf1_w', 'pf1_b', 'pf2_w', 'pf2_b',
    'fc1_w', 'fc1_b', 'fc2_w', 'fc2_b',
)


def _shifted_eye(n_rows, n_cols, shift):
    """M[i, j] = 1.0 iff i == j + shift. Built from iota, lives entirely in vregs.

    Used both as the conv shift operator and as an MXU-friendly lane
    selection/placement operator (avoids non-tile-aligned value slices)."""
    r = lax.broadcasted_iota(jnp.int32, (n_rows, n_cols), 0)
    c = lax.broadcasted_iota(jnp.int32, (n_rows, n_cols), 1)
    return jnp.where(r == c + shift, 1.0, 0.0)


# ============================ fused predictor kernel ============================

def _predictor_kernel(
        lnum_ref, pnum_ref,                       # scalar-prefetch (SMEM)
        prot_ref, local_ref,                      # per-batch activations
        enc_fc_w, enc_fc_b, enc_conv_w, enc_conv_b, enc_ln,
        ft_w, ft_b,
        sa_qkv_w, sa_qkv_b, sa_o_w, sa_o_b,
        ea_q_w, ea_q_b, ea_kv_w, ea_kv_b, ea_o_w, ea_o_b,
        dec_ln_g, dec_ln_b,
        pf1_w, pf1_b, pf2_w, pf2_b,
        fc1_w, fc1_b, fc2_w, fc2_b,
        attn_ref, misc_ref):
    """Encoder + decoder + head for one batch element, fully VMEM-resident."""
    f32 = jnp.float32
    b = pl.program_id(0)
    Lp = prot_ref.shape[1]
    Ll = local_ref.shape[1]

    # ---- masks built in-kernel from SMEM scalars (no host-side mask ops) ----
    n_loc = lnum_ref[b]
    n_prot = pnum_ref[b]
    qmask = lax.broadcasted_iota(jnp.int32, (Ll, 1), 0) < n_loc    # self-attn query mask
    kmask = lax.broadcasted_iota(jnp.int32, (1, Lp), 1) < n_prot   # cross-attn key mask
    lane = lax.broadcasted_iota(jnp.int32, (1, HID), 1)

    # lane-selection operators (hoisted; reused by GLU / QKV / KV splits)
    sel_hi_2h = _shifted_eye(2 * HID, HID, HID)        # lanes [HID, 2*HID)   -> [0, HID)
    sel_k_3h = _shifted_eye(3 * HID, HID, HID)         # lanes [HID, 2*HID)   -> [0, HID)
    sel_v_3h = _shifted_eye(3 * HID, HID, 2 * HID)     # lanes [2*HID, 3*HID) -> [0, HID)

    def layer_norm(x, g, beta):
        mu = jnp.mean(x, axis=-1, keepdims=True)
        var = jnp.mean((x - mu) ** 2, axis=-1, keepdims=True)
        return (x - mu) * lax.rsqrt(var + 1e-5) * g + beta          # exact rsqrt (EUP)

    # ============================== encoder ==============================
    x = jnp.dot(prot_ref[0], enc_fc_w[...], preferred_element_type=f32) + enc_fc_b[...]

    # Conv taps x[t-1] / x[t+1] via in-kernel shift operators (zero-padded ends).
    # TODO(synk): for long sequences replace these with pltpu.roll on the sublane
    # axis; at Lp=16 the in-vreg (Lp,Lp) selection matmul is negligible and fully
    # removes the O((B*Lp)^2) HBM shift matrices of the previous version.
    shift_prev = _shifted_eye(Lp, Lp, 1)    # row t <- x[t-1]
    shift_next = _shifted_eye(Lp, Lp, -1)   # row t <- x[t+1]

    for layer in range(N_CONV_LAYERS):
        left = jnp.dot(shift_prev, x, preferred_element_type=f32)
        right = jnp.dot(shift_next, x, preferred_element_type=f32)
        # fused GLU: one 2*HID-wide weight per tap (columns = [value | gate])
        ag = enc_conv_b[layer]
        for j, tap in enumerate((left, x, right)):
            ag = ag + jnp.dot(tap, enc_conv_w[layer * KS + j],
                              preferred_element_type=f32)
        a = ag[:, :HID]                                               # zero-offset slice
        g = jnp.dot(ag, sel_hi_2h, preferred_element_type=f32)        # gate half -> lanes 0..HID
        gate = 0.5 * (jnp.tanh(0.5 * g) + 1.0)                        # exact sigmoid, one EUP op
        x = (a * gate + x) * RES_SCALE
    enc = layer_norm(x, enc_ln[0], enc_ln[1])                          # (Lp, HID), stays on-chip

    # ============================== decoder ==============================
    def mha(q, k, v, mask, wo, bo, collect_probs):
        n_k = k.shape[0]
        ctx = jnp.zeros((q.shape[0], HID), f32)
        probs = jnp.zeros((q.shape[0], N_HEADS * n_k), f32) if collect_probs else None
        for h in range(N_HEADS):
            hm = jnp.where((lane >= h * HEAD_DIM) & (lane < (h + 1) * HEAD_DIM), 1.0, 0.0)
            # (q*hm) @ k^T == q_h @ k_h^T (masked lanes contribute zero)
            e = lax.dot_general(q * hm, k, (((1,), (1,)), ((), ())),
                                preferred_element_type=f32) * INV_SCALE
            e = jnp.where(mask, e, -1e10)                 # masked_fill(mask == 0, -1e10)
            e = e - jnp.max(e, axis=-1, keepdims=True)
            p = jnp.exp(e)
            p = p / jnp.sum(p, axis=-1, keepdims=True)    # exact softmax
            if collect_probs:
                # place head-h probs at lanes [h*n_k, (h+1)*n_k) of the dense row
                probs = probs + jnp.dot(
                    p, _shifted_eye(n_k, N_HEADS * n_k, -h * n_k),
                    preferred_element_type=f32)
            # head lanes are disjoint -> accumulation lands in concat-of-heads layout
            ctx = ctx + jnp.dot(p, v * hm, preferred_element_type=f32)
        # O-projection hoisted out of the head loop (single matmul per block)
        out = jnp.dot(ctx, wo[...], preferred_element_type=f32) + bo[...]
        return out, probs

    trg = jnp.dot(local_ref[0], ft_w[...], preferred_element_type=f32) + ft_b[...]

    # --- self-attention (fused QKV projection) + residual + LN ---
    # TODO(synk): query-only masking of the self-attention matches canonical
    # TransformerCPI; verify against the actual reference decoder.
    qkv = jnp.dot(trg, sa_qkv_w[...], preferred_element_type=f32) + sa_qkv_b[...]
    q = qkv[:, :HID]
    k = jnp.dot(qkv, sel_k_3h, preferred_element_type=f32)
    v = jnp.dot(qkv, sel_v_3h, preferred_element_type=f32)
    sa_out, _ = mha(q, k, v, qmask, sa_o_w, sa_o_b, collect_probs=False)
    trg = layer_norm(trg + sa_out, dec_ln_g[0], dec_ln_b[0])

    # --- cross-attention local x protein (fused KV projection) + residual + LN ---
    q = jnp.dot(trg, ea_q_w[...], preferred_element_type=f32) + ea_q_b[...]
    kv = jnp.dot(enc, ea_kv_w[...], preferred_element_type=f32) + ea_kv_b[...]
    k = kv[:, :HID]
    v = jnp.dot(kv, sel_hi_2h, preferred_element_type=f32)
    ea_out, probs = mha(q, k, v, kmask, ea_o_w, ea_o_b, collect_probs=True)
    attn_ref[0] = probs                                   # one dense 64-lane store
    trg = layer_norm(trg + ea_out, dec_ln_g[1], dec_ln_b[1])

    # --- position-wise feed-forward + residual + LN ---
    h1 = jnp.maximum(jnp.dot(trg, pf1_w[...], preferred_element_type=f32)
                     + pf1_b[...], 0.0)
    ff = jnp.dot(h1, pf2_w[...], preferred_element_type=f32) + pf2_b[...]
    trg = layer_norm(trg + ff, dec_ln_g[2], dec_ln_b[2])

    # --- norm-weighted pooling over residues ---
    # TODO(synk): padded local positions are included in this pooling softmax,
    # matching the canonical TransformerCPI decoder (reference decoder not given).
    nrm = jnp.sqrt(jnp.sum(trg * trg, axis=-1, keepdims=True))        # (Ll, 1)
    nrm = nrm - jnp.max(nrm, axis=0, keepdims=True)
    wgt = jnp.exp(nrm)
    wgt = wgt / jnp.sum(wgt, axis=0, keepdims=True)
    summ = jnp.sum(trg * wgt, axis=0, keepdims=True)                  # (1, HID)

    # --- classification head; fc2 pre-packed to put logits at lanes [HID, HID+2) ---
    z = jnp.maximum(jnp.dot(summ, fc1_w[...], preferred_element_type=f32)
                    + fc1_b[...], 0.0)
    packed = jnp.dot(z, fc2_w[...], preferred_element_type=f32) + fc2_b[...]   # (1, 2*HID)
    misc_ref[0] = packed                                   # logits in lanes 32..33, zeros elsewhere
    misc_ref[0, :, :HID] = summ                            # summ in lanes 0..31


# ============================ Predictor wrapper ============================

def predictor_forward(local, protein, local_num, protein_num, weights):
    B, Ll, _ = local.shape
    Lp = protein.shape[1]
    wlist = [weights[k] for k in _WEIGHT_ORDER]

    def rep_spec(a):                 # weight: same full block every grid step
        shape = tuple(a.shape)
        def idx(b, *prefetch):
            return (0,) * len(shape)
        return pl.BlockSpec(shape, idx)

    def batch_spec(a):               # per-batch activation block
        shape = tuple(a.shape)
        def idx(b, *prefetch):
            return (b,) + (0,) * (len(shape) - 1)
        return pl.BlockSpec((1,) + shape[1:], idx)

    in_specs = [batch_spec(protein), batch_spec(local)] + [rep_spec(w) for w in wlist]
    out_specs = (
        pl.BlockSpec((1, Ll, N_HEADS * Lp), lambda b, *_: (b, 0, 0)),   # lane-dense attention
        pl.BlockSpec((1, 1, 2 * HID), lambda b, *_: (b, 0, 0)),         # packed summ|logits
    )
    out_shape = (
        jax.ShapeDtypeStruct((B, Ll, N_HEADS * Lp), jnp.float32),
        jax.ShapeDtypeStruct((B, 1, 2 * HID), jnp.float32),
    )

    attn_packed, misc = pl.pallas_call(
        _predictor_kernel,
        grid_spec=pltpu.PrefetchScalarGridSpec(
            num_scalar_prefetch=2,
            grid=(B,),
            in_specs=in_specs,
            out_specs=out_specs,
        ),
        out_shape=out_shape,
        compiler_params=pltpu.CompilerParams(
            dimension_semantics=("parallel",),      # shards batch across TCs on v7x
            vmem_limit_bytes=32 * 1024 * 1024,
        ),
    )(local_num.astype(jnp.int32), protein_num.astype(jnp.int32),
      protein, local, *wlist)

    attention = attn_packed.reshape(B, Ll, N_HEADS, Lp).transpose(0, 2, 1, 3)
    summ = misc[:, 0, :HID]
    label = misc[:, 0, HID:HID + 2]
    return summ, attention, label


# ============================ deterministic params ============================

def init_params(key):
    keys = iter(jax.random.split(key, 64))

    def dense(din, dout):
        w = jax.random.normal(next(keys), (din, dout), jnp.float32) * 0.1
        return w, jnp.zeros((dout,), jnp.float32)

    enc = {}
    enc['fc_w'], enc['fc_b'] = dense(PROTEIN_DIM, HID)
    enc['conv_w'], enc['conv_b'] = [], []
    for _ in range(N_CONV_LAYERS):
        w, b = dense(KS * HID, 2 * HID)   # flattened Conv1d(HID, 2*HID, KS) weight
        enc['conv_w'].append(w)
        enc['conv_b'].append(b)
    enc['ln_g'] = jnp.ones((HID,), jnp.float32)
    enc['ln_b'] = jnp.zeros((HID,), jnp.float32)

    def mha_params():
        d = {}
        d['wq'], d['bq'] = dense(HID, HID)
        d['wk'], d['bk'] = dense(HID, HID)
        d['wv'], d['bv'] = dense(HID, HID)
        d['wo'], d['bo'] = dense(HID, HID)
        return d

    dec = {}
    dec['ft_w'], dec['ft_b'] = dense(LOCAL_DIM, HID)
    dec['sa'] = mha_params()
    dec['ea'] = mha_params()
    dec['pf1_w'], dec['pf1_b'] = dense(HID, PF_DIM)
    dec['pf2_w'], dec['pf2_b'] = dense(PF_DIM, HID)
    for i in (1, 2, 3):
        dec[f'ln{i}_g'] = jnp.ones((HID,), jnp.float32)
        dec[f'ln{i}_b'] = jnp.zeros((HID,), jnp.float32)
    dec['fc1_w'], dec['fc1_b'] = dense(HID, HID)
    dec['fc2_w'], dec['fc2_b'] = dense(HID, 2)
    return {'encoder': enc, 'decoder': dec}


def pack_params(p):
    """One-time packing of natural per-module params into the kernel layout
    (all stacking / concatenation hoisted out of the per-call forward path)."""
    enc, dec = p['encoder'], p['decoder']
    w = {}
    w['enc_fc_w'] = enc['fc_w']
    w['enc_fc_b'] = enc['fc_b'].reshape(1, HID)
    # Per (layer, tap) a (HID, 2*HID) block, columns = [value half | gate half].
    # TODO(synk): when importing real PyTorch Conv1d weights (out_ch, in_ch, K),
    # transpose/reorder into this (layer*KS + tap, in_ch, out_ch) layout.
    w['enc_conv_w'] = jnp.stack(
        [cw.reshape(KS, HID, 2 * HID) for cw in enc['conv_w']]
    ).reshape(N_CONV_LAYERS * KS, HID, 2 * HID)
    w['enc_conv_b'] = jnp.stack([cb.reshape(1, 2 * HID) for cb in enc['conv_b']])
    w['enc_ln'] = jnp.stack([enc['ln_g'].reshape(1, HID), enc['ln_b'].reshape(1, HID)])
    w['ft_w'] = dec['ft_w']
    w['ft_b'] = dec['ft_b'].reshape(1, HID)
    sa, ea = dec['sa'], dec['ea']
    w['sa_qkv_w'] = jnp.concatenate([sa['wq'], sa['wk'], sa['wv']], axis=1)
    w['sa_qkv_b'] = jnp.concatenate([sa['bq'], sa['bk'], sa['bv']]).reshape(1, 3 * HID)
    w['sa_o_w'] = sa['wo']
    w['sa_o_b'] = sa['bo'].reshape(1, HID)
    w['ea_q_w'] = ea['wq']
    w['ea_q_b'] = ea['bq'].reshape(1, HID)
    w['ea_kv_w'] = jnp.concatenate([ea['wk'], ea['wv']], axis=1)
    w['ea_kv_b'] = jnp.concatenate([ea['bk'], ea['bv']]).reshape(1, 2 * HID)
    w['ea_o_w'] = ea['wo']
    w['ea_o_b'] = ea['bo'].reshape(1, HID)
    w['dec_ln_g'] = jnp.stack([dec[f'ln{i}_g'].reshape(1, HID) for i in (1, 2, 3)])
    w['dec_ln_b'] = jnp.stack([dec[f'ln{i}_b'].reshape(1, HID) for i in (1, 2, 3)])
    w['pf1_w'] = dec['pf1_w']
    w['pf1_b'] = dec['pf1_b'].reshape(1, PF_DIM)
    w['pf2_w'] = dec['pf2_w']
    w['pf2_b'] = dec['pf2_b'].reshape(1, HID)
    w['fc1_w'] = dec['fc1_w']
    w['fc1_b'] = dec['fc1_b'].reshape(1, HID)
    # final 2-way head pre-packed so the kernel writes logits into lanes
    # [HID, HID+2) of the lane-dense packed (1, 2*HID) output row.
    w['fc2_w'] = jnp.zeros((HID, 2 * HID), jnp.float32).at[:, HID:HID + 2].set(dec['fc2_w'])
    w['fc2_b'] = jnp.zeros((1, 2 * HID), jnp.float32).at[:, HID:HID + 2].set(
        dec['fc2_b'].reshape(1, 2))
    return w


# ============================ main ============================

if __name__ == "__main__":
    key = jax.random.PRNGKey(0)
    k_params, k_local, k_prot = jax.random.split(key, 3)

    B, Ll, Lp = 2, 8, 16
    params = init_params(k_params)
    weights = pack_params(params)       # one-time packing, outside the forward path
    local = jax.random.normal(k_local, (B, Ll, LOCAL_DIM), jnp.float32)
    protein = jax.random.normal(k_prot, (B, Lp, PROTEIN_DIM), jnp.float32)
    local_num = jnp.array([6, 8], dtype=jnp.int32)
    protein_num = jnp.array([12, 16], dtype=jnp.int32)

    fwd = jax.jit(predictor_forward)
    summ, attention, out = fwd(local, protein, local_num, protein_num, weights)
    jax.block_until_ready((summ, attention, out))

    assert summ.shape == (B, HID)
    assert attention.shape == (B, N_HEADS, Ll, Lp)
    assert out.shape == (B, 2)
    print("KERNEL_OK")
</pallas_src>

<mosaic_0001>
module attributes {stable_mosaic.version = 11 : i64} {
  func.func @_predictor_kernel(%arg0: i32, %arg1: memref<2xi32, #tpu.memory_space<smem>>, %arg2: memref<2xi32, #tpu.memory_space<smem>>, %arg3: memref<1x16x32xf32, #tpu.memory_space<vmem>>, %arg4: memref<1x8x32xf32, #tpu.memory_space<vmem>>, %arg5: memref<32x32xf32, #tpu.memory_space<vmem>>, %arg6: memref<1x32xf32, #tpu.memory_space<vmem>>, %arg7: memref<6x32x64xf32, #tpu.memory_space<vmem>>, %arg8: memref<2x1x64xf32, #tpu.memory_space<vmem>>, %arg9: memref<2x1x32xf32, #tpu.memory_space<vmem>>, %arg10: memref<32x32xf32, #tpu.memory_space<vmem>>, %arg11: memref<1x32xf32, #tpu.memory_space<vmem>>, %arg12: memref<32x96xf32, #tpu.memory_space<vmem>>, %arg13: memref<1x96xf32, #tpu.memory_space<vmem>>, %arg14: memref<32x32xf32, #tpu.memory_space<vmem>>, %arg15: memref<1x32xf32, #tpu.memory_space<vmem>>, %arg16: memref<32x32xf32, #tpu.memory_space<vmem>>, %arg17: memref<1x32xf32, #tpu.memory_space<vmem>>, %arg18: memref<32x64xf32, #tpu.memory_space<vmem>>, %arg19: memref<1x64xf32, #tpu.memory_space<vmem>>, %arg20: memref<32x32xf32, #tpu.memory_space<vmem>>, %arg21: memref<1x32xf32, #tpu.memory_space<vmem>>, %arg22: memref<3x1x32xf32, #tpu.memory_space<vmem>>, %arg23: memref<3x1x32xf32, #tpu.memory_space<vmem>>, %arg24: memref<32x64xf32, #tpu.memory_space<vmem>>, %arg25: memref<1x64xf32, #tpu.memory_space<vmem>>, %arg26: memref<64x32xf32, #tpu.memory_space<vmem>>, %arg27: memref<1x32xf32, #tpu.memory_space<vmem>>, %arg28: memref<32x32xf32, #tpu.memory_space<vmem>>, %arg29: memref<1x32xf32, #tpu.memory_space<vmem>>, %arg30: memref<32x64xf32, #tpu.memory_space<vmem>>, %arg31: memref<1x64xf32, #tpu.memory_space<vmem>>, %arg32: memref<1x8x64xf32, #tpu.memory_space<vmem>>, %arg33: memref<1x1x64xf32, #tpu.memory_space<vmem>>) attributes {dimension_semantics = [#tpu.dimension_semantics<parallel>], iteration_bounds = array<i64: 2>, scalar_prefetch = 2 : i64, scratch_operands = 0 : i64, tpu.core_type = #tpu.core_type<tc>, window_params = [{transform_indices = @transform_0, window_bounds = array<i64: 1, 16, 32>}, {transform_indices = @transform_1, window_bounds = array<i64: 1, 8, 32>}, {pipeline_mode = #tpu.pipeline_mode<synchronous>, transform_indices = @transform_2, window_bounds = array<i64: 32, 32>}, {pipeline_mode = #tpu.pipeline_mode<synchronous>, transform_indices = @transform_3, window_bounds = array<i64: 1, 32>}, {pipeline_mode = #tpu.pipeline_mode<synchronous>, transform_indices = @transform_4, window_bounds = array<i64: 6, 32, 64>}, {pipeline_mode = #tpu.pipeline_mode<synchronous>, transform_indices = @transform_5, window_bounds = array<i64: 2, 1, 64>}, {pipeline_mode = #tpu.pipeline_mode<synchronous>, transform_indices = @transform_6, window_bounds = array<i64: 2, 1, 32>}, {pipeline_mode = #tpu.pipeline_mode<synchronous>, transform_indices = @transform_7, window_bounds = array<i64: 32, 32>}, {pipeline_mode = #tpu.pipeline_mode<synchronous>, transform_indices = @transform_8, window_bounds = array<i64: 1, 32>}, {pipeline_mode = #tpu.pipeline_mode<synchronous>, transform_indices = @transform_9, window_bounds = array<i64: 32, 96>}, {pipeline_mode = #tpu.pipeline_mode<synchronous>, transform_indices = @transform_10, window_bounds = array<i64: 1, 96>}, {pipeline_mode = #tpu.pipeline_mode<synchronous>, transform_indices = @transform_11, window_bounds = array<i64: 32, 32>}, {pipeline_mode = #tpu.pipeline_mode<synchronous>, transform_indices = @transform_12, window_bounds = array<i64: 1, 32>}, {pipeline_mode = #tpu.pipeline_mode<synchronous>, transform_indices = @transform_13, window_bounds = array<i64: 32, 32>}, {pipeline_mode = #tpu.pipeline_mode<synchronous>, transform_indices = @transform_14, window_bounds = array<i64: 1, 32>}, {pipeline_mode = #tpu.pipeline_mode<synchronous>, transform_indices = @transform_15, window_bounds = array<i64: 32, 64>}, {pipeline_mode = #tpu.pipeline_mode<synchronous>, transform_indices = @transform_16, window_bounds = array<i64: 1, 64>}, {pipeline_mode = #tpu.pipeline_mode<synchronous>, transform_indices = @transform_17, window_bounds = array<i64: 32, 32>}, {pipeline_mode = #tpu.pipeline_mode<synchronous>, transform_indices = @transform_18, window_bounds = array<i64: 1, 32>}, {pipeline_mode = #tpu.pipeline_mode<synchronous>, transform_indices = @transform_19, window_bounds = array<i64: 3, 1, 32>}, {pipeline_mode = #tpu.pipeline_mode<synchronous>, transform_indices = @transform_20, window_bounds = array<i64: 3, 1, 32>}, {pipeline_mode = #tpu.pipeline_mode<synchronous>, transform_indices = @transform_21, window_bounds = array<i64: 32, 64>}, {pipeline_mode = #tpu.pipeline_mode<synchronous>, transform_indices = @transform_22, window_bounds = array<i64: 1, 64>}, {pipeline_mode = #tpu.pipeline_mode<synchronous>, transform_indices = @transform_23, window_bounds = array<i64: 64, 32>}, {pipeline_mode = #tpu.pipeline_mode<synchronous>, transform_indices = @transform_24, window_bounds = array<i64: 1, 32>}, {pipeline_mode = #tpu.pipeline_mode<synchronous>, transform_indices = @transform_25, window_bounds = array<i64: 32, 32>}, {pipeline_mode = #tpu.pipeline_mode<synchronous>, transform_indices = @transform_26, window_bounds = array<i64: 1, 32>}, {pipeline_mode = #tpu.pipeline_mode<synchronous>, transform_indices = @transform_27, window_bounds = array<i64: 32, 64>}, {pipeline_mode = #tpu.pipeline_mode<synchronous>, transform_indices = @transform_28, window_bounds = array<i64: 1, 64>}, {transform_indices = @transform_29, window_bounds = array<i64: 1, 8, 64>}, {transform_indices = @transform_30, window_bounds = array<i64: 1, 1, 64>}]} {
    %0 = arith.index_cast %arg0 : i32 to index
    %1 = memref.load %arg1[%0] : memref<2xi32, #tpu.memory_space<smem>>
    %2 = arith.index_cast %arg0 : i32 to index
    %3 = memref.load %arg2[%2] : memref<2xi32, #tpu.memory_space<smem>>
    %4 = tpu.iota {dimensions = array<i32: 0>} : vector<8x1xi32>
    %5 = vector.broadcast %1 : i32 to vector<8x1xi32>
    %6 = arith.cmpi slt, %4, %5 : vector<8x1xi32>
    %7 = tpu.iota {dimensions = array<i32: 1>} : vector<1x16xi32>
    %8 = vector.broadcast %3 : i32 to vector<1x16xi32>
    %9 = arith.cmpi slt, %7, %8 : vector<1x16xi32>
    %10 = tpu.iota {dimensions = array<i32: 1>} : vector<1x32xi32>
    %11 = tpu.iota {dimensions = array<i32: 0>} : vector<64x32xi32>
    %12 = tpu.iota {dimensions = array<i32: 1>} : vector<64x32xi32>
    %c32_i32 = arith.constant 32 : i32
    %13 = vector.broadcast %c32_i32 : i32 to vector<64x32xi32>
    %14 = arith.addi %12, %13 : vector<64x32xi32>
    %15 = arith.cmpi eq, %11, %14 : vector<64x32xi32>
    %cst = arith.constant 1.000000e+00 : f32
    %cst_0 = arith.constant 0.000000e+00 : f32
    %16 = vector.broadcast %cst : f32 to vector<64x32xf32>
    %17 = vector.broadcast %cst_0 : f32 to vector<64x32xf32>
    %18 = arith.select %15, %16, %17 : vector<64x32xi1>, vector<64x32xf32>
    %19 = tpu.iota {dimensions = array<i32: 0>} : vector<96x32xi32>
    %20 = tpu.iota {dimensions = array<i32: 1>} : vector<96x32xi32>
    %c32_i32_1 = arith.constant 32 : i32
    %21 = vector.broadcast %c32_i32_1 : i32 to vector<96x32xi32>
    %22 = arith.addi %20, %21 : vector<96x32xi32>
    %23 = arith.cmpi eq, %19, %22 : vector<96x32xi32>
    %cst_2 = arith.constant 1.000000e+00 : f32
    %cst_3 = arith.constant 0.000000e+00 : f32
    %24 = vector.broadcast %cst_2 : f32 to vector<96x32xf32>
    %25 = vector.broadcast %cst_3 : f32 to vector<96x32xf32>
    %26 = arith.select %23, %24, %25 : vector<96x32xi1>, vector<96x32xf32>
    %27 = tpu.iota {dimensions = array<i32: 0>} : vector<96x32xi32>
    %28 = tpu.iota {dimensions = array<i32: 1>} : vector<96x32xi32>
    %c64_i32 = arith.constant 64 : i32
    %29 = vector.broadcast %c64_i32 : i32 to vector<96x32xi32>
    %30 = arith.addi %28, %29 : vector<96x32xi32>
    %31 = arith.cmpi eq, %27, %30 : vector<96x32xi32>
    %cst_4 = arith.constant 1.000000e+00 : f32
    %cst_5 = arith.constant 0.000000e+00 : f32
    %32 = vector.broadcast %cst_4 : f32 to vector<96x32xf32>
    %33 = vector.broadcast %cst_5 : f32 to vector<96x32xf32>
    %34 = arith.select %31, %32, %33 : vector<96x32xi1>, vector<96x32xf32>
    %c0 = arith.constant 0 : index
    %c0_6 = arith.constant 0 : index
    %c0_7 = arith.constant 0 : index
    %35 = vector.load %arg3[%c0, %c0_6, %c0_7] : memref<1x16x32xf32, #tpu.memory_space<vmem>>, vector<1x16x32xf32>
    %36 = vector.shape_cast %35 : vector<1x16x32xf32> to vector<16x32xf32>
    %c0_8 = arith.constant 0 : index
    %c0_9 = arith.constant 0 : index
    %37 = vector.load %arg5[%c0_8, %c0_9] : memref<32x32xf32, #tpu.memory_space<vmem>>, vector<32x32xf32>
    %cst_10 = arith.constant dense<0.000000e+00> : vector<16x32xf32>
    %38 = tpu.matmul %36, %37, %cst_10 {dimension_numbers = #tpu.dot_dimension_numbers<[1], [0], [0], [1], [0, 0, 1, 1], [], []>} : vector<16x32xf32>, vector<32x32xf32>, vector<16x32xf32> -> vector<16x32xf32>
    %c0_11 = arith.constant 0 : index
    %c0_12 = arith.constant 0 : index
    %39 = vector.load %arg6[%c0_11, %c0_12] : memref<1x32xf32, #tpu.memory_space<vmem>>, vector<1x32xf32>
    %40 = vector.broadcast %39 : vector<1x32xf32> to vector<16x32xf32>
    %41 = arith.addf %38, %40 : vector<16x32xf32>
    %42 = tpu.iota {dimensions = array<i32: 0>} : vector<16x16xi32>
    %43 = tpu.iota {dimensions = array<i32: 1>} : vector<16x16xi32>
    %c1_i32 = arith.constant 1 : i32
    %44 = vector.broadcast %c1_i32 : i32 to vector<16x16xi32>
    %45 = arith.addi %43, %44 : vector<16x16xi32>
    %46 = arith.cmpi eq, %42, %45 : vector<16x16xi32>
    %cst_13 = arith.constant 1.000000e+00 : f32
    %cst_14 = arith.constant 0.000000e+00 : f32
    %47 = vector.broadcast %cst_13 : f32 to vector<16x16xf32>
    %48 = vector.broadcast %cst_14 : f32 to vector<16x16xf32>
    %49 = arith.select %46, %47, %48 : vector<16x16xi1>, vector<16x16xf32>
    %50 = tpu.iota {dimensions = array<i32: 0>} : vector<16x16xi32>
    %51 = tpu.iota {dimensions = array<i32: 1>} : vector<16x16xi32>
    %c-1_i32 = arith.constant -1 : i32
    %52 = vector.broadcast %c-1_i32 : i32 to vector<16x16xi32>
    %53 = arith.addi %51, %52 : vector<16x16xi32>
    %54 = arith.cmpi eq, %50, %53 : vector<16x16xi32>
    %cst_15 = arith.constant 1.000000e+00 : f32
    %cst_16 = arith.constant 0.000000e+00 : f32
    %55 = vector.broadcast %cst_15 : f32 to vector<16x16xf32>
    %56 = vector.broadcast %cst_16 : f32 to vector<16x16xf32>
    %57 = arith.select %54, %55, %56 : vector<16x16xi1>, vector<16x16xf32>
    %cst_17 = arith.constant dense<0.000000e+00> : vector<16x32xf32>
    %58 = tpu.matmul %49, %41, %cst_17 {dimension_numbers = #tpu.dot_dimension_numbers<[1], [0], [0], [1], [0, 0, 1, 1], [], []>} : vector<16x16xf32>, vector<16x32xf32>, vector<16x32xf32> -> vector<16x32xf32>
    %cst_18 = arith.constant dense<0.000000e+00> : vector<16x32xf32>
    %59 = tpu.matmul %57, %41, %cst_18 {dimension_numbers = #tpu.dot_dimension_numbers<[1], [0], [0], [1], [0, 0, 1, 1], [], []>} : vector<16x16xf32>, vector<16x32xf32>, vector<16x32xf32> -> vector<16x32xf32>
    %c0_19 = arith.constant 0 : index
    %c0_20 = arith.constant 0 : index
    %c0_21 = arith.constant 0 : index
    %60 = vector.load %arg8[%c0_19, %c0_20, %c0_21] : memref<2x1x64xf32, #tpu.memory_space<vmem>>, vector<1x1x64xf32>
    %61 = vector.shape_cast %60 : vector<1x1x64xf32> to vector<1x64xf32>
    %c0_22 = arith.constant 0 : index
    %c0_23 = arith.constant 0 : index
    %c0_24 = arith.constant 0 : index
    %62 = vector.load %arg7[%c0_22, %c0_23, %c0_24] : memref<6x32x64xf32, #tpu.memory_space<vmem>>, vector<1x32x64xf32>
    %63 = vector.shape_cast %62 : vector<1x32x64xf32> to vector<32x64xf32>
    %cst_25 = arith.constant dense<0.000000e+00> : vector<16x64xf32>
    %64 = tpu.matmul %58, %63, %cst_25 {dimension_numbers = #tpu.dot_dimension_numbers<[1], [0], [0], [1], [0, 0, 1, 1], [], []>} : vector<16x32xf32>, vector<32x64xf32>, vector<16x64xf32> -> vector<16x64xf32>
    %65 = vector.broadcast %61 : vector<1x64xf32> to vector<16x64xf32>
    %66 = arith.addf %65, %64 : vector<16x64xf32>
    %c1 = arith.constant 1 : index
    %c0_26 = arith.constant 0 : index
    %c0_27 = arith.constant 0 : index
    %67 = vector.load %arg7[%c1, %c0_26, %c0_27] : memref<6x32x64xf32, #tpu.memory_space<vmem>>, vector<1x32x64xf32>
    %68 = vector.shape_cast %67 : vector<1x32x64xf32> to vector<32x64xf32>
    %cst_28 = arith.constant dense<0.000000e+00> : vector<16x64xf32>
    %69 = tpu.matmul %41, %68, %cst_28 {dimension_numbers = #tpu.dot_dimension_numbers<[1], [0], [0], [1], [0, 0, 1, 1], [], []>} : vector<16x32xf32>, vector<32x64xf32>, vector<16x64xf32> -> vector<16x64xf32>
    %70 = arith.addf %66, %69 : vector<16x64xf32>
    %c2 = arith.constant 2 : index
    %c0_29 = arith.constant 0 : index
    %c0_30 = arith.constant 0 : index
    %71 = vector.load %arg7[%c2, %c0_29, %c0_30] : memref<6x32x64xf32, #tpu.memory_space<vmem>>, vector<1x32x64xf32>
    %72 = vector.shape_cast %71 : vector<1x32x64xf32> to vector<32x64xf32>
    %cst_31 = arith.constant dense<0.000000e+00> : vector<16x64xf32>
    %73 = tpu.matmul %59, %72, %cst_31 {dimension_numbers = #tpu.dot_dimension_numbers<[1], [0], [0], [1], [0, 0, 1, 1], [], []>} : vector<16x32xf32>, vector<32x64xf32>, vector<16x64xf32> -> vector<16x64xf32>
    %74 = arith.addf %70, %73 : vector<16x64xf32>
    %75 = vector.extract_strided_slice %74 {offsets = [0, 0], sizes = [16, 32], strides = [1, 1]} : vector<16x64xf32> to vector<16x32xf32>
    %cst_32 = arith.constant dense<0.000000e+00> : vector<16x32xf32>
    %76 = tpu.matmul %74, %18, %cst_32 {dimension_numbers = #tpu.dot_dimension_numbers<[1], [0], [0], [1], [0, 0, 1, 1], [], []>} : vector<16x64xf32>, vector<64x32xf32>, vector<16x32xf32> -> vector<16x32xf32>
    %cst_33 = arith.constant 5.000000e-01 : f32
    %77 = vector.broadcast %cst_33 : f32 to vector<16x32xf32>
    %78 = arith.mulf %77, %76 : vector<16x32xf32>
    %79 = math.tanh %78 : vector<16x32xf32>
    %cst_34 = arith.constant 1.000000e+00 : f32
    %80 = vector.broadcast %cst_34 : f32 to vector<16x32xf32>
    %81 = arith.addf %79, %80 : vector<16x32xf32>
    %cst_35 = arith.constant 5.000000e-01 : f32
    %82 = vector.broadcast %cst_35 : f32 to vector<16x32xf32>
    %83 = arith.mulf %82, %81 : vector<16x32xf32>
    %84 = arith.mulf %75, %83 : vector<16x32xf32>
    %85 = arith.addf %84, %41 : vector<16x32xf32>
    %cst_36 = arith.constant 0.707106769 : f32
    %86 = vector.broadcast %cst_36 : f32 to vector<16x32xf32>
    %87 = arith.mulf %85, %86 : vector<16x32xf32>
    %cst_37 = arith.constant dense<0.000000e+00> : vector<16x32xf32>
    %88 = tpu.matmul %49, %87, %cst_37 {dimension_numbers = #tpu.dot_dimension_numbers<[1], [0], [0], [1], [0, 0, 1, 1], [], []>} : vector<16x16xf32>, vector<16x32xf32>, vector<16x32xf32> -> vector<16x32xf32>
    %cst_38 = arith.constant dense<0.000000e+00> : vector<16x32xf32>
    %89 = tpu.matmul %57, %87, %cst_38 {dimension_numbers = #tpu.dot_dimension_numbers<[1], [0], [0], [1], [0, 0, 1, 1], [], []>} : vector<16x16xf32>, vector<16x32xf32>, vector<16x32xf32> -> vector<16x32xf32>
    %c1_39 = arith.constant 1 : index
    %c0_40 = arith.constant 0 : index
    %c0_41 = arith.constant 0 : index
    %90 = vector.load %arg8[%c1_39, %c0_40, %c0_41] : memref<2x1x64xf32, #tpu.memory_space<vmem>>, vector<1x1x64xf32>
    %91 = vector.shape_cast %90 : vector<1x1x64xf32> to vector<1x64xf32>
    %c3 = arith.constant 3 : index
    %c0_42 = arith.constant 0 : index
    %c0_43 = arith.constant 0 : index
    %92 = vector.load %arg7[%c3, %c0_42, %c0_43] : memref<6x32x64xf32, #tpu.memory_space<vmem>>, vector<1x32x64xf32>
    %93 = vector.shape_cast %92 : vector<1x32x64xf32> to vector<32x64xf32>
    %cst_44 = arith.constant dense<0.000000e+00> : vector<16x64xf32>
    %94 = tpu.matmul %88, %93, %cst_44 {dimension_numbers = #tpu.dot_dimension_numbers<[1], [0], [0], [1], [0, 0, 1, 1], [], []>} : vector<16x32xf32>, vector<32x64xf32>, vector<16x64xf32> -> vector<16x64xf32>
    %95 = vector.broadcast %91 : vector<1x64xf32> to vector<16x64xf32>
    %96 = arith.addf %95, %94 : vector<16x64xf32>
    %c4 = arith.constant 4 : index
    %c0_45 = arith.constant 0 : index
    %c0_46 = arith.constant 0 : index
    %97 = vector.load %arg7[%c4, %c0_45, %c0_46] : memref<6x32x64xf32, #tpu.memory_space<vmem>>, vector<1x32x64xf32>
    %98 = vector.shape_cast %97 : vector<1x32x64xf32> to vector<32x64xf32>
    %cst_47 = arith.constant dense<0.000000e+00> : vector<16x64xf32>
    %99 = tpu.matmul %87, %98, %cst_47 {dimension_numbers = #tpu.dot_dimension_numbers<[1], [0], [0], [1], [0, 0, 1, 1], [], []>} : vector<16x32xf32>, vector<32x64xf32>, vector<16x64xf32> -> vector<16x64xf32>
    %100 = arith.addf %96, %99 : vector<16x64xf32>
    %c5 = arith.constant 5 : index
    %c0_48 = arith.constant 0 : index
    %c0_49 = arith.constant 0 : index
    %101 = vector.load %arg7[%c5, %c0_48, %c0_49] : memref<6x32x64xf32, #tpu.memory_space<vmem>>, vector<1x32x64xf32>
    %102 = vector.shape_cast %101 : vector<1x32x64xf32> to vector<32x64xf32>
    %cst_50 = arith.constant dense<0.000000e+00> : vector<16x64xf32>
    %103 = tpu.matmul %89, %102, %cst_50 {dimension_numbers = #tpu.dot_dimension_numbers<[1], [0], [0], [1], [0, 0, 1, 1], [], []>} : vector<16x32xf32>, vector<32x64xf32>, vector<16x64xf32> -> vector<16x64xf32>
    %104 = arith.addf %100, %103 : vector<16x64xf32>
    %105 = vector.extract_strided_slice %104 {offsets = [0, 0], sizes = [16, 32], strides = [1, 1]} : vector<16x64xf32> to vector<16x32xf32>
    %cst_51 = arith.constant dense<0.000000e+00> : vector<16x32xf32>
    %106 = tpu.matmul %104, %18, %cst_51 {dimension_numbers = #tpu.dot_dimension_numbers<[1], [0], [0], [1], [0, 0, 1, 1], [], []>} : vector<16x64xf32>, vector<64x32xf32>, vector<16x32xf32> -> vector<16x32xf32>
    %cst_52 = arith.constant 5.000000e-01 : f32
    %107 = vector.broadcast %cst_52 : f32 to vector<16x32xf32>
    %108 = arith.mulf %107, %106 : vector<16x32xf32>
    %109 = math.tanh %108 : vector<16x32xf32>
    %cst_53 = arith.constant 1.000000e+00 : f32
    %110 = vector.broadcast %cst_53 : f32 to vector<16x32xf32>
    %111 = arith.addf %109, %110 : vector<16x32xf32>
    %cst_54 = arith.constant 5.000000e-01 : f32
    %112 = vector.broadcast %cst_54 : f32 to vector<16x32xf32>
    %113 = arith.mulf %112, %111 : vector<16x32xf32>
    %114 = arith.mulf %105, %113 : vector<16x32xf32>
    %115 = arith.addf %114, %87 : vector<16x32xf32>
    %cst_55 = arith.constant 0.707106769 : f32
    %116 = vector.broadcast %cst_55 : f32 to vector<16x32xf32>
    %117 = arith.mulf %115, %116 : vector<16x32xf32>
    %c0_56 = arith.constant 0 : index
    %c0_57 = arith.constant 0 : index
    %c0_58 = arith.constant 0 : index
    %118 = vector.load %arg9[%c0_56, %c0_57, %c0_58] : memref<2x1x32xf32, #tpu.memory_space<vmem>>, vector<1x1x32xf32>
    %119 = vector.shape_cast %118 : vector<1x1x32xf32> to vector<1x32xf32>
    %c1_59 = arith.constant 1 : index
    %c0_60 = arith.constant 0 : index
    %c0_61 = arith.constant 0 : index
    %120 = vector.load %arg9[%c1_59, %c0_60, %c0_61] : memref<2x1x32xf32, #tpu.memory_space<vmem>>, vector<1x1x32xf32>
    %121 = vector.shape_cast %120 : vector<1x1x32xf32> to vector<1x32xf32>
    %cst_62 = arith.constant dense<0.000000e+00> : vector<16xf32>
    %122 = vector.multi_reduction <add>, %117, %cst_62 [1] : vector<16x32xf32> to vector<16xf32>
    %123 = vector.shape_cast %122 : vector<16xf32> to vector<16x1xf32>
    %cst_63 = arith.constant 3.200000e+01 : f32
    %124 = vector.broadcast %cst_63 : f32 to vector<16x1xf32>
    %125 = arith.divf %123, %124 : vector<16x1xf32>
    %126 = vector.broadcast %125 : vector<16x1xf32> to vector<16x32xf32>
    %127 = arith.subf %117, %126 : vector<16x32xf32>
    %128 = arith.mulf %127, %127 : vector<16x32xf32>
    %cst_64 = arith.constant dense<0.000000e+00> : vector<16xf32>
    %129 = vector.multi_reduction <add>, %128, %cst_64 [1] : vector<16x32xf32> to vector<16xf32>
    %130 = vector.shape_cast %129 : vector<16xf32> to vector<16x1xf32>
    %cst_65 = arith.constant 3.200000e+01 : f32
    %131 = vector.broadcast %cst_65 : f32 to vector<16x1xf32>
    %132 = arith.divf %130, %131 : vector<16x1xf32>
    %133 = vector.broadcast %125 : vector<16x1xf32> to vector<16x32xf32>
    %134 = arith.subf %117, %133 : vector<16x32xf32>
    %cst_66 = arith.constant 9.99999974E-6 : f32
    %135 = vector.broadcast %cst_66 : f32 to vector<16x1xf32>
    %136 = arith.addf %132, %135 : vector<16x1xf32>
    %137 = math.rsqrt %136 : vector<16x1xf32>
    %138 = vector.broadcast %137 : vector<16x1xf32> to vector<16x32xf32>
    %139 = arith.mulf %134, %138 : vector<16x32xf32>
    %140 = vector.broadcast %119 : vector<1x32xf32> to vector<16x32xf32>
    %141 = arith.mulf %139, %140 : vector<16x32xf32>
    %142 = vector.broadcast %121 : vector<1x32xf32> to vector<16x32xf32>
    %143 = arith.addf %141, %142 : vector<16x32xf32>
    %c0_67 = arith.constant 0 : index
    %c0_68 = arith.constant 0 : index
    %c0_69 = arith.constant 0 : index
    %144 = vector.load %arg4[%c0_67, %c0_68, %c0_69] : memref<1x8x32xf32, #tpu.memory_space<vmem>>, vector<1x8x32xf32>
    %145 = vector.shape_cast %144 : vector<1x8x32xf32> to vector<8x32xf32>
    %c0_70 = arith.constant 0 : index
    %c0_71 = arith.constant 0 : index
    %146 = vector.load %arg10[%c0_70, %c0_71] : memref<32x32xf32, #tpu.memory_space<vmem>>, vector<32x32xf32>
    %cst_72 = arith.constant dense<0.000000e+00> : vector<8x32xf32>
    %147 = tpu.matmul %145, %146, %cst_72 {dimension_numbers = #tpu.dot_dimension_numbers<[1], [0], [0], [1], [0, 0, 1, 1], [], []>} : vector<8x32xf32>, vector<32x32xf32>, vector<8x32xf32> -> vector<8x32xf32>
    %c0_73 = arith.constant 0 : index
    %c0_74 = arith.constant 0 : index
    %148 = vector.load %arg11[%c0_73, %c0_74] : memref<1x32xf32, #tpu.memory_space<vmem>>, vector<1x32xf32>
    %149 = vector.broadcast %148 : vector<1x32xf32> to vector<8x32xf32>
    %150 = arith.addf %147, %149 : vector<8x32xf32>
    %c0_75 = arith.constant 0 : index
    %c0_76 = arith.constant 0 : index
    %151 = vector.load %arg12[%c0_75, %c0_76] : memref<32x96xf32, #tpu.memory_space<vmem>>, vector<32x96xf32>
    %cst_77 = arith.constant dense<0.000000e+00> : vector<8x96xf32>
    %152 = tpu.matmul %150, %151, %cst_77 {dimension_numbers = #tpu.dot_dimension_numbers<[1], [0], [0], [1], [0, 0, 1, 1], [], []>} : vector<8x32xf32>, vector<32x96xf32>, vector<8x96xf32> -> vector<8x96xf32>
    %c0_78 = arith.constant 0 : index
    %c0_79 = arith.constant 0 : index
    %153 = vector.load %arg13[%c0_78, %c0_79] : memref<1x96xf32, #tpu.memory_space<vmem>>, vector<1x96xf32>
    %154 = vector.broadcast %153 : vector<1x96xf32> to vector<8x96xf32>
    %155 = arith.addf %152, %154 : vector<8x96xf32>
    %156 = vector.extract_strided_slice %155 {offsets = [0, 0], sizes = [8, 32], strides = [1, 1]} : vector<8x96xf32> to vector<8x32xf32>
    %cst_80 = arith.constant dense<0.000000e+00> : vector<8x32xf32>
    %157 = tpu.matmul %155, %26, %cst_80 {dimension_numbers = #tpu.dot_dimension_numbers<[1], [0], [0], [1], [0, 0, 1, 1], [], []>} : vector<8x96xf32>, vector<96x32xf32>, vector<8x32xf32> -> vector<8x32xf32>
    %cst_81 = arith.constant dense<0.000000e+00> : vector<8x32xf32>
    %158 = tpu.matmul %155, %34, %cst_81 {dimension_numbers = #tpu.dot_dimension_numbers<[1], [0], [0], [1], [0, 0, 1, 1], [], []>} : vector<8x96xf32>, vector<96x32xf32>, vector<8x32xf32> -> vector<8x32xf32>
    %cst_82 = arith.constant 0.000000e+00 : f32
    %159 = vector.broadcast %cst_82 : f32 to vector<8x32xf32>
    %c0_i32 = arith.constant 0 : i32
    %160 = vector.broadcast %c0_i32 : i32 to vector<1x32xi32>
    %161 = arith.cmpi sge, %10, %160 : vector<1x32xi32>
    %c8_i32 = arith.constant 8 : i32
    %162 = vector.broadcast %c8_i32 : i32 to vector<1x32xi32>
    %163 = arith.cmpi slt, %10, %162 : vector<1x32xi32>
    %164 = arith.andi %161, %163 : vector<1x32xi1>
    %cst_83 = arith.constant 1.000000e+00 : f32
    %cst_84 = arith.constant 0.000000e+00 : f32
    %165 = vector.broadcast %cst_83 : f32 to vector<1x32xf32>
    %166 = vector.broadcast %cst_84 : f32 to vector<1x32xf32>
    %167 = arith.select %164, %165, %166 : vector<1x32xi1>, vector<1x32xf32>
    %168 = vector.broadcast %167 : vector<1x32xf32> to vector<8x32xf32>
    %169 = arith.mulf %156, %168 : vector<8x32xf32>
    %cst_85 = arith.constant dense<0.000000e+00> : vector<8x8xf32>
    %170 = tpu.matmul %169, %157, %cst_85 {dimension_numbers = #tpu.dot_dimension_numbers<[1], [1], [0], [0], [0, 0, 1, 0], [], []>} : vector<8x32xf32>, vector<8x32xf32>, vector<8x8xf32> -> vector<8x8xf32>
    %cst_86 = arith.constant 0.353553385 : f32
    %171 = vector.broadcast %cst_86 : f32 to vector<8x8xf32>
    %172 = arith.mulf %170, %171 : vector<8x8xf32>
    %cst_87 = arith.constant -1.000000e+10 : f32
    %173 = vector.shape_cast %6 : vector<8x1xi1> to vector<8x1xi1>
    %174 = vector.broadcast %173 : vector<8x1xi1> to vector<8x8xi1>
    %175 = vector.broadcast %cst_87 : f32 to vector<8x8xf32>
    %176 = arith.select %174, %172, %175 : vector<8x8xi1>, vector<8x8xf32>
    %cst_88 = arith.constant dense<0xFF800000> : vector<8xf32>
    %177 = vector.multi_reduction <maximumf>, %176, %cst_88 [1] : vector<8x8xf32> to vector<8xf32>
    %178 = vector.shape_cast %177 : vector<8xf32> to vector<8x1xf32>
    %179 = vector.broadcast %178 : vector<8x1xf32> to vector<8x8xf32>
    %180 = arith.subf %176, %179 : vector<8x8xf32>
    %181 = math.exp %180 : vector<8x8xf32>
    %cst_89 = arith.constant dense<0.000000e+00> : vector<8xf32>
    %182 = vector.multi_reduction <add>, %181, %cst_89 [1] : vector<8x8xf32> to vector<8xf32>
    %183 = vector.shape_cast %182 : vector<8xf32> to vector<8x1xf32>
    %184 = vector.broadcast %183 : vector<8x1xf32> to vector<8x8xf32>
    %185 = arith.divf %181, %184 : vector<8x8xf32>
    %186 = vector.broadcast %167 : vector<1x32xf32> to vector<8x32xf32>
    %187 = arith.mulf %158, %186 : vector<8x32xf32>
    %cst_90 = arith.constant dense<0.000000e+00> : vector<8x32xf32>
    %188 = tpu.matmul %185, %187, %cst_90 {dimension_numbers = #tpu.dot_dimension_numbers<[1], [0], [0], [1], [0, 0, 1, 1], [], []>} : vector<8x8xf32>, vector<8x32xf32>, vector<8x32xf32> -> vector<8x32xf32>
    %189 = arith.addf %159, %188 : vector<8x32xf32>
    %c8_i32_91 = arith.constant 8 : i32
    %190 = vector.broadcast %c8_i32_91 : i32 to vector<1x32xi32>
    %191 = arith.cmpi sge, %10, %190 : vector<1x32xi32>
    %c16_i32 = arith.constant 16 : i32
    %192 = vector.broadcast %c16_i32 : i32 to vector<1x32xi32>
    %193 = arith.cmpi slt, %10, %192 : vector<1x32xi32>
    %194 = arith.andi %191, %193 : vector<1x32xi1>
    %cst_92 = arith.constant 1.000000e+00 : f32
    %cst_93 = arith.constant 0.000000e+00 : f32
    %195 = vector.broadcast %cst_92 : f32 to vector<1x32xf32>
    %196 = vector.broadcast %cst_93 : f32 to vector<1x32xf32>
    %197 = arith.select %194, %195, %196 : vector<1x32xi1>, vector<1x32xf32>
    %198 = vector.broadcast %197 : vector<1x32xf32> to vector<8x32xf32>
    %199 = arith.mulf %156, %198 : vector<8x32xf32>
    %cst_94 = arith.constant dense<0.000000e+00> : vector<8x8xf32>
    %200 = tpu.matmul %199, %157, %cst_94 {dimension_numbers = #tpu.dot_dimension_numbers<[1], [1], [0], [0], [0, 0, 1, 0], [], []>} : vector<8x32xf32>, vector<8x32xf32>, vector<8x8xf32> -> vector<8x8xf32>
    %cst_95 = arith.constant 0.353553385 : f32
    %201 = vector.broadcast %cst_95 : f32 to vector<8x8xf32>
    %202 = arith.mulf %200, %201 : vector<8x8xf32>
    %cst_96 = arith.constant -1.000000e+10 : f32
    %203 = vector.shape_cast %6 : vector<8x1xi1> to vector<8x1xi1>
    %204 = vector.broadcast %203 : vector<8x1xi1> to vector<8x8xi1>
    %205 = vector.broadcast %cst_96 : f32 to vector<8x8xf32>
    %206 = arith.select %204, %202, %205 : vector<8x8xi1>, vector<8x8xf32>
    %cst_97 = arith.constant dense<0xFF800000> : vector<8xf32>
    %207 = vector.multi_reduction <maximumf>, %206, %cst_97 [1] : vector<8x8xf32> to vector<8xf32>
    %208 = vector.shape_cast %207 : vector<8xf32> to vector<8x1xf32>
    %209 = vector.broadcast %208 : vector<8x1xf32> to vector<8x8xf32>
    %210 = arith.subf %206, %209 : vector<8x8xf32>
    %211 = math.exp %210 : vector<8x8xf32>
    %cst_98 = arith.constant dense<0.000000e+00> : vector<8xf32>
    %212 = vector.multi_reduction <add>, %211, %cst_98 [1] : vector<8x8xf32> to vector<8xf32>
    %213 = vector.shape_cast %212 : vector<8xf32> to vector<8x1xf32>
    %214 = vector.broadcast %213 : vector<8x1xf32> to vector<8x8xf32>
    %215 = arith.divf %211, %214 : vector<8x8xf32>
    %216 = vector.broadcast %197 : vector<1x32xf32> to vector<8x32xf32>
    %217 = arith.mulf %158, %216 : vector<8x32xf32>
    %cst_99 = arith.constant dense<0.000000e+00> : vector<8x32xf32>
    %218 = tpu.matmul %215, %217, %cst_99 {dimension_numbers = #tpu.dot_dimension_numbers<[1], [0], [0], [1], [0, 0, 1, 1], [], []>} : vector<8x8xf32>, vector<8x32xf32>, vector<8x32xf32> -> vector<8x32xf32>
    %219 = arith.addf %189, %218 : vector<8x32xf32>
    %c16_i32_100 = arith.constant 16 : i32
    %220 = vector.broadcast %c16_i32_100 : i32 to vector<1x32xi32>
    %221 = arith.cmpi sge, %10, %220 : vector<1x32xi32>
    %c24_i32 = arith.constant 24 : i32
    %222 = vector.broadcast %c24_i32 : i32 to vector<1x32xi32>
    %223 = arith.cmpi slt, %10, %222 : vector<1x32xi32>
    %224 = arith.andi %221, %223 : vector<1x32xi1>
    %cst_101 = arith.constant 1.000000e+00 : f32
    %cst_102 = arith.constant 0.000000e+00 : f32
    %225 = vector.broadcast %cst_101 : f32 to vector<1x32xf32>
    %226 = vector.broadcast %cst_102 : f32 to vector<1x32xf32>
    %227 = arith.select %224, %225, %226 : vector<1x32xi1>, vector<1x32xf32>
    %228 = vector.broadcast %227 : vector<1x32xf32> to vector<8x32xf32>
    %229 = arith.mulf %156, %228 : vector<8x32xf32>
    %cst_103 = arith.constant dense<0.000000e+00> : vector<8x8xf32>
    %230 = tpu.matmul %229, %157, %cst_103 {dimension_numbers = #tpu.dot_dimension_numbers<[1], [1], [0], [0], [0, 0, 1, 0], [], []>} : vector<8x32xf32>, vector<8x32xf32>, vector<8x8xf32> -> vector<8x8xf32>
    %cst_104 = arith.constant 0.353553385 : f32
    %231 = vector.broadcast %cst_104 : f32 to vector<8x8xf32>
    %232 = arith.mulf %230, %231 : vector<8x8xf32>
    %cst_105 = arith.constant -1.000000e+10 : f32
    %233 = vector.shape_cast %6 : vector<8x1xi1> to vector<8x1xi1>
    %234 = vector.broadcast %233 : vector<8x1xi1> to vector<8x8xi1>
    %235 = vector.broadcast %cst_105 : f32 to vector<8x8xf32>
    %236 = arith.select %234, %232, %235 : vector<8x8xi1>, vector<8x8xf32>
    %cst_106 = arith.constant dense<0xFF800000> : vector<8xf32>
    %237 = vector.multi_reduction <maximumf>, %236, %cst_106 [1] : vector<8x8xf32> to vector<8xf32>
    %238 = vector.shape_cast %237 : vector<8xf32> to vector<8x1xf32>
    %239 = vector.broadcast %238 : vector<8x1xf32> to vector<8x8xf32>
    %240 = arith.subf %236, %239 : vector<8x8xf32>
    %241 = math.exp %240 : vector<8x8xf32>
    %cst_107 = arith.constant dense<0.000000e+00> : vector<8xf32>
    %242 = vector.multi_reduction <add>, %241, %cst_107 [1] : vector<8x8xf32> to vector<8xf32>
    %243 = vector.shape_cast %242 : vector<8xf32> to vector<8x1xf32>
    %244 = vector.broadcast %243 : vector<8x1xf32> to vector<8x8xf32>
    %245 = arith.divf %241, %244 : vector<8x8xf32>
    %246 = vector.broadcast %227 : vector<1x32xf32> to vector<8x32xf32>
    %247 = arith.mulf %158, %246 : vector<8x32xf32>
    %cst_108 = arith.constant dense<0.000000e+00> : vector<8x32xf32>
    %248 = tpu.matmul %245, %247, %cst_108 {dimension_numbers = #tpu.dot_dimension_numbers<[1], [0], [0], [1], [0, 0, 1, 1], [], []>} : vector<8x8xf32>, vector<8x32xf32>, vector<8x32xf32> -> vector<8x32xf32>
    %249 = arith.addf %219, %248 : vector<8x32xf32>
    %c24_i32_109 = arith.constant 24 : i32
    %250 = vector.broadcast %c24_i32_109 : i32 to vector<1x32xi32>
    %251 = arith.cmpi sge, %10, %250 : vector<1x32xi32>
    %c32_i32_110 = arith.constant 32 : i32
    %252 = vector.broadcast %c32_i32_110 : i32 to vector<1x32xi32>
    %253 = arith.cmpi slt, %10, %252 : vector<1x32xi32>
    %254 = arith.andi %251, %253 : vector<1x32xi1>
    %cst_111 = arith.constant 1.000000e+00 : f32
    %cst_112 = arith.constant 0.000000e+00 : f32
    %255 = vector.broadcast %cst_111 : f32 to vector<1x32xf32>
    %256 = vector.broadcast %cst_112 : f32 to vector<1x32xf32>
    %257 = arith.select %254, %255, %256 : vector<1x32xi1>, vector<1x32xf32>
    %258 = vector.broadcast %257 : vector<1x32xf32> to vector<8x32xf32>
    %259 = arith.mulf %156, %258 : vector<8x32xf32>
    %cst_113 = arith.constant dense<0.000000e+00> : vector<8x8xf32>
    %260 = tpu.matmul %259, %157, %cst_113 {dimension_numbers = #tpu.dot_dimension_numbers<[1], [1], [0], [0], [0, 0, 1, 0], [], []>} : vector<8x32xf32>, vector<8x32xf32>, vector<8x8xf32> -> vector<8x8xf32>
    %cst_114 = arith.constant 0.353553385 : f32
    %261 = vector.broadcast %cst_114 : f32 to vector<8x8xf32>
    %262 = arith.mulf %260, %261 : vector<8x8xf32>
    %cst_115 = arith.constant -1.000000e+10 : f32
    %263 = vector.shape_cast %6 : vector<8x1xi1> to vector<8x1xi1>
    %264 = vector.broadcast %263 : vector<8x1xi1> to vector<8x8xi1>
    %265 = vector.broadcast %cst_115 : f32 to vector<8x8xf32>
    %266 = arith.select %264, %262, %265 : vector<8x8xi1>, vector<8x8xf32>
    %cst_116 = arith.constant dense<0xFF800000> : vector<8xf32>
    %267 = vector.multi_reduction <maximumf>, %266, %cst_116 [1] : vector<8x8xf32> to vector<8xf32>
    %268 = vector.shape_cast %267 : vector<8xf32> to vector<8x1xf32>
    %269 = vector.broadcast %268 : vector<8x1xf32> to vector<8x8xf32>
    %270 = arith.subf %266, %269 : vector<8x8xf32>
    %271 = math.exp %270 : vector<8x8xf32>
    %cst_117 = arith.constant dense<0.000000e+00> : vector<8xf32>
    %272 = vector.multi_reduction <add>, %271, %cst_117 [1] : vector<8x8xf32> to vector<8xf32>
    %273 = vector.shape_cast %272 : vector<8xf32> to vector<8x1xf32>
    %274 = vector.broadcast %273 : vector<8x1xf32> to vector<8x8xf32>
    %275 = arith.divf %271, %274 : vector<8x8xf32>
    %276 = vector.broadcast %257 : vector<1x32xf32> to vector<8x32xf32>
    %277 = arith.mulf %158, %276 : vector<8x32xf32>
    %cst_118 = arith.constant dense<0.000000e+00> : vector<8x32xf32>
    %278 = tpu.matmul %275, %277, %cst_118 {dimension_numbers = #tpu.dot_dimension_numbers<[1], [0], [0], [1], [0, 0, 1, 1], [], []>} : vector<8x8xf32>, vector<8x32xf32>, vector<8x32xf32> -> vector<8x32xf32>
    %279 = arith.addf %249, %278 : vector<8x32xf32>
    %c0_119 = arith.constant 0 : index
    %c0_120 = arith.constant 0 : index
    %280 = vector.load %arg14[%c0_119, %c0_120] : memref<32x32xf32, #tpu.memory_space<vmem>>, vector<32x32xf32>
    %cst_121 = arith.constant dense<0.000000e+00> : vector<8x32xf32>
    %281 = tpu.matmul %279, %280, %cst_121 {dimension_numbers = #tpu.dot_dimension_numbers<[1], [0], [0], [1], [0, 0, 1, 1], [], []>} : vector<8x32xf32>, vector<32x32xf32>, vector<8x32xf32> -> vector<8x32xf32>
    %c0_122 = arith.constant 0 : index
    %c0_123 = arith.constant 0 : index
    %282 = vector.load %arg15[%c0_122, %c0_123] : memref<1x32xf32, #tpu.memory_space<vmem>>, vector<1x32xf32>
    %283 = vector.broadcast %282 : vector<1x32xf32> to vector<8x32xf32>
    %284 = arith.addf %281, %283 : vector<8x32xf32>
    %285 = arith.addf %150, %284 : vector<8x32xf32>
    %c0_124 = arith.constant 0 : index
    %c0_125 = arith.constant 0 : index
    %c0_126 = arith.constant 0 : index
    %286 = vector.load %arg22[%c0_124, %c0_125, %c0_126] : memref<3x1x32xf32, #tpu.memory_space<vmem>>, vector<1x1x32xf32>
    %287 = vector.shape_cast %286 : vector<1x1x32xf32> to vector<1x32xf32>
    %c0_127 = arith.constant 0 : index
    %c0_128 = arith.constant 0 : index
    %c0_129 = arith.constant 0 : index
    %288 = vector.load %arg23[%c0_127, %c0_128, %c0_129] : memref<3x1x32xf32, #tpu.memory_space<vmem>>, vector<1x1x32xf32>
    %289 = vector.shape_cast %288 : vector<1x1x32xf32> to vector<1x32xf32>
    %cst_130 = arith.constant dense<0.000000e+00> : vector<8xf32>
    %290 = vector.multi_reduction <add>, %285, %cst_130 [1] : vector<8x32xf32> to vector<8xf32>
    %291 = vector.shape_cast %290 : vector<8xf32> to vector<8x1xf32>
    %cst_131 = arith.constant 3.200000e+01 : f32
    %292 = vector.broadcast %cst_131 : f32 to vector<8x1xf32>
    %293 = arith.divf %291, %292 : vector<8x1xf32>
    %294 = vector.broadcast %293 : vector<8x1xf32> to vector<8x32xf32>
    %295 = arith.subf %285, %294 : vector<8x32xf32>
    %296 = arith.mulf %295, %295 : vector<8x32xf32>
    %cst_132 = arith.constant dense<0.000000e+00> : vector<8xf32>
    %297 = vector.multi_reduction <add>, %296, %cst_132 [1] : vector<8x32xf32> to vector<8xf32>
    %298 = vector.shape_cast %297 : vector<8xf32> to vector<8x1xf32>
    %cst_133 = arith.constant 3.200000e+01 : f32
    %299 = vector.broadcast %cst_133 : f32 to vector<8x1xf32>
    %300 = arith.divf %298, %299 : vector<8x1xf32>
    %301 = vector.broadcast %293 : vector<8x1xf32> to vector<8x32xf32>
    %302 = arith.subf %285, %301 : vector<8x32xf32>
    %cst_134 = arith.constant 9.99999974E-6 : f32
    %303 = vector.broadcast %cst_134 : f32 to vector<8x1xf32>
    %304 = arith.addf %300, %303 : vector<8x1xf32>
    %305 = math.rsqrt %304 : vector<8x1xf32>
    %306 = vector.broadcast %305 : vector<8x1xf32> to vector<8x32xf32>
    %307 = arith.mulf %302, %306 : vector<8x32xf32>
    %308 = vector.broadcast %287 : vector<1x32xf32> to vector<8x32xf32>
    %309 = arith.mulf %307, %308 : vector<8x32xf32>
    %310 = vector.broadcast %289 : vector<1x32xf32> to vector<8x32xf32>
    %311 = arith.addf %309, %310 : vector<8x32xf32>
    %c0_135 = arith.constant 0 : index
    %c0_136 = arith.constant 0 : index
    %312 = vector.load %arg16[%c0_135, %c0_136] : memref<32x32xf32, #tpu.memory_space<vmem>>, vector<32x32xf32>
    %cst_137 = arith.constant dense<0.000000e+00> : vector<8x32xf32>
    %313 = tpu.matmul %311, %312, %cst_137 {dimension_numbers = #tpu.dot_dimension_numbers<[1], [0], [0], [1], [0, 0, 1, 1], [], []>} : vector<8x32xf32>, vector<32x32xf32>, vector<8x32xf32> -> vector<8x32xf32>
    %c0_138 = arith.constant 0 : index
    %c0_139 = arith.constant 0 : index
    %314 = vector.load %arg17[%c0_138, %c0_139] : memref<1x32xf32, #tpu.memory_space<vmem>>, vector<1x32xf32>
    %315 = vector.broadcast %314 : vector<1x32xf32> to vector<8x32xf32>
    %316 = arith.addf %313, %315 : vector<8x32xf32>
    %c0_140 = arith.constant 0 : index
    %c0_141 = arith.constant 0 : index
    %317 = vector.load %arg18[%c0_140, %c0_141] : memref<32x64xf32, #tpu.memory_space<vmem>>, vector<32x64xf32>
    %cst_142 = arith.constant dense<0.000000e+00> : vector<16x64xf32>
    %318 = tpu.matmul %143, %317, %cst_142 {dimension_numbers = #tpu.dot_dimension_numbers<[1], [0], [0], [1], [0, 0, 1, 1], [], []>} : vector<16x32xf32>, vector<32x64xf32>, vector<16x64xf32> -> vector<16x64xf32>
    %c0_143 = arith.constant 0 : index
    %c0_144 = arith.constant 0 : index
    %319 = vector.load %arg19[%c0_143, %c0_144] : memref<1x64xf32, #tpu.memory_space<vmem>>, vector<1x64xf32>
    %320 = vector.broadcast %319 : vector<1x64xf32> to vector<16x64xf32>
    %321 = arith.addf %318, %320 : vector<16x64xf32>
    %322 = vector.extract_strided_slice %321 {offsets = [0, 0], sizes = [16, 32], strides = [1, 1]} : vector<16x64xf32> to vector<16x32xf32>
    %cst_145 = arith.constant dense<0.000000e+00> : vector<16x32xf32>
    %323 = tpu.matmul %321, %18, %cst_145 {dimension_numbers = #tpu.dot_dimension_numbers<[1], [0], [0], [1], [0, 0, 1, 1], [], []>} : vector<16x64xf32>, vector<64x32xf32>, vector<16x32xf32> -> vector<16x32xf32>
    %cst_146 = arith.constant 0.000000e+00 : f32
    %324 = vector.broadcast %cst_146 : f32 to vector<8x32xf32>
    %cst_147 = arith.constant 0.000000e+00 : f32
    %325 = vector.broadcast %cst_147 : f32 to vector<8x64xf32>
    %c0_i32_148 = arith.constant 0 : i32
    %326 = vector.broadcast %c0_i32_148 : i32 to vector<1x32xi32>
    %327 = arith.cmpi sge, %10, %326 : vector<1x32xi32>
    %c8_i32_149 = arith.constant 8 : i32
    %328 = vector.broadcast %c8_i32_149 : i32 to vector<1x32xi32>
    %329 = arith.cmpi slt, %10, %328 : vector<1x32xi32>
    %330 = arith.andi %327, %329 : vector<1x32xi1>
    %cst_150 = arith.constant 1.000000e+00 : f32
    %cst_151 = arith.constant 0.000000e+00 : f32
    %331 = vector.broadcast %cst_150 : f32 to vector<1x32xf32>
    %332 = vector.broadcast %cst_151 : f32 to vector<1x32xf32>
    %333 = arith.select %330, %331, %332 : vector<1x32xi1>, vector<1x32xf32>
    %334 = vector.broadcast %333 : vector<1x32xf32> to vector<8x32xf32>
    %335 = arith.mulf %316, %334 : vector<8x32xf32>
    %cst_152 = arith.constant dense<0.000000e+00> : vector<8x16xf32>
    %336 = tpu.matmul %335, %322, %cst_152 {dimension_numbers = #tpu.dot_dimension_numbers<[1], [1], [0], [0], [0, 0, 1, 0], [], []>} : vector<8x32xf32>, vector<16x32xf32>, vector<8x16xf32> -> vector<8x16xf32>
    %cst_153 = arith.constant 0.353553385 : f32
    %337 = vector.broadcast %cst_153 : f32 to vector<8x16xf32>
    %338 = arith.mulf %336, %337 : vector<8x16xf32>
    %cst_154 = arith.constant -1.000000e+10 : f32
    %339 = vector.shape_cast %9 : vector<1x16xi1> to vector<1x16xi1>
    %340 = vector.broadcast %339 : vector<1x16xi1> to vector<8x16xi1>
    %341 = vector.broadcast %cst_154 : f32 to vector<8x16xf32>
    %342 = arith.select %340, %338, %341 : vector<8x16xi1>, vector<8x16xf32>
    %cst_155 = arith.constant dense<0xFF800000> : vector<8xf32>
    %343 = vector.multi_reduction <maximumf>, %342, %cst_155 [1] : vector<8x16xf32> to vector<8xf32>
    %344 = vector.shape_cast %343 : vector<8xf32> to vector<8x1xf32>
    %345 = vector.broadcast %344 : vector<8x1xf32> to vector<8x16xf32>
    %346 = arith.subf %342, %345 : vector<8x16xf32>
    %347 = math.exp %346 : vector<8x16xf32>
    %cst_156 = arith.constant dense<0.000000e+00> : vector<8xf32>
    %348 = vector.multi_reduction <add>, %347, %cst_156 [1] : vector<8x16xf32> to vector<8xf32>
    %349 = vector.shape_cast %348 : vector<8xf32> to vector<8x1xf32>
    %350 = vector.broadcast %349 : vector<8x1xf32> to vector<8x16xf32>
    %351 = arith.divf %347, %350 : vector<8x16xf32>
    %352 = tpu.iota {dimensions = array<i32: 0>} : vector<16x64xi32>
    %353 = tpu.iota {dimensions = array<i32: 1>} : vector<16x64xi32>
    %c0_i32_157 = arith.constant 0 : i32
    %354 = vector.broadcast %c0_i32_157 : i32 to vector<16x64xi32>
    %355 = arith.addi %353, %354 : vector<16x64xi32>
    %356 = arith.cmpi eq, %352, %355 : vector<16x64xi32>
    %cst_158 = arith.constant 1.000000e+00 : f32
    %cst_159 = arith.constant 0.000000e+00 : f32
    %357 = vector.broadcast %cst_158 : f32 to vector<16x64xf32>
    %358 = vector.broadcast %cst_159 : f32 to vector<16x64xf32>
    %359 = arith.select %356, %357, %358 : vector<16x64xi1>, vector<16x64xf32>
    %cst_160 = arith.constant dense<0.000000e+00> : vector<8x64xf32>
    %360 = tpu.matmul %351, %359, %cst_160 {dimension_numbers = #tpu.dot_dimension_numbers<[1], [0], [0], [1], [0, 0, 1, 1], [], []>} : vector<8x16xf32>, vector<16x64xf32>, vector<8x64xf32> -> vector<8x64xf32>
    %361 = arith.addf %325, %360 : vector<8x64xf32>
    %362 = vector.broadcast %333 : vector<1x32xf32> to vector<16x32xf32>
    %363 = arith.mulf %323, %362 : vector<16x32xf32>
    %cst_161 = arith.constant dense<0.000000e+00> : vector<8x32xf32>
    %364 = tpu.matmul %351, %363, %cst_161 {dimension_numbers = #tpu.dot_dimension_numbers<[1], [0], [0], [1], [0, 0, 1, 1], [], []>} : vector<8x16xf32>, vector<16x32xf32>, vector<8x32xf32> -> vector<8x32xf32>
    %365 = arith.addf %324, %364 : vector<8x32xf32>
    %c8_i32_162 = arith.constant 8 : i32
    %366 = vector.broadcast %c8_i32_162 : i32 to vector<1x32xi32>
    %367 = arith.cmpi sge, %10, %366 : vector<1x32xi32>
    %c16_i32_163 = arith.constant 16 : i32
    %368 = vector.broadcast %c16_i32_163 : i32 to vector<1x32xi32>
    %369 = arith.cmpi slt, %10, %368 : vector<1x32xi32>
    %370 = arith.andi %367, %369 : vector<1x32xi1>
    %cst_164 = arith.constant 1.000000e+00 : f32
    %cst_165 = arith.constant 0.000000e+00 : f32
    %371 = vector.broadcast %cst_164 : f32 to vector<1x32xf32>
    %372 = vector.broadcast %cst_165 : f32 to vector<1x32xf32>
    %373 = arith.select %370, %371, %372 : vector<1x32xi1>, vector<1x32xf32>
    %374 = vector.broadcast %373 : vector<1x32xf32> to vector<8x32xf32>
    %375 = arith.mulf %316, %374 : vector<8x32xf32>
    %cst_166 = arith.constant dense<0.000000e+00> : vector<8x16xf32>
    %376 = tpu.matmul %375, %322, %cst_166 {dimension_numbers = #tpu.dot_dimension_numbers<[1], [1], [0], [0], [0, 0, 1, 0], [], []>} : vector<8x32xf32>, vector<16x32xf32>, vector<8x16xf32> -> vector<8x16xf32>
    %cst_167 = arith.constant 0.353553385 : f32
    %377 = vector.broadcast %cst_167 : f32 to vector<8x16xf32>
    %378 = arith.mulf %376, %377 : vector<8x16xf32>
    %cst_168 = arith.constant -1.000000e+10 : f32
    %379 = vector.shape_cast %9 : vector<1x16xi1> to vector<1x16xi1>
    %380 = vector.broadcast %379 : vector<1x16xi1> to vector<8x16xi1>
    %381 = vector.broadcast %cst_168 : f32 to vector<8x16xf32>
    %382 = arith.select %380, %378, %381 : vector<8x16xi1>, vector<8x16xf32>
    %cst_169 = arith.constant dense<0xFF800000> : vector<8xf32>
    %383 = vector.multi_reduction <maximumf>, %382, %cst_169 [1] : vector<8x16xf32> to vector<8xf32>
    %384 = vector.shape_cast %383 : vector<8xf32> to vector<8x1xf32>
    %385 = vector.broadcast %384 : vector<8x1xf32> to vector<8x16xf32>
    %386 = arith.subf %382, %385 : vector<8x16xf32>
    %387 = math.exp %386 : vector<8x16xf32>
    %cst_170 = arith.constant dense<0.000000e+00> : vector<8xf32>
    %388 = vector.multi_reduction <add>, %387, %cst_170 [1] : vector<8x16xf32> to vector<8xf32>
    %389 = vector.shape_cast %388 : vector<8xf32> to vector<8x1xf32>
    %390 = vector.broadcast %389 : vector<8x1xf32> to vector<8x16xf32>
    %391 = arith.divf %387, %390 : vector<8x16xf32>
    %392 = tpu.iota {dimensions = array<i32: 0>} : vector<16x64xi32>
    %393 = tpu.iota {dimensions = array<i32: 1>} : vector<16x64xi32>
    %c-16_i32 = arith.constant -16 : i32
    %394 = vector.broadcast %c-16_i32 : i32 to vector<16x64xi32>
    %395 = arith.addi %393, %394 : vector<16x64xi32>
    %396 = arith.cmpi eq, %392, %395 : vector<16x64xi32>
    %cst_171 = arith.constant 1.000000e+00 : f32
    %cst_172 = arith.constant 0.000000e+00 : f32
    %397 = vector.broadcast %cst_171 : f32 to vector<16x64xf32>
    %398 = vector.broadcast %cst_172 : f32 to vector<16x64xf32>
    %399 = arith.select %396, %397, %398 : vector<16x64xi1>, vector<16x64xf32>
    %cst_173 = arith.constant dense<0.000000e+00> : vector<8x64xf32>
    %400 = tpu.matmul %391, %399, %cst_173 {dimension_numbers = #tpu.dot_dimension_numbers<[1], [0], [0], [1], [0, 0, 1, 1], [], []>} : vector<8x16xf32>, vector<16x64xf32>, vector<8x64xf32> -> vector<8x64xf32>
    %401 = arith.addf %361, %400 : vector<8x64xf32>
    %402 = vector.broadcast %373 : vector<1x32xf32> to vector<16x32xf32>
    %403 = arith.mulf %323, %402 : vector<16x32xf32>
    %cst_174 = arith.constant dense<0.000000e+00> : vector<8x32xf32>
    %404 = tpu.matmul %391, %403, %cst_174 {dimension_numbers = #tpu.dot_dimension_numbers<[1], [0], [0], [1], [0, 0, 1, 1], [], []>} : vector<8x16xf32>, vector<16x32xf32>, vector<8x32xf32> -> vector<8x32xf32>
    %405 = arith.addf %365, %404 : vector<8x32xf32>
    %c16_i32_175 = arith.constant 16 : i32
    %406 = vector.broadcast %c16_i32_175 : i32 to vector<1x32xi32>
    %407 = arith.cmpi sge, %10, %406 : vector<1x32xi32>
    %c24_i32_176 = arith.constant 24 : i32
    %408 = vector.broadcast %c24_i32_176 : i32 to vector<1x32xi32>
    %409 = arith.cmpi slt, %10, %408 : vector<1x32xi32>
    %410 = arith.andi %407, %409 : vector<1x32xi1>
    %cst_177 = arith.constant 1.000000e+00 : f32
    %cst_178 = arith.constant 0.000000e+00 : f32
    %411 = vector.broadcast %cst_177 : f32 to vector<1x32xf32>
    %412 = vector.broadcast %cst_178 : f32 to vector<1x32xf32>
    %413 = arith.select %410, %411, %412 : vector<1x32xi1>, vector<1x32xf32>
    %414 = vector.broadcast %413 : vector<1x32xf32> to vector<8x32xf32>
    %415 = arith.mulf %316, %414 : vector<8x32xf32>
    %cst_179 = arith.constant dense<0.000000e+00> : vector<8x16xf32>
    %416 = tpu.matmul %415, %322, %cst_179 {dimension_numbers = #tpu.dot_dimension_numbers<[1], [1], [0], [0], [0, 0, 1, 0], [], []>} : vector<8x32xf32>, vector<16x32xf32>, vector<8x16xf32> -> vector<8x16xf32>
    %cst_180 = arith.constant 0.353553385 : f32
    %417 = vector.broadcast %cst_180 : f32 to vector<8x16xf32>
    %418 = arith.mulf %416, %417 : vector<8x16xf32>
    %cst_181 = arith.constant -1.000000e+10 : f32
    %419 = vector.shape_cast %9 : vector<1x16xi1> to vector<1x16xi1>
    %420 = vector.broadcast %419 : vector<1x16xi1> to vector<8x16xi1>
    %421 = vector.broadcast %cst_181 : f32 to vector<8x16xf32>
    %422 = arith.select %420, %418, %421 : vector<8x16xi1>, vector<8x16xf32>
    %cst_182 = arith.constant dense<0xFF800000> : vector<8xf32>
    %423 = vector.multi_reduction <maximumf>, %422, %cst_182 [1] : vector<8x16xf32> to vector<8xf32>
    %424 = vector.shape_cast %423 : vector<8xf32> to vector<8x1xf32>
    %425 = vector.broadcast %424 : vector<8x1xf32> to vector<8x16xf32>
    %426 = arith.subf %422, %425 : vector<8x16xf32>
    %427 = math.exp %426 : vector<8x16xf32>
    %cst_183 = arith.constant dense<0.000000e+00> : vector<8xf32>
    %428 = vector.multi_reduction <add>, %427, %cst_183 [1] : vector<8x16xf32> to vector<8xf32>
    %429 = vector.shape_cast %428 : vector<8xf32> to vector<8x1xf32>
    %430 = vector.broadcast %429 : vector<8x1xf32> to vector<8x16xf32>
    %431 = arith.divf %427, %430 : vector<8x16xf32>
    %432 = tpu.iota {dimensions = array<i32: 0>} : vector<16x64xi32>
    %433 = tpu.iota {dimensions = array<i32: 1>} : vector<16x64xi32>
    %c-32_i32 = arith.constant -32 : i32
    %434 = vector.broadcast %c-32_i32 : i32 to vector<16x64xi32>
    %435 = arith.addi %433, %434 : vector<16x64xi32>
    %436 = arith.cmpi eq, %432, %435 : vector<16x64xi32>
    %cst_184 = arith.constant 1.000000e+00 : f32
    %cst_185 = arith.constant 0.000000e+00 : f32
    %437 = vector.broadcast %cst_184 : f32 to vector<16x64xf32>
    %438 = vector.broadcast %cst_185 : f32 to vector<16x64xf32>
    %439 = arith.select %436, %437, %438 : vector<16x64xi1>, vector<16x64xf32>
    %cst_186 = arith.constant dense<0.000000e+00> : vector<8x64xf32>
    %440 = tpu.matmul %431, %439, %cst_186 {dimension_numbers = #tpu.dot_dimension_numbers<[1], [0], [0], [1], [0, 0, 1, 1], [], []>} : vector<8x16xf32>, vector<16x64xf32>, vector<8x64xf32> -> vector<8x64xf32>
    %441 = arith.addf %401, %440 : vector<8x64xf32>
    %442 = vector.broadcast %413 : vector<1x32xf32> to vector<16x32xf32>
    %443 = arith.mulf %323, %442 : vector<16x32xf32>
    %cst_187 = arith.constant dense<0.000000e+00> : vector<8x32xf32>
    %444 = tpu.matmul %431, %443, %cst_187 {dimension_numbers = #tpu.dot_dimension_numbers<[1], [0], [0], [1], [0, 0, 1, 1], [], []>} : vector<8x16xf32>, vector<16x32xf32>, vector<8x32xf32> -> vector<8x32xf32>
    %445 = arith.addf %405, %444 : vector<8x32xf32>
    %c24_i32_188 = arith.constant 24 : i32
    %446 = vector.broadcast %c24_i32_188 : i32 to vector<1x32xi32>
    %447 = arith.cmpi sge, %10, %446 : vector<1x32xi32>
    %c32_i32_189 = arith.constant 32 : i32
    %448 = vector.broadcast %c32_i32_189 : i32 to vector<1x32xi32>
    %449 = arith.cmpi slt, %10, %448 : vector<1x32xi32>
    %450 = arith.andi %447, %449 : vector<1x32xi1>
    %cst_190 = arith.constant 1.000000e+00 : f32
    %cst_191 = arith.constant 0.000000e+00 : f32
    %451 = vector.broadcast %cst_190 : f32 to vector<1x32xf32>
    %452 = vector.broadcast %cst_191 : f32 to vector<1x32xf32>
    %453 = arith.select %450, %451, %452 : vector<1x32xi1>, vector<1x32xf32>
    %454 = vector.broadcast %453 : vector<1x32xf32> to vector<8x32xf32>
    %455 = arith.mulf %316, %454 : vector<8x32xf32>
    %cst_192 = arith.constant dense<0.000000e+00> : vector<8x16xf32>
    %456 = tpu.matmul %455, %322, %cst_192 {dimension_numbers = #tpu.dot_dimension_numbers<[1], [1], [0], [0], [0, 0, 1, 0], [], []>} : vector<8x32xf32>, vector<16x32xf32>, vector<8x16xf32> -> vector<8x16xf32>
    %cst_193 = arith.constant 0.353553385 : f32
    %457 = vector.broadcast %cst_193 : f32 to vector<8x16xf32>
    %458 = arith.mulf %456, %457 : vector<8x16xf32>
    %cst_194 = arith.constant -1.000000e+10 : f32
    %459 = vector.shape_cast %9 : vector<1x16xi1> to vector<1x16xi1>
    %460 = vector.broadcast %459 : vector<1x16xi1> to vector<8x16xi1>
    %461 = vector.broadcast %cst_194 : f32 to vector<8x16xf32>
    %462 = arith.select %460, %458, %461 : vector<8x16xi1>, vector<8x16xf32>
    %cst_195 = arith.constant dense<0xFF800000> : vector<8xf32>
    %463 = vector.multi_reduction <maximumf>, %462, %cst_195 [1] : vector<8x16xf32> to vector<8xf32>
    %464 = vector.shape_cast %463 : vector<8xf32> to vector<8x1xf32>
    %465 = vector.broadcast %464 : vector<8x1xf32> to vector<8x16xf32>
    %466 = arith.subf %462, %465 : vector<8x16xf32>
    %467 = math.exp %466 : vector<8x16xf32>
    %cst_196 = arith.constant dense<0.000000e+00> : vector<8xf32>
    %468 = vector.multi_reduction <add>, %467, %cst_196 [1] : vector<8x16xf32> to vector<8xf32>
    %469 = vector.shape_cast %468 : vector<8xf32> to vector<8x1xf32>
    %470 = vector.broadcast %469 : vector<8x1xf32> to vector<8x16xf32>
    %471 = arith.divf %467, %470 : vector<8x16xf32>
    %472 = tpu.iota {dimensions = array<i32: 0>} : vector<16x64xi32>
    %473 = tpu.iota {dimensions = array<i32: 1>} : vector<16x64xi32>
    %c-48_i32 = arith.constant -48 : i32
    %474 = vector.broadcast %c-48_i32 : i32 to vector<16x64xi32>
    %475 = arith.addi %473, %474 : vector<16x64xi32>
    %476 = arith.cmpi eq, %472, %475 : vector<16x64xi32>
    %cst_197 = arith.constant 1.000000e+00 : f32
    %cst_198 = arith.constant 0.000000e+00 : f32
    %477 = vector.broadcast %cst_197 : f32 to vector<16x64xf32>
    %478 = vector.broadcast %cst_198 : f32 to vector<16x64xf32>
    %479 = arith.select %476, %477, %478 : vector<16x64xi1>, vector<16x64xf32>
    %cst_199 = arith.constant dense<0.000000e+00> : vector<8x64xf32>
    %480 = tpu.matmul %471, %479, %cst_199 {dimension_numbers = #tpu.dot_dimension_numbers<[1], [0], [0], [1], [0, 0, 1, 1], [], []>} : vector<8x16xf32>, vector<16x64xf32>, vector<8x64xf32> -> vector<8x64xf32>
    %481 = arith.addf %441, %480 : vector<8x64xf32>
    %482 = vector.broadcast %453 : vector<1x32xf32> to vector<16x32xf32>
    %483 = arith.mulf %323, %482 : vector<16x32xf32>
    %cst_200 = arith.constant dense<0.000000e+00> : vector<8x32xf32>
    %484 = tpu.matmul %471, %483, %cst_200 {dimension_numbers = #tpu.dot_dimension_numbers<[1], [0], [0], [1], [0, 0, 1, 1], [], []>} : vector<8x16xf32>, vector<16x32xf32>, vector<8x32xf32> -> vector<8x32xf32>
    %485 = arith.addf %445, %484 : vector<8x32xf32>
    %c0_201 = arith.constant 0 : index
    %c0_202 = arith.constant 0 : index
    %486 = vector.load %arg20[%c0_201, %c0_202] : memref<32x32xf32, #tpu.memory_space<vmem>>, vector<32x32xf32>
    %cst_203 = arith.constant dense<0.000000e+00> : vector<8x32xf32>
    %487 = tpu.matmul %485, %486, %cst_203 {dimension_numbers = #tpu.dot_dimension_numbers<[1], [0], [0], [1], [0, 0, 1, 1], [], []>} : vector<8x32xf32>, vector<32x32xf32>, vector<8x32xf32> -> vector<8x32xf32>
    %c0_204 = arith.constant 0 : index
    %c0_205 = arith.constant 0 : index
    %488 = vector.load %arg21[%c0_204, %c0_205] : memref<1x32xf32, #tpu.memory_space<vmem>>, vector<1x32xf32>
    %489 = vector.broadcast %488 : vector<1x32xf32> to vector<8x32xf32>
    %490 = arith.addf %487, %489 : vector<8x32xf32>
    %c0_206 = arith.constant 0 : index
    %c0_207 = arith.constant 0 : index
    %c0_208 = arith.constant 0 : index
    %491 = vector.load %arg32[%c0_206, %c0_207, %c0_208] : memref<1x8x64xf32, #tpu.memory_space<vmem>>, vector<1x8x64xf32>
    %492 = vector.shape_cast %491 : vector<1x8x64xf32> to vector<8x64xf32>
    %493 = vector.shape_cast %481 : vector<8x64xf32> to vector<1x8x64xf32>
    tpu.vector_store %arg32[%c0_206, %c0_207, %c0_208], %493 {strides = array<i32>} : memref<1x8x64xf32, #tpu.memory_space<vmem>>, vector<1x8x64xf32>,
    %494 = arith.addf %311, %490 : vector<8x32xf32>
    %c1_209 = arith.constant 1 : index
    %c0_210 = arith.constant 0 : index
    %c0_211 = arith.constant 0 : index
    %495 = vector.load %arg22[%c1_209, %c0_210, %c0_211] : memref<3x1x32xf32, #tpu.memory_space<vmem>>, vector<1x1x32xf32>
    %496 = vector.shape_cast %495 : vector<1x1x32xf32> to vector<1x32xf32>
    %c1_212 = arith.constant 1 : index
    %c0_213 = arith.constant 0 : index
    %c0_214 = arith.constant 0 : index
    %497 = vector.load %arg23[%c1_212, %c0_213, %c0_214] : memref<3x1x32xf32, #tpu.memory_space<vmem>>, vector<1x1x32xf32>
    %498 = vector.shape_cast %497 : vector<1x1x32xf32> to vector<1x32xf32>
    %cst_215 = arith.constant dense<0.000000e+00> : vector<8xf32>
    %499 = vector.multi_reduction <add>, %494, %cst_215 [1] : vector<8x32xf32> to vector<8xf32>
    %500 = vector.shape_cast %499 : vector<8xf32> to vector<8x1xf32>
    %cst_216 = arith.constant 3.200000e+01 : f32
    %501 = vector.broadcast %cst_216 : f32 to vector<8x1xf32>
    %502 = arith.divf %500, %501 : vector<8x1xf32>
    %503 = vector.broadcast %502 : vector<8x1xf32> to vector<8x32xf32>
    %504 = arith.subf %494, %503 : vector<8x32xf32>
    %505 = arith.mulf %504, %504 : vector<8x32xf32>
    %cst_217 = arith.constant dense<0.000000e+00> : vector<8xf32>
    %506 = vector.multi_reduction <add>, %505, %cst_217 [1] : vector<8x32xf32> to vector<8xf32>
    %507 = vector.shape_cast %506 : vector<8xf32> to vector<8x1xf32>
    %cst_218 = arith.constant 3.200000e+01 : f32
    %508 = vector.broadcast %cst_218 : f32 to vector<8x1xf32>
    %509 = arith.divf %507, %508 : vector<8x1xf32>
    %510 = vector.broadcast %502 : vector<8x1xf32> to vector<8x32xf32>
    %511 = arith.subf %494, %510 : vector<8x32xf32>
    %cst_219 = arith.constant 9.99999974E-6 : f32
    %512 = vector.broadcast %cst_219 : f32 to vector<8x1xf32>
    %513 = arith.addf %509, %512 : vector<8x1xf32>
    %514 = math.rsqrt %513 : vector<8x1xf32>
    %515 = vector.broadcast %514 : vector<8x1xf32> to vector<8x32xf32>
    %516 = arith.mulf %511, %515 : vector<8x32xf32>
    %517 = vector.broadcast %496 : vector<1x32xf32> to vector<8x32xf32>
    %518 = arith.mulf %516, %517 : vector<8x32xf32>
    %519 = vector.broadcast %498 : vector<1x32xf32> to vector<8x32xf32>
    %520 = arith.addf %518, %519 : vector<8x32xf32>
    %c0_220 = arith.constant 0 : index
    %c0_221 = arith.constant 0 : index
    %521 = vector.load %arg24[%c0_220, %c0_221] : memref<32x64xf32, #tpu.memory_space<vmem>>, vector<32x64xf32>
    %cst_222 = arith.constant dense<0.000000e+00> : vector<8x64xf32>
    %522 = tpu.matmul %520, %521, %cst_222 {dimension_numbers = #tpu.dot_dimension_numbers<[1], [0], [0], [1], [0, 0, 1, 1], [], []>} : vector<8x32xf32>, vector<32x64xf32>, vector<8x64xf32> -> vector<8x64xf32>
    %c0_223 = arith.constant 0 : index
    %c0_224 = arith.constant 0 : index
    %523 = vector.load %arg25[%c0_223, %c0_224] : memref<1x64xf32, #tpu.memory_space<vmem>>, vector<1x64xf32>
    %524 = vector.broadcast %523 : vector<1x64xf32> to vector<8x64xf32>
    %525 = arith.addf %522, %524 : vector<8x64xf32>
    %cst_225 = arith.constant 0.000000e+00 : f32
    %526 = vector.broadcast %cst_225 : f32 to vector<8x64xf32>
    %527 = arith.maximumf %525, %526 : vector<8x64xf32>
    %c0_226 = arith.constant 0 : index
    %c0_227 = arith.constant 0 : index
    %528 = vector.load %arg26[%c0_226, %c0_227] : memref<64x32xf32, #tpu.memory_space<vmem>>, vector<64x32xf32>
    %cst_228 = arith.constant dense<0.000000e+00> : vector<8x32xf32>
    %529 = tpu.matmul %527, %528, %cst_228 {dimension_numbers = #tpu.dot_dimension_numbers<[1], [0], [0], [1], [0, 0, 1, 1], [], []>} : vector<8x64xf32>, vector<64x32xf32>, vector<8x32xf32> -> vector<8x32xf32>
    %c0_229 = arith.constant 0 : index
    %c0_230 = arith.constant 0 : index
    %530 = vector.load %arg27[%c0_229, %c0_230] : memref<1x32xf32, #tpu.memory_space<vmem>>, vector<1x32xf32>
    %531 = vector.broadcast %530 : vector<1x32xf32> to vector<8x32xf32>
    %532 = arith.addf %529, %531 : vector<8x32xf32>
    %533 = arith.addf %520, %532 : vector<8x32xf32>
    %c2_231 = arith.constant 2 : index
    %c0_232 = arith.constant 0 : index
    %c0_233 = arith.constant 0 : index
    %534 = vector.load %arg22[%c2_231, %c0_232, %c0_233] : memref<3x1x32xf32, #tpu.memory_space<vmem>>, vector<1x1x32xf32>
    %535 = vector.shape_cast %534 : vector<1x1x32xf32> to vector<1x32xf32>
    %c2_234 = arith.constant 2 : index
    %c0_235 = arith.constant 0 : index
    %c0_236 = arith.constant 0 : index
    %536 = vector.load %arg23[%c2_234, %c0_235, %c0_236] : memref<3x1x32xf32, #tpu.memory_space<vmem>>, vector<1x1x32xf32>
    %537 = vector.shape_cast %536 : vector<1x1x32xf32> to vector<1x32xf32>
    %cst_237 = arith.constant dense<0.000000e+00> : vector<8xf32>
    %538 = vector.multi_reduction <add>, %533, %cst_237 [1] : vector<8x32xf32> to vector<8xf32>
    %539 = vector.shape_cast %538 : vector<8xf32> to vector<8x1xf32>
    %cst_238 = arith.constant 3.200000e+01 : f32
    %540 = vector.broadcast %cst_238 : f32 to vector<8x1xf32>
    %541 = arith.divf %539, %540 : vector<8x1xf32>
    %542 = vector.broadcast %541 : vector<8x1xf32> to vector<8x32xf32>
    %543 = arith.subf %533, %542 : vector<8x32xf32>
    %544 = arith.mulf %543, %543 : vector<8x32xf32>
    %cst_239 = arith.constant dense<0.000000e+00> : vector<8xf32>
    %545 = vector.multi_reduction <add>, %544, %cst_239 [1] : vector<8x32xf32> to vector<8xf32>
    %546 = vector.shape_cast %545 : vector<8xf32> to vector<8x1xf32>
    %cst_240 = arith.constant 3.200000e+01 : f32
    %547 = vector.broadcast %cst_240 : f32 to vector<8x1xf32>
    %548 = arith.divf %546, %547 : vector<8x1xf32>
    %549 = vector.broadcast %541 : vector<8x1xf32> to vector<8x32xf32>
    %550 = arith.subf %533, %549 : vector<8x32xf32>
    %cst_241 = arith.constant 9.99999974E-6 : f32
    %551 = vector.broadcast %cst_241 : f32 to vector<8x1xf32>
    %552 = arith.addf %548, %551 : vector<8x1xf32>
    %553 = math.rsqrt %552 : vector<8x1xf32>
    %554 = vector.broadcast %553 : vector<8x1xf32> to vector<8x32xf32>
    %555 = arith.mulf %550, %554 : vector<8x32xf32>
    %556 = vector.broadcast %535 : vector<1x32xf32> to vector<8x32xf32>
    %557 = arith.mulf %555, %556 : vector<8x32xf32>
    %558 = vector.broadcast %537 : vector<1x32xf32> to vector<8x32xf32>
    %559 = arith.addf %557, %558 : vector<8x32xf32>
    %560 = arith.mulf %559, %559 : vector<8x32xf32>
    %cst_242 = arith.constant dense<0.000000e+00> : vector<8xf32>
    %561 = vector.multi_reduction <add>, %560, %cst_242 [1] : vector<8x32xf32> to vector<8xf32>
    %562 = vector.shape_cast %561 : vector<8xf32> to vector<8x1xf32>
    %563 = math.sqrt %562 : vector<8x1xf32>
    %cst_243 = arith.constant dense<0xFF800000> : vector<1xf32>
    %564 = vector.multi_reduction <maximumf>, %563, %cst_243 [0] : vector<8x1xf32> to vector<1xf32>
    %565 = vector.shape_cast %564 : vector<1xf32> to vector<1x1xf32>
    %566 = vector.broadcast %565 : vector<1x1xf32> to vector<8x1xf32>
    %567 = arith.subf %563, %566 : vector<8x1xf32>
    %568 = math.exp %567 : vector<8x1xf32>
    %cst_244 = arith.constant dense<0.000000e+00> : vector<1xf32>
    %569 = vector.multi_reduction <add>, %568, %cst_244 [0] : vector<8x1xf32> to vector<1xf32>
    %570 = vector.shape_cast %569 : vector<1xf32> to vector<1x1xf32>
    %571 = vector.broadcast %570 : vector<1x1xf32> to vector<8x1xf32>
    %572 = arith.divf %568, %571 : vector<8x1xf32>
    %573 = vector.broadcast %572 : vector<8x1xf32> to vector<8x32xf32>
    %574 = arith.mulf %559, %573 : vector<8x32xf32>
    %cst_245 = arith.constant dense<0.000000e+00> : vector<32xf32>
    %575 = vector.multi_reduction <add>, %574, %cst_245 [0] : vector<8x32xf32> to vector<32xf32>
    %576 = vector.shape_cast %575 : vector<32xf32> to vector<1x32xf32>
    %c0_246 = arith.constant 0 : index
    %c0_247 = arith.constant 0 : index
    %577 = vector.load %arg28[%c0_246, %c0_247] : memref<32x32xf32, #tpu.memory_space<vmem>>, vector<32x32xf32>
    %cst_248 = arith.constant dense<0.000000e+00> : vector<1x32xf32>
    %578 = tpu.matmul %576, %577, %cst_248 {dimension_numbers = #tpu.dot_dimension_numbers<[1], [0], [0], [1], [0, 0, 1, 1], [], []>} : vector<1x32xf32>, vector<32x32xf32>, vector<1x32xf32> -> vector<1x32xf32>
    %c0_249 = arith.constant 0 : index
    %c0_250 = arith.constant 0 : index
    %579 = vector.load %arg29[%c0_249, %c0_250] : memref<1x32xf32, #tpu.memory_space<vmem>>, vector<1x32xf32>
    %580 = arith.addf %578, %579 : vector<1x32xf32>
    %cst_251 = arith.constant 0.000000e+00 : f32
    %581 = vector.broadcast %cst_251 : f32 to vector<1x32xf32>
    %582 = arith.maximumf %580, %581 : vector<1x32xf32>
    %c0_252 = arith.constant 0 : index
    %c0_253 = arith.constant 0 : index
    %583 = vector.load %arg30[%c0_252, %c0_253] : memref<32x64xf32, #tpu.memory_space<vmem>>, vector<32x64xf32>
    %cst_254 = arith.constant dense<0.000000e+00> : vector<1x64xf32>
    %584 = tpu.matmul %582, %583, %cst_254 {dimension_numbers = #tpu.dot_dimension_numbers<[1], [0], [0], [1], [0, 0, 1, 1], [], []>} : vector<1x32xf32>, vector<32x64xf32>, vector<1x64xf32> -> vector<1x64xf32>
    %c0_255 = arith.constant 0 : index
    %c0_256 = arith.constant 0 : index
    %585 = vector.load %arg31[%c0_255, %c0_256] : memref<1x64xf32, #tpu.memory_space<vmem>>, vector<1x64xf32>
    %586 = arith.addf %584, %585 : vector<1x64xf32>
    %c0_257 = arith.constant 0 : index
    %c0_258 = arith.constant 0 : index
    %c0_259 = arith.constant 0 : index
    %587 = vector.load %arg33[%c0_257, %c0_258, %c0_259] : memref<1x1x64xf32, #tpu.memory_space<vmem>>, vector<1x1x64xf32>
    %588 = vector.shape_cast %587 : vector<1x1x64xf32> to vector<1x64xf32>
    %589 = vector.shape_cast %586 : vector<1x64xf32> to vector<1x1x64xf32>
    tpu.vector_store %arg33[%c0_257, %c0_258, %c0_259], %589 {strides = array<i32>} : memref<1x1x64xf32, #tpu.memory_space<vmem>>, vector<1x1x64xf32>,
    %c0_260 = arith.constant 0 : index
    %c0_261 = arith.constant 0 : index
    %c0_262 = arith.constant 0 : index
    %590 = vector.load %arg33[%c0_260, %c0_261, %c0_262] : memref<1x1x64xf32, #tpu.memory_space<vmem>>, vector<1x1x32xf32>
    %591 = vector.shape_cast %590 : vector<1x1x32xf32> to vector<1x32xf32>
    %592 = vector.shape_cast %576 : vector<1x32xf32> to vector<1x1x32xf32>
    tpu.vector_store %arg33[%c0_260, %c0_261, %c0_262], %592 {strides = array<i32>} : memref<1x1x64xf32, #tpu.memory_space<vmem>>, vector<1x1x32xf32>,
    return
  }
  func.func @transform_0(%arg0: i32, %arg1: memref<2xi32, #tpu.memory_space<smem>>, %arg2: memref<2xi32, #tpu.memory_space<smem>>) -> (i32, i32, i32) {
    %c0_i32 = arith.constant 0 : i32
    %c0_i32_0 = arith.constant 0 : i32
    %c0_i32_1 = arith.constant 0 : i32
    return %arg0, %c0_i32, %c0_i32_0 : i32, i32, i32
  }
  func.func @transform_1(%arg0: i32, %arg1: memref<2xi32, #tpu.memory_space<smem>>, %arg2: memref<2xi32, #tpu.memory_space<smem>>) -> (i32, i32, i32) {
    %c0_i32 = arith.constant 0 : i32
    %c0_i32_0 = arith.constant 0 : i32
    %c0_i32_1 = arith.constant 0 : i32
    return %arg0, %c0_i32, %c0_i32_0 : i32, i32, i32
  }
  func.func @transform_2(%arg0: i32, %arg1: memref<2xi32, #tpu.memory_space<smem>>, %arg2: memref<2xi32, #tpu.memory_space<smem>>) -> (i32, i32) {
    %c0_i32 = arith.constant 0 : i32
    %c0_i32_0 = arith.constant 0 : i32
    %c0_i32_1 = arith.constant 0 : i32
    return %c0_i32, %c0_i32_0 : i32, i32
  }
  func.func @transform_3(%arg0: i32, %arg1: memref<2xi32, #tpu.memory_space<smem>>, %arg2: memref<2xi32, #tpu.memory_space<smem>>) -> (i32, i32) {
    %c0_i32 = arith.constant 0 : i32
    %c0_i32_0 = arith.constant 0 : i32
    %c0_i32_1 = arith.constant 0 : i32
    return %c0_i32, %c0_i32_0 : i32, i32
  }
  func.func @transform_4(%arg0: i32, %arg1: memref<2xi32, #tpu.memory_space<smem>>, %arg2: memref<2xi32, #tpu.memory_space<smem>>) -> (i32, i32, i32) {
    %c0_i32 = arith.constant 0 : i32
    %c0_i32_0 = arith.constant 0 : i32
    %c0_i32_1 = arith.constant 0 : i32
    %c0_i32_2 = arith.constant 0 : i32
    return %c0_i32, %c0_i32_0, %c0_i32_1 : i32, i32, i32
  }
  func.func @transform_5(%arg0: i32, %arg1: memref<2xi32, #tpu.memory_space<smem>>, %arg2: memref<2xi32, #tpu.memory_space<smem>>) -> (i32, i32, i32) {
    %c0_i32 = arith.constant 0 : i32
    %c0_i32_0 = arith.constant 0 : i32
    %c0_i32_1 = arith.constant 0 : i32
    %c0_i32_2 = arith.constant 0 : i32
    return %c0_i32, %c0_i32_0, %c0_i32_1 : i32, i32, i32
  }
  func.func @transform_6(%arg0: i32, %arg1: memref<2xi32, #tpu.memory_space<smem>>, %arg2: memref<2xi32, #tpu.memory_space<smem>>) -> (i32, i32, i32) {
    %c0_i32 = arith.constant 0 : i32
    %c0_i32_0 = arith.constant 0 : i32
    %c0_i32_1 = arith.constant 0 : i32
    %c0_i32_2 = arith.constant 0 : i32
    return %c0_i32, %c0_i32_0, %c0_i32_1 : i32, i32, i32
  }
  func.func @transform_7(%arg0: i32, %arg1: memref<2xi32, #tpu.memory_space<smem>>, %arg2: memref<2xi32, #tpu.memory_space<smem>>) -> (i32, i32) {
    %c0_i32 = arith.constant 0 : i32
    %c0_i32_0 = arith.constant 0 : i32
    %c0_i32_1 = arith.constant 0 : i32
    return %c0_i32, %c0_i32_0 : i32, i32
  }
  func.func @transform_8(%arg0: i32, %arg1: memref<2xi32, #tpu.memory_space<smem>>, %arg2: memref<2xi32, #tpu.memory_space<smem>>) -> (i32, i32) {
    %c0_i32 = arith.constant 0 : i32
    %c0_i32_0 = arith.constant 0 : i32
    %c0_i32_1 = arith.constant 0 : i32
    return %c0_i32, %c0_i32_0 : i32, i32
  }
  func.func @transform_9(%arg0: i32, %arg1: memref<2xi32, #tpu.memory_space<smem>>, %arg2: memref<2xi32, #tpu.memory_space<smem>>) -> (i32, i32) {
    %c0_i32 = arith.constant 0 : i32
    %c0_i32_0 = arith.constant 0 : i32
    %c0_i32_1 = arith.constant 0 : i32
    return %c0_i32, %c0_i32_0 : i32, i32
  }
  func.func @transform_10(%arg0: i32, %arg1: memref<2xi32, #tpu.memory_space<smem>>, %arg2: memref<2xi32, #tpu.memory_space<smem>>) -> (i32, i32) {
    %c0_i32 = arith.constant 0 : i32
    %c0_i32_0 = arith.constant 0 : i32
    %c0_i32_1 = arith.constant 0 : i32
    return %c0_i32, %c0_i32_0 : i32, i32
  }
  func.func @transform_11(%arg0: i32, %arg1: memref<2xi32, #tpu.memory_space<smem>>, %arg2: memref<2xi32, #tpu.memory_space<smem>>) -> (i32, i32) {
    %c0_i32 = arith.constant 0 : i32
    %c0_i32_0 = arith.constant 0 : i32
    %c0_i32_1 = arith.constant 0 : i32
    return %c0_i32, %c0_i32_0 : i32, i32
  }
  func.func @transform_12(%arg0: i32, %arg1: memref<2xi32, #tpu.memory_space<smem>>, %arg2: memref<2xi32, #tpu.memory_space<smem>>) -> (i32, i32) {
    %c0_i32 = arith.constant 0 : i32
    %c0_i32_0 = arith.constant 0 : i32
    %c0_i32_1 = arith.constant 0 : i32
    return %c0_i32, %c0_i32_0 : i32, i32
  }
  func.func @transform_13(%arg0: i32, %arg1: memref<2xi32, #tpu.memory_space<smem>>, %arg2: memref<2xi32, #tpu.memory_space<smem>>) -> (i32, i32) {
    %c0_i32 = arith.constant 0 : i32
    %c0_i32_0 = arith.constant 0 : i32
    %c0_i32_1 = arith.constant 0 : i32
    return %c0_i32, %c0_i32_0 : i32, i32
  }
  func.func @transform_14(%arg0: i32, %arg1: memref<2xi32, #tpu.memory_space<smem>>, %arg2: memref<2xi32, #tpu.memory_space<smem>>) -> (i32, i32) {
    %c0_i32 = arith.constant 0 : i32
    %c0_i32_0 = arith.constant 0 : i32
    %c0_i32_1 = arith.constant 0 : i32
    return %c0_i32, %c0_i32_0 : i32, i32
  }
  func.func @transform_15(%arg0: i32, %arg1: memref<2xi32, #tpu.memory_space<smem>>, %arg2: memref<2xi32, #tpu.memory_space<smem>>) -> (i32, i32) {
    %c0_i32 = arith.constant 0 : i32
    %c0_i32_0 = arith.constant 0 : i32
    %c0_i32_1 = arith.constant 0 : i32
    return %c0_i32, %c0_i32_0 : i32, i32
  }
  func.func @transform_16(%arg0: i32, %arg1: memref<2xi32, #tpu.memory_space<smem>>, %arg2: memref<2xi32, #tpu.memory_space<smem>>) -> (i32, i32) {
    %c0_i32 = arith.constant 0 : i32
    %c0_i32_0 = arith.constant 0 : i32
    %c0_i32_1 = arith.constant 0 : i32
    return %c0_i32, %c0_i32_0 : i32, i32
  }
  func.func @transform_17(%arg0: i32, %arg1: memref<2xi32, #tpu.memory_space<smem>>, %arg2: memref<2xi32, #tpu.memory_space<smem>>) -> (i32, i32) {
    %c0_i32 = arith.constant 0 : i32
    %c0_i32_0 = arith.constant 0 : i32
    %c0_i32_1 = arith.constant 0 : i32
    return %c0_i32, %c0_i32_0 : i32, i32
  }
  func.func @transform_18(%arg0: i32, %arg1: memref<2xi32, #tpu.memory_space<smem>>, %arg2: memref<2xi32, #tpu.memory_space<smem>>) -> (i32, i32) {
    %c0_i32 = arith.constant 0 : i32
    %c0_i32_0 = arith.constant 0 : i32
    %c0_i32_1 = arith.constant 0 : i32
    return %c0_i32, %c0_i32_0 : i32, i32
  }
  func.func @transform_19(%arg0: i32, %arg1: memref<2xi32, #tpu.memory_space<smem>>, %arg2: memref<2xi32, #tpu.memory_space<smem>>) -> (i32, i32, i32) {
    %c0_i32 = arith.constant 0 : i32
    %c0_i32_0 = arith.constant 0 : i32
    %c0_i32_1 = arith.constant 0 : i32
    %c0_i32_2 = arith.constant 0 : i32
    return %c0_i32, %c0_i32_0, %c0_i32_1 : i32, i32, i32
  }
  func.func @transform_20(%arg0: i32, %arg1: memref<2xi32, #tpu.memory_space<smem>>, %arg2: memref<2xi32, #tpu.memory_space<smem>>) -> (i32, i32, i32) {
    %c0_i32 = arith.constant 0 : i32
    %c0_i32_0 = arith.constant 0 : i32
    %c0_i32_1 = arith.constant 0 : i32
    %c0_i32_2 = arith.constant 0 : i32
    return %c0_i32, %c0_i32_0, %c0_i32_1 : i32, i32, i32
  }
  func.func @transform_21(%arg0: i32, %arg1: memref<2xi32, #tpu.memory_space<smem>>, %arg2: memref<2xi32, #tpu.memory_space<smem>>) -> (i32, i32) {
    %c0_i32 = arith.constant 0 : i32
    %c0_i32_0 = arith.constant 0 : i32
    %c0_i32_1 = arith.constant 0 : i32
    return %c0_i32, %c0_i32_0 : i32, i32
  }
  func.func @transform_22(%arg0: i32, %arg1: memref<2xi32, #tpu.memory_space<smem>>, %arg2: memref<2xi32, #tpu.memory_space<smem>>) -> (i32, i32) {
    %c0_i32 = arith.constant 0 : i32
    %c0_i32_0 = arith.constant 0 : i32
    %c0_i32_1 = arith.constant 0 : i32
    return %c0_i32, %c0_i32_0 : i32, i32
  }
  func.func @transform_23(%arg0: i32, %arg1: memref<2xi32, #tpu.memory_space<smem>>, %arg2: memref<2xi32, #tpu.memory_space<smem>>) -> (i32, i32) {
    %c0_i32 = arith.constant 0 : i32
    %c0_i32_0 = arith.constant 0 : i32
    %c0_i32_1 = arith.constant 0 : i32
    return %c0_i32, %c0_i32_0 : i32, i32
  }
  func.func @transform_24(%arg0: i32, %arg1: memref<2xi32, #tpu.memory_space<smem>>, %arg2: memref<2xi32, #tpu.memory_space<smem>>) -> (i32, i32) {
    %c0_i32 = arith.constant 0 : i32
    %c0_i32_0 = arith.constant 0 : i32
    %c0_i32_1 = arith.constant 0 : i32
    return %c0_i32, %c0_i32_0 : i32, i32
  }
  func.func @transform_25(%arg0: i32, %arg1: memref<2xi32, #tpu.memory_space<smem>>, %arg2: memref<2xi32, #tpu.memory_space<smem>>) -> (i32, i32) {
    %c0_i32 = arith.constant 0 : i32
    %c0_i32_0 = arith.constant 0 : i32
    %c0_i32_1 = arith.constant 0 : i32
    return %c0_i32, %c0_i32_0 : i32, i32
  }
  func.func @transform_26(%arg0: i32, %arg1: memref<2xi32, #tpu.memory_space<smem>>, %arg2: memref<2xi32, #tpu.memory_space<smem>>) -> (i32, i32) {
    %c0_i32 = arith.constant 0 : i32
    %c0_i32_0 = arith.constant 0 : i32
    %c0_i32_1 = arith.constant 0 : i32
    return %c0_i32, %c0_i32_0 : i32, i32
  }
  func.func @transform_27(%arg0: i32, %arg1: memref<2xi32, #tpu.memory_space<smem>>, %arg2: memref<2xi32, #tpu.memory_space<smem>>) -> (i32, i32) {
    %c0_i32 = arith.constant 0 : i32
    %c0_i32_0 = arith.constant 0 : i32
    %c0_i32_1 = arith.constant 0 : i32
    return %c0_i32, %c0_i32_0 : i32, i32
  }
  func.func @transform_28(%arg0: i32, %arg1: memref<2xi32, #tpu.memory_space<smem>>, %arg2: memref<2xi32, #tpu.memory_space<smem>>) -> (i32, i32) {
    %c0_i32 = arith.constant 0 : i32
    %c0_i32_0 = arith.constant 0 : i32
    %c0_i32_1 = arith.constant 0 : i32
    return %c0_i32, %c0_i32_0 : i32, i32
  }
  func.func @transform_29(%arg0: i32, %arg1: memref<2xi32, #tpu.memory_space<smem>>, %arg2: memref<2xi32, #tpu.memory_space<smem>>) -> (i32, i32, i32) {
    %c0_i32 = arith.constant 0 : i32
    %c0_i32_0 = arith.constant 0 : i32
    %c0_i32_1 = arith.constant 0 : i32
    return %arg0, %c0_i32, %c0_i32_0 : i32, i32, i32
  }
  func.func @transform_30(%arg0: i32, %arg1: memref<2xi32, #tpu.memory_space<smem>>, %arg2: memref<2xi32, #tpu.memory_space<smem>>) -> (i32, i32, i32) {
    %c0_i32 = arith.constant 0 : i32
    %c0_i32_0 = arith.constant 0 : i32
    %c0_i32_1 = arith.constant 0 : i32
    return %arg0, %c0_i32, %c0_i32_0 : i32, i32, i32
  }
}

</mosaic_0001>

<llo_original>
// kernel: predictor_forward.1
$region0: #{predictor_forward.1}
  #allocation0 [shape = 'u32[]', space=smem, size = 0x4, offset = 0x4, fixed_abs, tag = 'smem constant byte address 0x4 - core index']
  #allocation1 [shape = 'u32[72,128]{1,0:T(1,128)}', space=vmem, size = 0x9000, scoped, tag = 'internal scratch']
  #allocation2 [shape = 's32[1]{0}', space=sflag, size = 0x4, scoped, tag = 'scoped memory for predictor_forward.1']
  #allocation3 [shape = 'u8[512]{0}', space=smem, size = 0x200, scoped, tag = 'prefetched SMEM operand 0']
  #allocation4 [shape = 'u8[512]{0}', space=smem, size = 0x200, scoped, tag = 'prefetched SMEM operand 1']
  %s0 = inlined_call_operand.smem [shape: u32[33], index: -1, kind: input, shape index: {}]
  %s1 = sld [smem:[%s0]]
  %s2 = scalar_lea.smem %s0, 1
  %s3 = sld [smem:[%s2]]
  %s4 = scalar_lea.smem %s0, 2
  %s5 = sld [smem:[%s4]]
  %s6 = scalar_lea.smem %s0, 3
  %s7 = sld [smem:[%s6]]
  %s8 = scalar_lea.smem %s0, 4
  %s9 = sld [smem:[%s8]]
  %s10 = scalar_lea.smem %s0, 5
  %s11 = sld [smem:[%s10]]
  %s12 = scalar_lea.smem %s0, 6
  %s13 = sld [smem:[%s12]]
  %s14 = scalar_lea.smem %s0, 7
  %s15 = sld [smem:[%s14]]
  %s16 = scalar_lea.smem %s0, 8
  %s17 = sld [smem:[%s16]]
  %s18 = scalar_lea.smem %s0, 9
  %s19 = sld [smem:[%s18]]
  %s20 = scalar_lea.smem %s0, 10
  %s21 = sld [smem:[%s20]]
  %s22 = scalar_lea.smem %s0, 11
  %s23 = sld [smem:[%s22]]
  %s24 = scalar_lea.smem %s0, 12
  %s25 = sld [smem:[%s24]]
  %s26 = scalar_lea.smem %s0, 13
  %s27 = sld [smem:[%s26]]
  %s28 = scalar_lea.smem %s0, 14
  %s29 = sld [smem:[%s28]]
  %s30 = scalar_lea.smem %s0, 15
  %s31 = sld [smem:[%s30]]
  %s32 = scalar_lea.smem %s0, 16
  %s33 = sld [smem:[%s32]]
  %s34 = scalar_lea.smem %s0, 17
  %s35 = sld [smem:[%s34]]
  %s36 = scalar_lea.smem %s0, 18
  %s37 = sld [smem:[%s36]]
  %s38 = scalar_lea.smem %s0, 19
  %s39 = sld [smem:[%s38]]
  %s40 = scalar_lea.smem %s0, 20
  %s41 = sld [smem:[%s40]]
  %s42 = scalar_lea.smem %s0, 21
  %s43 = sld [smem:[%s42]]
  %s44 = scalar_lea.smem %s0, 22
  %s45 = sld [smem:[%s44]]
  %s46 = scalar_lea.smem %s0, 23
  %s47 = sld [smem:[%s46]]
  %s48 = scalar_lea.smem %s0, 24
  %s49 = sld [smem:[%s48]]
  %s50 = scalar_lea.smem %s0, 25
  %s51 = sld [smem:[%s50]]
  %s52 = scalar_lea.smem %s0, 26
  %s53 = sld [smem:[%s52]]
  %s54 = scalar_lea.smem %s0, 27
  %s55 = sld [smem:[%s54]]
  %s56 = scalar_lea.smem %s0, 28
  %s57 = sld [smem:[%s56]]
  %s58 = scalar_lea.smem %s0, 29
  %s59 = sld [smem:[%s58]]
  %s60 = scalar_lea.smem %s0, 30
  %s61 = sld [smem:[%s60]]
  %s62 = scalar_lea.smem %s0, 31
  %s63 = sld [smem:[%s62]]
  %s64 = scalar_lea.smem %s0, 32
  %s65 = sld [smem:[%s64]]
  %66 = xla_tuple %s63, %s65
  %s67 = sld [smem:[#allocation0]]
  $region241: #{predictor_forward.1} parent=0
    _
  %s69 = ssub.s32 1, %s67
  %s70 = scalar_select 0, %s69, %s67
  %s72 = sshll.u32 %s1, 4
  %s73 = int_to_ptr.vmem [resolvable:$true] %s72
  %75 = dma.vmem_to_smem %s73, 16, [#allocation3], [#allocation2]
  %s77 = sshll.u32 %s3, 4
  %s78 = int_to_ptr.vmem [resolvable:$true] %s77
  %80 = dma.vmem_to_smem %s78, 16, [#allocation4], [#allocation2]
  %82 = dma.done [#allocation2], 32
  %83 = sfence
  $region1: #{predictor_forward.1} parent=0
    #allocation5 [shape = 'u8[98304]{0}', space=vmem, size = 0x18000, scoped, tag = 'input window, operand 6, single buffered']
    #allocation6 [shape = 's32[2]{0}', space=sflag, size = 0x8, scoped, tag = 'scoped memory for predictor_forward.1']
    #allocation7 [shape = 'u8[512]{0}', space=vmem, size = 0x400, scoped, tag = 'input window, operand 10, single buffered']
    #allocation8 [shape = 's32[1]{0}', space=sflag, size = 0x4, scoped, tag = 'scoped memory for predictor_forward.1']
    #allocation9 [shape = 'u8[16384]{0}', space=vmem, size = 0x4000, scoped, tag = 'input window, operand 11, single buffered']
    #allocation10 [shape = 'u8[512]{0}', space=vmem, size = 0x400, scoped, tag = 'input window, operand 12, single buffered']
    #allocation11 [shape = 's32[1]{0}', space=sflag, size = 0x4, scoped, tag = 'scoped memory for predictor_forward.1']
    #allocation12 [shape = 'u8[16384]{0}', space=vmem, size = 0x4000, scoped, tag = 'input window, operand 13, single buffered']
    #allocation13 [shape = 'u8[512]{0}', space=vmem, size = 0x400, scoped, tag = 'input window, operand 14, single buffered']
    #allocation14 [shape = 's32[1]{0}', space=sflag, size = 0x4, scoped, tag = 'scoped memory for predictor_forward.1']
    #allocation15 [shape = 'u8[16384]{0}', space=vmem, size = 0x4000, scoped, tag = 'input window, operand 15, single buffered']
    #allocation16 [shape = 'u8[512]{0}', space=vmem, size = 0x400, scoped, tag = 'input window, operand 16, single buffered']
    #allocation17 [shape = 's32[1]{0}', space=sflag, size = 0x4, scoped, tag = 'scoped memory for predictor_forward.1']
    #allocation18 [shape = 'u8[16384]{0}', space=vmem, size = 0x4000, scoped, tag = 'input window, operand 17, single buffered']
    #allocation19 [shape = 'u8[512]{0}', space=vmem, size = 0x400, scoped, tag = 'input window, operand 18, single buffered']
    #allocation20 [shape = 's32[1]{0}', space=sflag, size = 0x4, scoped, tag = 'scoped memory for predictor_forward.1']
    #allocation21 [shape = 'u8[16384]{0}', space=vmem, size = 0x4000, scoped, tag = 'input window, operand 19, single buffered']
    #allocation22 [shape = 'u8[512]{0}', space=vmem, size = 0x400, scoped, tag = 'input window, operand 20, single buffered']
    #allocation23 [shape = 's32[1]{0}', space=sflag, size = 0x4, scoped, tag = 'scoped memory for predictor_forward.1']
    #allocation24 [shape = 'u8[1536]{0}', space=vmem, size = 0x800, scoped, tag = 'input window, operand 21, single buffered']
    #allocation25 [shape = 'u8[1536]{0}', space=vmem, size = 0x800, scoped, tag = 'input window, operand 22, single buffered']
    #allocation26 [shape = 's32[1]{0}', space=sflag, size = 0x4, scoped, tag = 'scoped memory for predictor_forward.1']
    #allocation27 [shape = 'u8[16384]{0}', space=vmem, size = 0x4000, scoped, tag = 'input window, operand 23, single buffered']
    #allocation28 [shape = 'u8[512]{0}', space=vmem, size = 0x400, scoped, tag = 'input window, operand 24, single buffered']
    #allocation29 [shape = 's32[1]{0}', space=sflag, size = 0x4, scoped, tag = 'scoped memory for predictor_forward.1']
    #allocation30 [shape = 'u8[512]{0}', space=vmem, size = 0x400, scoped, tag = 'input window, operand 26, single buffered']
    #allocation31 [shape = 'u8[16384]{0}', space=vmem, size = 0x4000, scoped, tag = 'input window, operand 27, single buffered']
    #allocation32 [shape = 's32[1]{0}', space=sflag, size = 0x4, scoped, tag = 'scoped memory for predictor_forward.1']
    #allocation33 [shape = 'u8[512]{0}', space=vmem, size = 0x400, scoped, tag = 'input window, operand 28, single buffered']
    #allocation34 [shape = 'u8[16384]{0}', space=vmem, size = 0x4000, scoped, tag = 'input window, operand 29, single buffered']
    #allocation35 [shape = 's32[1]{0}', space=sflag, size = 0x4, scoped, tag = 'scoped memory for predictor_forward.1']
    #allocation36 [shape = 'u8[512]{0}', space=vmem, size = 0x400, scoped, tag = 'input window, operand 30, single buffered']
    %84 = vsyncpa [#allocation6], 0
    %85 = vsyncpa [#allocation8], 0
    %86 = vsyncpa [#allocation11], 0
    %87 = vsyncpa [#allocation14], 0
    %88 = vsyncpa [#allocation17], 0
    %89 = vsyncpa [#allocation20], 0
    %90 = vsyncpa [#allocation23], 0
    %91 = vsyncpa [#allocation26], 0
    %92 = vsyncpa [#allocation29], 0
    %93 = vsyncpa [#allocation32], 0
    %94 = vsyncpa [#allocation35], 0
    loop: start=0, step=1, limit=4
    $region2: #{predictor_forward.1} parent=1 // loop_pre_header
      _
    $region3: #{predictor_forward.1} parent=1 // loop_header
      %s96 = sphi 0, %s100
      %p97 = scmp.ge.s32.totalorder %s96, 4
      %s106 = sphi 0, %s108
      %s109 = sphi 0, %s106
      %s110 = sphi 0, %s109
      %s126 = sphi 0, %s110
      %s132 = sphi 0, %s134
      %s135 = sphi 0, %s132
      %s136 = sphi 0, %s135
      %s152 = sphi 0, %s136
      %s156 = sphi 0, %s156
      %s158 = sphi 0, %s156
      %s159 = sphi 0, %s158
      %s173 = sphi 0, %s159
      %s177 = sphi 0, %s177
      %s179 = sphi 0, %s177
      %s180 = sphi 0, %s179
      %s194 = sphi 0, %s180
      %s198 = sphi 0, %s198
      %s200 = sphi 0, %s198
      %s201 = sphi 0, %s200
      %s215 = sphi 0, %s201
      %s219 = sphi 0, %s219
      %s221 = sphi 0, %s219
      %s222 = sphi 0, %s221
      %s236 = sphi 0, %s222
      %s240 = sphi 0, %s240
      %s242 = sphi 0, %s240
      %s243 = sphi 0, %s242
      %s257 = sphi 0, %s243
      %s261 = sphi 0, %s261
      %s263 = sphi 0, %s261
      %s264 = sphi 0, %s263
      %s278 = sphi 0, %s264
      %s282 = sphi 0, %s282
      %s284 = sphi 0, %s282
      %s285 = sphi 0, %s284
      %s299 = sphi 0, %s285
      %s303 = sphi 0, %s303
      %s305 = sphi 0, %s303
      %s306 = sphi 0, %s305
      %s320 = sphi 0, %s306
      %s324 = sphi 0, %s324
      %s326 = sphi 0, %s324
      %s327 = sphi 0, %s326
      %s341 = sphi 0, %s327
      %s345 = sphi 0, %s345
      %s347 = sphi 0, %s345
      %s348 = sphi 0, %s347
      %s362 = sphi 0, %s348
      %s366 = sphi 0, %s366
      %s368 = sphi 0, %s366
      %s369 = sphi 0, %s368
      %s383 = sphi 0, %s369
      %s387 = sphi 0, %s387
      %s389 = sphi 0, %s387
      %s390 = sphi 0, %s389
      %s404 = sphi 0, %s390
      %s408 = sphi 0, %s408
      %s410 = sphi 0, %s408
      %s411 = sphi 0, %s410
      %s425 = sphi 0, %s411
      %s429 = sphi 0, %s429
      %s431 = sphi 0, %s429
      %s432 = sphi 0, %s431
      %s446 = sphi 0, %s432
      %s450 = sphi 0, %s450
      %s452 = sphi 0, %s450
      %s453 = sphi 0, %s452
      %s467 = sphi 0, %s453
      %s471 = sphi 0, %s471
      %s473 = sphi 0, %s471
      %s474 = sphi 0, %s473
      %s488 = sphi 0, %s474
      %s492 = sphi 0, %s492
      %s494 = sphi 0, %s492
      %s495 = sphi 0, %s494
      %s509 = sphi 0, %s495
      %s513 = sphi 0, %s513
      %s515 = sphi 0, %s513
      %s516 = sphi 0, %s515
      %s530 = sphi 0, %s516
      %s534 = sphi 0, %s534
      %s536 = sphi 0, %s534
      %s537 = sphi 0, %s536
      %s551 = sphi 0, %s537
      %s555 = sphi 0, %s555
      %s557 = sphi 0, %s555
      %s558 = sphi 0, %s557
      %s572 = sphi 0, %s558
      %s576 = sphi 0, %s576
      %s578 = sphi 0, %s576
      %s579 = sphi 0, %s578
      %s593 = sphi 0, %s579
      %s597 = sphi 0, %s597
      %s599 = sphi 0, %s597
      %s600 = sphi 0, %s599
      %s614 = sphi 0, %s600
      %s618 = sphi 0, %s618
      %s620 = sphi 0, %s618
      %s621 = sphi 0, %s620
      %s635 = sphi 0, %s621
      %s639 = sphi 0, %s639
      %s641 = sphi 0, %s639
      %s642 = sphi 0, %s641
      %s656 = sphi 0, %s642
      %s660 = sphi 0, %s660
      %s662 = sphi 0, %s660
      %s663 = sphi 0, %s662
      %s677 = sphi 0, %s663
      %s681 = sphi 0, %s681
      %s683 = sphi 0, %s681
      %s684 = sphi 0, %s683
      %s698 = sphi 0, %s684
      %s702 = sphi 0, %s702
      %s704 = sphi 0, %s702
      %s705 = sphi 0, %s704
      %s719 = sphi 0, %s705
      %s725 = sphi 0, %s727
      %s728 = sphi 0, %s725
      %s729 = sphi 0, %s728
      %s745 = sphi 0, %s729
      %s751 = sphi 0, %s753
      %s754 = sphi 0, %s751
      %s755 = sphi 0, %s754
      %s771 = sphi 0, %s755
    $region4: #{predictor_forward.1} parent=1 // loop_header_branch
      %99 = sbr.rel (%p97) target = $region8
    $region5: #{predictor_forward.1} parent=1 // loop_body
      %s101 = ssub.s32 %s96, 1
      %s102 = ssub.s32 %s96, 2
      %s103 = sadd.s32 %s96, 1
      %s104 = ssub.s32 %s96, %s103
      %p105 = scmp.eq.s32.totalorder %s104, 0
      %s107 = sadd.s32 %s106, 1
      %s108 = scalar_select %p105, %s106, %s107
      %p111 = pneg %p105
      %p112 = scmp.eq.s32.totalorder %s96, 1
      %p113 = por %p111, %p112
      %p114 = scmp.ne.s32.totalorder %s106, %s109
      %p115 = scmp.eq.s32.totalorder %s96, 0
      %p116 = por %p114, %p115
      %p117 = scmp.ne.s32.totalorder %s106, %s109
      %p118 = scmp.eq.s32.totalorder %s101, 1
      %p119 = por %p117, %p118
      %p120 = scmp.ne.s32.totalorder %s109, %s110
      %p121 = scmp.eq.s32.totalorder %s101, 0
      %p122 = por %p120, %p121
      %p123 = scmp.ne.s32.totalorder %s109, %s110
      %p124 = scmp.eq.s32.totalorder %s102, 1
      %p125 = por %p123, %p124
      %p127 = scmp.ne.s32.totalorder %s110, %s126
      %p128 = scmp.eq.s32.totalorder %s102, 0
      %p129 = por %p127, %p128
      %s130 = ssub.s32 %s96, %s103
      %p131 = scmp.eq.s32.totalorder %s130, 0
      %s133 = sadd.s32 %s132, 1
      %s134 = scalar_select %p131, %s132, %s133
      %p137 = pneg %p131
      %p138 = scmp.eq.s32.totalorder %s96, 1
      %p139 = por %p137, %p138
      %p140 = scmp.ne.s32.totalorder %s132, %s135
      %p141 = scmp.eq.s32.totalorder %s96, 0
      %p142 = por %p140, %p141
      %p143 = scmp.ne.s32.totalorder %s132, %s135
      %p144 = scmp.eq.s32.totalorder %s101, 1
      %p145 = por %p143, %p144
      %p146 = scmp.ne.s32.totalorder %s135, %s136
      %p147 = scmp.eq.s32.totalorder %s101, 0
      %p148 = por %p146, %p147
      %p149 = scmp.ne.s32.totalorder %s135, %s136
      %p150 = scmp.eq.s32.totalorder %s102, 1
      %p151 = por %p149, %p150
      %p153 = scmp.ne.s32.totalorder %s136, %s152
      %p154 = scmp.eq.s32.totalorder %s102, 0
      %p155 = por %p153, %p154
      %s157 = sadd.s32 %s156, 1
      %p160 = scmp.eq.s32.totalorder %s96, 1
      %p161 = scmp.ne.s32.totalorder %s156, %s158
      %p162 = scmp.eq.s32.totalorder %s96, 0
      %p163 = por %p161, %p162
      %p164 = scmp.ne.s32.totalorder %s156, %s158
      %p165 = scmp.eq.s32.totalorder %s101, 1
      %p166 = por %p164, %p165
      %p167 = scmp.ne.s32.totalorder %s158, %s159
      %p168 = scmp.eq.s32.totalorder %s101, 0
      %p169 = por %p167, %p168
      %p170 = scmp.ne.s32.totalorder %s158, %s159
      %p171 = scmp.eq.s32.totalorder %s102, 1
      %p172 = por %p170, %p171
      %p174 = scmp.ne.s32.totalorder %s159, %s173
      %p175 = scmp.eq.s32.totalorder %s102, 0
      %p176 = por %p174, %p175
      %s178 = sadd.s32 %s177, 1
      %p181 = scmp.eq.s32.totalorder %s96, 1
      %p182 = scmp.ne.s32.totalorder %s177, %s179
      %p183 = scmp.eq.s32.totalorder %s96, 0
      %p184 = por %p182, %p183
      %p185 = scmp.ne.s32.totalorder %s177, %s179
      %p186 = scmp.eq.s32.totalorder %s101, 1
      %p187 = por %p185, %p186
      %p188 = scmp.ne.s32.totalorder %s179, %s180
      %p189 = scmp.eq.s32.totalorder %s101, 0
      %p190 = por %p188, %p189
      %p191 = scmp.ne.s32.totalorder %s179, %s180
      %p192 = scmp.eq.s32.totalorder %s102, 1
      %p193 = por %p191, %p192
      %p195 = scmp.ne.s32.totalorder %s180, %s194
      %p196 = scmp.eq.s32.totalorder %s102, 0
      %p197 = por %p195, %p196
      %s199 = sadd.s32 %s198, 1
      %p202 = scmp.eq.s32.totalorder %s96, 1
      %p203 = scmp.ne.s32.totalorder %s198, %s200
      %p204 = scmp.eq.s32.totalorder %s96, 0
      %p205 = por %p203, %p204
      %p206 = scmp.ne.s32.totalorder %s198, %s200
      %p207 = scmp.eq.s32.totalorder %s101, 1
      %p208 = por %p206, %p207
      %p209 = scmp.ne.s32.totalorder %s200, %s201
      %p210 = scmp.eq.s32.totalorder %s101, 0
      %p211 = por %p209, %p210
      %p212 = scmp.ne.s32.totalorder %s200, %s201
      %p213 = scmp.eq.s32.totalorder %s102, 1
      %p214 = por %p212, %p213
      %p216 = scmp.ne.s32.totalorder %s201, %s215
      %p217 = scmp.eq.s32.totalorder %s102, 0
      %p218 = por %p216, %p217
      %s220 = sadd.s32 %s219, 1
      %p223 = scmp.eq.s32.totalorder %s96, 1
      %p224 = scmp.ne.s32.totalorder %s219, %s221
      %p225 = scmp.eq.s32.totalorder %s96, 0
      %p226 = por %p224, %p225
      %p227 = scmp.ne.s32.totalorder %s219, %s221
      %p228 = scmp.eq.s32.totalorder %s101, 1
      %p229 = por %p227, %p228
      %p230 = scmp.ne.s32.totalorder %s221, %s222
      %p231 = scmp.eq.s32.totalorder %s101, 0
      %p232 = por %p230, %p231
      %p233 = scmp.ne.s32.totalorder %s221, %s222
      %p234 = scmp.eq.s32.totalorder %s102, 1
      %p235 = por %p233, %p234
      %p237 = scmp.ne.s32.totalorder %s222, %s236
      %p238 = scmp.eq.s32.totalorder %s102, 0
      %p239 = por %p237, %p238
      %s241 = sadd.s32 %s240, 1
      %p244 = scmp.eq.s32.totalorder %s96, 1
      %p245 = scmp.ne.s32.totalorder %s240, %s242
      %p246 = scmp.eq.s32.totalorder %s96, 0
      %p247 = por %p245, %p246
      %p248 = scmp.ne.s32.totalorder %s240, %s242
      %p249 = scmp.eq.s32.totalorder %s101, 1
      %p250 = por %p248, %p249
      %p251 = scmp.ne.s32.totalorder %s242, %s243
      %p252 = scmp.eq.s32.totalorder %s101, 0
      %p253 = por %p251, %p252
      %p254 = scmp.ne.s32.totalorder %s242, %s243
      %p255 = scmp.eq.s32.totalorder %s102, 1
      %p256 = por %p254, %p255
      %p258 = scmp.ne.s32.totalorder %s243, %s257
      %p259 = scmp.eq.s32.totalorder %s102, 0
      %p260 = por %p258, %p259
      %s262 = sadd.s32 %s261, 1
      %p265 = scmp.eq.s32.totalorder %s96, 1
      %p266 = scmp.ne.s32.totalorder %s261, %s263
      %p267 = scmp.eq.s32.totalorder %s96, 0
      %p268 = por %p266, %p267
      %p269 = scmp.ne.s32.totalorder %s261, %s263
      %p270 = scmp.eq.s32.totalorder %s101, 1
      %p271 = por %p269, %p270
      %p272 = scmp.ne.s32.totalorder %s263, %s264
      %p273 = scmp.eq.s32.totalorder %s101, 0
      %p274 = por %p272, %p273
      %p275 = scmp.ne.s32.totalorder %s263, %s264
      %p276 = scmp.eq.s32.totalorder %s102, 1
      %p277 = por %p275, %p276
      %p279 = scmp.ne.s32.totalorder %s264, %s278
      %p280 = scmp.eq.s32.totalorder %s102, 0
      %p281 = por %p279, %p280
      %s283 = sadd.s32 %s282, 1
      %p286 = scmp.eq.s32.totalorder %s96, 1
      %p287 = scmp.ne.s32.totalorder %s282, %s284
      %p288 = scmp.eq.s32.totalorder %s96, 0
      %p289 = por %p287, %p288
      %p290 = scmp.ne.s32.totalorder %s282, %s284
      %p291 = scmp.eq.s32.totalorder %s101, 1
      %p292 = por %p290, %p291
      %p293 = scmp.ne.s32.totalorder %s284, %s285
      %p294 = scmp.eq.s32.totalorder %s101, 0
      %p295 = por %p293, %p294
      %p296 = scmp.ne.s32.totalorder %s284, %s285
      %p297 = scmp.eq.s32.totalorder %s102, 1
      %p298 = por %p296, %p297
      %p300 = scmp.ne.s32.totalorder %s285, %s299
      %p301 = scmp.eq.s32.totalorder %s102, 0
      %p302 = por %p300, %p301
      %s304 = sadd.s32 %s303, 1
      %p307 = scmp.eq.s32.totalorder %s96, 1
      %p308 = scmp.ne.s32.totalorder %s303, %s305
      %p309 = scmp.eq.s32.totalorder %s96, 0
      %p310 = por %p308, %p309
      %p311 = scmp.ne.s32.totalorder %s303, %s305
      %p312 = scmp.eq.s32.totalorder %s101, 1
      %p313 = por %p311, %p312
      %p314 = scmp.ne.s32.totalorder %s305, %s306
      %p315 = scmp.eq.s32.totalorder %s101, 0
      %p316 = por %p314, %p315
      %p317 = scmp.ne.s32.totalorder %s305, %s306
      %p318 = scmp.eq.s32.totalorder %s102, 1
      %p319 = por %p317, %p318
      %p321 = scmp.ne.s32.totalorder %s306, %s320
      %p322 = scmp.eq.s32.totalorder %s102, 0
      %p323 = por %p321, %p322
      %s325 = sadd.s32 %s324, 1
      %p328 = scmp.eq.s32.totalorder %s96, 1
      %p329 = scmp.ne.s32.totalorder %s324, %s326
      %p330 = scmp.eq.s32.totalorder %s96, 0
      %p331 = por %p329, %p330
      %p332 = scmp.ne.s32.totalorder %s324, %s326
      %p333 = scmp.eq.s32.totalorder %s101, 1
      %p334 = por %p332, %p333
      %p335 = scmp.ne.s32.totalorder %s326, %s327
      %p336 = scmp.eq.s32.totalorder %s101, 0
      %p337 = por %p335, %p336
      %p338 = scmp.ne.s32.totalorder %s326, %s327
      %p339 = scmp.eq.s32.totalorder %s102, 1
      %p340 = por %p338, %p339
      %p342 = scmp.ne.s32.totalorder %s327, %s341
      %p343 = scmp.eq.s32.totalorder %s102, 0
      %p344 = por %p342, %p343
      %s346 = sadd.s32 %s345, 1
      %p349 = scmp.eq.s32.totalorder %s96, 1
      %p350 = scmp.ne.s32.totalorder %s345, %s347
      %p351 = scmp.eq.s32.totalorder %s96, 0
      %p352 = por %p350, %p351
      %p353 = scmp.ne.s32.totalorder %s345, %s347
      %p354 = scmp.eq.s32.totalorder %s101, 1
      %p355 = por %p353, %p354
      %p356 = scmp.ne.s32.totalorder %s347, %s348
      %p357 = scmp.eq.s32.totalorder %s101, 0
      %p358 = por %p356, %p357
      %p359 = scmp.ne.s32.totalorder %s347, %s348
      %p360 = scmp.eq.s32.totalorder %s102, 1
      %p361 = por %p359, %p360
      %p363 = scmp.ne.s32.totalorder %s348, %s362
      %p364 = scmp.eq.s32.totalorder %s102, 0
      %p365 = por %p363, %p364
      %s367 = sadd.s32 %s366, 1
      %p370 = scmp.eq.s32.totalorder %s96, 1
      %p371 = scmp.ne.s32.totalorder %s366, %s368
      %p372 = scmp.eq.s32.totalorder %s96, 0
      %p373 = por %p371, %p372
      %p374 = scmp.ne.s32.totalorder %s366, %s368
      %p375 = scmp.eq.s32.totalorder %s101, 1
      %p376 = por %p374, %p375
      %p377 = scmp.ne.s32.totalorder %s368, %s369
      %p378 = scmp.eq.s32.totalorder %s101, 0
      %p379 = por %p377, %p378
      %p380 = scmp.ne.s32.totalorder %s368, %s369
      %p381 = scmp.eq.s32.totalorder %s102, 1
      %p382 = por %p380, %p381
      %p384 = scmp.ne.s32.totalorder %s369, %s383
      %p385 = scmp.eq.s32.totalorder %s102, 0
      %p386 = por %p384, %p385
      %s388 = sadd.s32 %s387, 1
      %p391 = scmp.eq.s32.totalorder %s96, 1
      %p392 = scmp.ne.s32.totalorder %s387, %s389
      %p393 = scmp.eq.s32.totalorder %s96, 0
      %p394 = por %p392, %p393
      %p395 = scmp.ne.s32.totalorder %s387, %s389
      %p396 = scmp.eq.s32.totalorder %s101, 1
      %p397 = por %p395, %p396
      %p398 = scmp.ne.s32.totalorder %s389, %s390
      %p399 = scmp.eq.s32.totalorder %s101, 0
      %p400 = por %p398, %p399
      %p401 = scmp.ne.s32.totalorder %s389, %s390
      %p402 = scmp.eq.s32.totalorder %s102, 1
      %p403 = por %p401, %p402
      %p405 = scmp.ne.s32.totalorder %s390, %s404
      %p406 = scmp.eq.s32.totalorder %s102, 0
      %p407 = por %p405, %p406
      %s409 = sadd.s32 %s408, 1
      %p412 = scmp.eq.s32.totalorder %s96, 1
      %p413 = scmp.ne.s32.totalorder %s408, %s410
      %p414 = scmp.eq.s32.totalorder %s96, 0
      %p415 = por %p413, %p414
      %p416 = scmp.ne.s32.totalorder %s408, %s410
      %p417 = scmp.eq.s32.totalorder %s101, 1
      %p418 = por %p416, %p417
      %p419 = scmp.ne.s32.totalorder %s410, %s411
      %p420 = scmp.eq.s32.totalorder %s101, 0
      %p421 = por %p419, %p420
      %p422 = scmp.ne.s32.totalorder %s410, %s411
      %p423 = scmp.eq.s32.totalorder %s102, 1
      %p424 = por %p422, %p423
      %p426 = scmp.ne.s32.totalorder %s411, %s425
      %p427 = scmp.eq.s32.totalorder %s102, 0
      %p428 = por %p426, %p427
      %s430 = sadd.s32 %s429, 1
      %p433 = scmp.eq.s32.totalorder %s96, 1
      %p434 = scmp.ne.s32.totalorder %s429, %s431
      %p435 = scmp.eq.s32.totalorder %s96, 0
      %p436 = por %p434, %p435
      %p437 = scmp.ne.s32.totalorder %s429, %s431
      %p438 = scmp.eq.s32.totalorder %s101, 1
      %p439 = por %p437, %p438
      %p440 = scmp.ne.s32.totalorder %s431, %s432
      %p441 = scmp.eq.s32.totalorder %s101, 0
      %p442 = por %p440, %p441
      %p443 = scmp.ne.s32.totalorder %s431, %s432
      %p444 = scmp.eq.s32.totalorder %s102, 1
      %p445 = por %p443, %p444
      %p447 = scmp.ne.s32.totalorder %s432, %s446
      %p448 = scmp.eq.s32.totalorder %s102, 0
      %p449 = por %p447, %p448
      %s451 = sadd.s32 %s450, 1
      %p454 = scmp.eq.s32.totalorder %s96, 1
      %p455 = scmp.ne.s32.totalorder %s450, %s452
      %p456 = scmp.eq.s32.totalorder %s96, 0
      %p457 = por %p455, %p456
      %p458 = scmp.ne.s32.totalorder %s450, %s452
      %p459 = scmp.eq.s32.totalorder %s101, 1
      %p460 = por %p458, %p459
      %p461 = scmp.ne.s32.totalorder %s452, %s453
      %p462 = scmp.eq.s32.totalorder %s101, 0
      %p463 = por %p461, %p462
      %p464 = scmp.ne.s32.totalorder %s452, %s453
      %p465 = scmp.eq.s32.totalorder %s102, 1
      %p466 = por %p464, %p465
      %p468 = scmp.ne.s32.totalorder %s453, %s467
      %p469 = scmp.eq.s32.totalorder %s102, 0
      %p470 = por %p468, %p469
      %s472 = sadd.s32 %s471, 1
      %p475 = scmp.eq.s32.totalorder %s96, 1
      %p476 = scmp.ne.s32.totalorder %s471, %s473
      %p477 = scmp.eq.s32.totalorder %s96, 0
      %p478 = por %p476, %p477
      %p479 = scmp.ne.s32.totalorder %s471, %s473
      %p480 = scmp.eq.s32.totalorder %s101, 1
      %p481 = por %p479, %p480
      %p482 = scmp.ne.s32.totalorder %s473, %s474
      %p483 = scmp.eq.s32.totalorder %s101, 0
      %p484 = por %p482, %p483
      %p485 = scmp.ne.s32.totalorder %s473, %s474
      %p486 = scmp.eq.s32.totalorder %s102, 1
      %p487 = por %p485, %p486
      %p489 = scmp.ne.s32.totalorder %s474, %s488
      %p490 = scmp.eq.s32.totalorder %s102, 0
      %p491 = por %p489, %p490
      %s493 = sadd.s32 %s492, 1
      %p496 = scmp.eq.s32.totalorder %s96, 1
      %p497 = scmp.ne.s32.totalorder %s492, %s494
      %p498 = scmp.eq.s32.totalorder %s96, 0
      %p499 = por %p497, %p498
      %p500 = scmp.ne.s32.totalorder %s492, %s494
      %p501 = scmp.eq.s32.totalorder %s101, 1
      %p502 = por %p500, %p501
      %p503 = scmp.ne.s32.totalorder %s494, %s495
      %p504 = scmp.eq.s32.totalorder %s101, 0
      %p505 = por %p503, %p504
      %p506 = scmp.ne.s32.totalorder %s494, %s495
      %p507 = scmp.eq.s32.totalorder %s102, 1
      %p508 = por %p506, %p507
      %p510 = scmp.ne.s32.totalorder %s495, %s509
      %p511 = scmp.eq.s32.totalorder %s102, 0
      %p512 = por %p510, %p511
      %s514 = sadd.s32 %s513, 1
      %p517 = scmp.eq.s32.totalorder %s96, 1
      %p518 = scmp.ne.s32.totalorder %s513, %s515
      %p519 = scmp.eq.s32.totalorder %s96, 0
      %p520 = por %p518, %p519
      %p521 = scmp.ne.s32.totalorder %s513, %s515
      %p522 = scmp.eq.s32.totalorder %s101, 1
      %p523 = por %p521, %p522
      %p524 = scmp.ne.s32.totalorder %s515, %s516
      %p525 = scmp.eq.s32.totalorder %s101, 0
      %p526 = por %p524, %p525
      %p527 = scmp.ne.s32.totalorder %s515, %s516
      %p528 = scmp.eq.s32.totalorder %s102, 1
      %p529 = por %p527, %p528
      %p531 = scmp.ne.s32.totalorder %s516, %s530
      %p532 = scmp.eq.s32.totalorder %s102, 0
      %p533 = por %p531, %p532
      %s535 = sadd.s32 %s534, 1
      %p538 = scmp.eq.s32.totalorder %s96, 1
      %p539 = scmp.ne.s32.totalorder %s534, %s536
      %p540 = scmp.eq.s32.totalorder %s96, 0
      %p541 = por %p539, %p540
      %p542 = scmp.ne.s32.totalorder %s534, %s536
      %p543 = scmp.eq.s32.totalorder %s101, 1
      %p544 = por %p542, %p543
      %p545 = scmp.ne.s32.totalorder %s536, %s537
      %p546 = scmp.eq.s32.totalorder %s101, 0
      %p547 = por %p545, %p546
      %p548 = scmp.ne.s32.totalorder %s536, %s537
      %p549 = scmp.eq.s32.totalorder %s102, 1
      %p550 = por %p548, %p549
      %p552 = scmp.ne.s32.totalorder %s537, %s551
      %p553 = scmp.eq.s32.totalorder %s102, 0
      %p554 = por %p552, %p553
      %s556 = sadd.s32 %s555, 1
      %p559 = scmp.eq.s32.totalorder %s96, 1
      %p560 = scmp.ne.s32.totalorder %s555, %s557
      %p561 = scmp.eq.s32.totalorder %s96, 0
      %p562 = por %p560, %p561
      %p563 = scmp.ne.s32.totalorder %s555, %s557
      %p564 = scmp.eq.s32.totalorder %s101, 1
      %p565 = por %p563, %p564
      %p566 = scmp.ne.s32.totalorder %s557, %s558
      %p567 = scmp.eq.s32.totalorder %s101, 0
      %p568 = por %p566, %p567
      %p569 = scmp.ne.s32.totalorder %s557, %s558
      %p570 = scmp.eq.s32.totalorder %s102, 1
      %p571 = por %p569, %p570
      %p573 = scmp.ne.s32.totalorder %s558, %s572
      %p574 = scmp.eq.s32.totalorder %s102, 0
      %p575 = por %p573, %p574
      %s577 = sadd.s32 %s576, 1
      %p580 = scmp.eq.s32.totalorder %s96, 1
      %p581 = scmp.ne.s32.totalorder %s576, %s578
      %p582 = scmp.eq.s32.totalorder %s96, 0
      %p583 = por %p581, %p582
      %p584 = scmp.ne.s32.totalorder %s576, %s578
      %p585 = scmp.eq.s32.totalorder %s101, 1
      %p586 = por %p584, %p585
      %p587 = scmp.ne.s32.totalorder %s578, %s579
      %p588 = scmp.eq.s32.totalorder %s101, 0
      %p589 = por %p587, %p588
      %p590 = scmp.ne.s32.totalorder %s578, %s579
      %p591 = scmp.eq.s32.totalorder %s102, 1
      %p592 = por %p590, %p591
      %p594 = scmp.ne.s32.totalorder %s579, %s593
      %p595 = scmp.eq.s32.totalorder %s102, 0
      %p596 = por %p594, %p595
      %s598 = sadd.s32 %s597, 1
      %p601 = scmp.eq.s32.totalorder %s96, 1
      %p602 = scmp.ne.s32.totalorder %s597, %s599
      %p603 = scmp.eq.s32.totalorder %s96, 0
      %p604 = por %p602, %p603
      %p605 = scmp.ne.s32.totalorder %s597, %s599
      %p606 = scmp.eq.s32.totalorder %s101, 1
      %p607 = por %p605, %p606
      %p608 = scmp.ne.s32.totalorder %s599, %s600
      %p609 = scmp.eq.s32.totalorder %s101, 0
      %p610 = por %p608, %p609
      %p611 = scmp.ne.s32.totalorder %s599, %s600
      %p612 = scmp.eq.s32.totalorder %s102, 1
      %p613 = por %p611, %p612
      %p615 = scmp.ne.s32.totalorder %s600, %s614
      %p616 = scmp.eq.s32.totalorder %s102, 0
      %p617 = por %p615, %p616
      %s619 = sadd.s32 %s618, 1
      %p622 = scmp.eq.s32.totalorder %s96, 1
      %p623 = scmp.ne.s32.totalorder %s618, %s620
      %p624 = scmp.eq.s32.totalorder %s96, 0
      %p625 = por %p623, %p624
      %p626 = scmp.ne.s32.totalorder %s618, %s620
      %p627 = scmp.eq.s32.totalorder %s101, 1
      %p628 = por %p626, %p627
      %p629 = scmp.ne.s32.totalorder %s620, %s621
      %p630 = scmp.eq.s32.totalorder %s101, 0
      %p631 = por %p629, %p630
      %p632 = scmp.ne.s32.totalorder %s620, %s621
      %p633 = scmp.eq.s32.totalorder %s102, 1
      %p634 = por %p632, %p633
      %p636 = scmp.ne.s32.totalorder %s621, %s635
      %p637 = scmp.eq.s32.totalorder %s102, 0
      %p638 = por %p636, %p637
      %s640 = sadd.s32 %s639, 1
      %p643 = scmp.eq.s32.totalorder %s96, 1
      %p644 = scmp.ne.s32.totalorder %s639, %s641
      %p645 = scmp.eq.s32.totalorder %s96, 0
      %p646 = por %p644, %p645
      %p647 = scmp.ne.s32.totalorder %s639, %s641
      %p648 = scmp.eq.s32.totalorder %s101, 1
      %p649 = por %p647, %p648
      %p650 = scmp.ne.s32.totalorder %s641, %s642
      %p651 = scmp.eq.s32.totalorder %s101, 0
      %p652 = por %p650, %p651
      %p653 = scmp.ne.s32.totalorder %s641, %s642
      %p654 = scmp.eq.s32.totalorder %s102, 1
      %p655 = por %p653, %p654
      %p657 = scmp.ne.s32.totalorder %s642, %s656
      %p658 = scmp.eq.s32.totalorder %s102, 0
      %p659 = por %p657, %p658
      %s661 = sadd.s32 %s660, 1
      %p664 = scmp.eq.s32.totalorder %s96, 1
      %p665 = scmp.ne.s32.totalorder %s660, %s662
      %p666 = scmp.eq.s32.totalorder %s96, 0
      %p667 = por %p665, %p666
      %p668 = scmp.ne.s32.totalorder %s660, %s662
      %p669 = scmp.eq.s32.totalorder %s101, 1
      %p670 = por %p668, %p669
      %p671 = scmp.ne.s32.totalorder %s662, %s663
      %p672 = scmp.eq.s32.totalorder %s101, 0
      %p673 = por %p671, %p672
      %p674 = scmp.ne.s32.totalorder %s662, %s663
      %p675 = scmp.eq.s32.totalorder %s102, 1
      %p676 = por %p674, %p675
      %p678 = scmp.ne.s32.totalorder %s663, %s677
      %p679 = scmp.eq.s32.totalorder %s102, 0
      %p680 = por %p678, %p679
      %s682 = sadd.s32 %s681, 1
      %p685 = scmp.eq.s32.totalorder %s96, 1
      %p686 = scmp.ne.s32.totalorder %s681, %s683
      %p687 = scmp.eq.s32.totalorder %s96, 0
      %p688 = por %p686, %p687
      %p689 = scmp.ne.s32.totalorder %s681, %s683
      %p690 = scmp.eq.s32.totalorder %s101, 1
      %p691 = por %p689, %p690
      %p692 = scmp.ne.s32.totalorder %s683, %s684
      %p693 = scmp.eq.s32.totalorder %s101, 0
      %p694 = por %p692, %p693
      %p695 = scmp.ne.s32.totalorder %s683, %s684
      %p696 = scmp.eq.s32.totalorder %s102, 1
      %p697 = por %p695, %p696
      %p699 = scmp.ne.s32.totalorder %s684, %s698
      %p700 = scmp.eq.s32.totalorder %s102, 0
      %p701 = por %p699, %p700
      %s703 = sadd.s32 %s702, 1
      %p706 = scmp.eq.s32.totalorder %s96, 1
      %p707 = scmp.ne.s32.totalorder %s702, %s704
      %p708 = scmp.eq.s32.totalorder %s96, 0
      %p709 = por %p707, %p708
      %p710 = scmp.ne.s32.totalorder %s702, %s704
      %p711 = scmp.eq.s32.totalorder %s101, 1
      %p712 = por %p710, %p711
      %p713 = scmp.ne.s32.totalorder %s704, %s705
      %p714 = scmp.eq.s32.totalorder %s101, 0
      %p715 = por %p713, %p714
      %p716 = scmp.ne.s32.totalorder %s704, %s705
      %p717 = scmp.eq.s32.totalorder %s102, 1
      %p718 = por %p716, %p717
      %p720 = scmp.ne.s32.totalorder %s705, %s719
      %p721 = scmp.eq.s32.totalorder %s102, 0
      %p722 = por %p720, %p721
      %s723 = ssub.s32 %s96, %s103
      %p724 = scmp.eq.s32.totalorder %s723, 0
      %s726 = sadd.s32 %s725, 1
      %s727 = scalar_select %p724, %s725, %s726
      %p730 = pneg %p724
      %p731 = scmp.eq.s32.totalorder %s96, 1
      %p732 = por %p730, %p731
      %p733 = scmp.ne.s32.totalorder %s725, %s728
      %p734 = scmp.eq.s32.totalorder %s96, 0
      %p735 = por %p733, %p734
      %p736 = scmp.ne.s32.totalorder %s725, %s728
      %p737 = scmp.eq.s32.totalorder %s101, 1
      %p738 = por %p736, %p737
      %p739 = scmp.ne.s32.totalorder %s728, %s729
      %p740 = scmp.eq.s32.totalorder %s101, 0
      %p741 = por %p739, %p740
      %p742 = scmp.ne.s32.totalorder %s728, %s729
      %p743 = scmp.eq.s32.totalorder %s102, 1
      %p744 = por %p742, %p743
      %p746 = scmp.ne.s32.totalorder %s729, %s745
      %p747 = scmp.eq.s32.totalorder %s102, 0
      %p748 = por %p746, %p747
      %s749 = ssub.s32 %s96, %s103
      %p750 = scmp.eq.s32.totalorder %s749, 0
      %s752 = sadd.s32 %s751, 1
      %s753 = scalar_select %p750, %s751, %s752
      %p756 = pneg %p750
      %p757 = scmp.eq.s32.totalorder %s96, 1
      %p758 = por %p756, %p757
      %p759 = scmp.ne.s32.totalorder %s751, %s754
      %p760 = scmp.eq.s32.totalorder %s96, 0
      %p761 = por %p759, %p760
      %p762 = scmp.ne.s32.totalorder %s751, %s754
      %p763 = scmp.eq.s32.totalorder %s101, 1
      %p764 = por %p762, %p763
      %p765 = scmp.ne.s32.totalorder %s754, %s755
      %p766 = scmp.eq.s32.totalorder %s101, 0
      %p767 = por %p765, %p766
      %p768 = scmp.ne.s32.totalorder %s754, %s755
      %p769 = scmp.eq.s32.totalorder %s102, 1
      %p770 = por %p768, %p769
      %p772 = scmp.ne.s32.totalorder %s755, %s771
      %p773 = scmp.eq.s32.totalorder %s102, 0
      %p774 = por %p772, %p773
      %p775 = scmp.le.s32.totalorder 1, %s96
      %p776 = scmp.lt.s32.totalorder %s96, 3
      %p777 = pnand %p775, %p776
      %p778 = pneg %p777
      // Predicated region
      $region9: #{predictor_forward.1} parent=5 // pred_check
        _
      $region10: #{predictor_forward.1} parent=5 // pred_check_branch
        %780 = sbr.rel (%p777) target = $region12
      $region11: #{predictor_forward.1} parent=5 // pred_region
        %s781 = ssub.s32 %s96, 1
        // Predicated region
        $region13: #{predictor_forward.1} parent=11 // pred_check
          %p782 = pneg %p169
        $region14: #{predictor_forward.1} parent=11 // pred_check_branch
          %784 = sbr.rel (%p782) target = $region16
        $region15: #{predictor_forward.1} parent=11 // pred_region
          _
        $region16: #{predictor_forward.1} parent=11 // pred_fallthru
          _
        // Predicated region
        $region17: #{predictor_forward.1} parent=11 // pred_check
          %p785 = pneg %p190
        $region18: #{predictor_forward.1} parent=11 // pred_check_branch
          %787 = sbr.rel (%p785) target = $region20
        $region19: #{predictor_forward.1} parent=11 // pred_region
          _
        $region20: #{predictor_forward.1} parent=11 // pred_fallthru
          _
        // Predicated region
        $region21: #{predictor_forward.1} parent=11 // pred_check
          %p788 = pneg %p211
        $region22: #{predictor_forward.1} parent=11 // pred_check_branch
          %790 = sbr.rel (%p788) target = $region24
        $region23: #{predictor_forward.1} parent=11 // pred_region
          %792 = vsyncadd [#allocation6], 0
          %s793 = sshll.u32 %s13, 4
          %s794 = int_to_ptr.hbm [resolvable:$true] %s793
          %s795 = sshll.u32 [#allocation5], 4
          %s796 = int_to_ptr.vmem [resolvable:$true] %s795
          %801 = dma.hbm_to_vmem [thread:$0]  %s794, 3072, %s796, [#allocation6], 128, 128, 8
        $region24: #{predictor_forward.1} parent=11 // pred_fallthru
          _
        // Predicated region
        $region25: #{predictor_forward.1} parent=11 // pred_check
          %p802 = pneg %p232
        $region26: #{predictor_forward.1} parent=11 // pred_check_branch
          %804 = sbr.rel (%p802) target = $region28
        $region27: #{predictor_forward.1} parent=11 // pred_region
          _
        $region28: #{predictor_forward.1} parent=11 // pred_fallthru
          _
        // Predicated region
        $region29: #{predictor_forward.1} parent=11 // pred_check
          %p805 = pneg %p253
        $region30: #{predictor_forward.1} parent=11 // pred_check_branch
          %807 = sbr.rel (%p805) target = $region32
        $region31: #{predictor_forward.1} parent=11 // pred_region
          _
        $region32: #{predictor_forward.1} parent=11 // pred_fallthru
          _
        // Predicated region
        $region33: #{predictor_forward.1} parent=11 // pred_check
          %p808 = pneg %p274
        $region34: #{predictor_forward.1} parent=11 // pred_check_branch
          %810 = sbr.rel (%p808) target = $region36
        $region35: #{predictor_forward.1} parent=11 // pred_region
          _
        $region36: #{predictor_forward.1} parent=11 // pred_fallthru
          _
        // Predicated region
        $region37: #{predictor_forward.1} parent=11 // pred_check
          %p811 = pneg %p295
        $region38: #{predictor_forward.1} parent=11 // pred_check_branch
          %813 = sbr.rel (%p811) target = $region40
        $region39: #{predictor_forward.1} parent=11 // pred_region
          %815 = vsyncadd [#allocation8], 0
          %s817 = sshll.u32 %s21, 4
          %s818 = int_to_ptr.hbm [resolvable:$true] %s817
          %s819 = sshll.u32 [#allocation7], 4
          %s820 = int_to_ptr.vmem [resolvable:$true] %s819
          %822 = dma.hbm_to_vmem [thread:$0]  %s818, 16, %s820, [#allocation8]
        $region40: #{predictor_forward.1} parent=11 // pred_fallthru
          _
        // Predicated region
        $region41: #{predictor_forward.1} parent=11 // pred_check
          %p823 = pneg %p316
        $region42: #{predictor_forward.1} parent=11 // pred_check_branch
          %825 = sbr.rel (%p823) target = $region44
        $region43: #{predictor_forward.1} parent=11 // pred_region
          %827 = vsyncadd [#allocation8], 0
          %s828 = sshll.u32 %s23, 4
          %s829 = int_to_ptr.hbm [resolvable:$true] %s828
          %s830 = sshll.u32 [#allocation9], 4
          %s831 = int_to_ptr.vmem [resolvable:$true] %s830
          %836 = dma.hbm_to_vmem [thread:$0]  %s829, 512, %s831, [#allocation8], 128, 128, 8
        $region44: #{predictor_forward.1} parent=11 // pred_fallthru
          _
        // Predicated region
        $region45: #{predictor_forward.1} parent=11 // pred_check
          %p837 = pneg %p337
        $region46: #{predictor_forward.1} parent=11 // pred_check_branch
          %839 = sbr.rel (%p837) target = $region48
        $region47: #{predictor_forward.1} parent=11 // pred_region
          %841 = vsyncadd [#allocation11], 0
          %s843 = sshll.u32 %s25, 4
          %s844 = int_to_ptr.hbm [resolvable:$true] %s843
          %s845 = sshll.u32 [#allocation10], 4
          %s846 = int_to_ptr.vmem [resolvable:$true] %s845
          %848 = dma.hbm_to_vmem [thread:$0]  %s844, 16, %s846, [#allocation11]
        $region48: #{predictor_forward.1} parent=11 // pred_fallthru
          _
        // Predicated region
        $region49: #{predictor_forward.1} parent=11 // pred_check
          %p849 = pneg %p358
        $region50: #{predictor_forward.1} parent=11 // pred_check_branch
          %851 = sbr.rel (%p849) target = $region52
        $region51: #{predictor_forward.1} parent=11 // pred_region
          %853 = vsyncadd [#allocation11], 0
          %s854 = sshll.u32 %s27, 4
          %s855 = int_to_ptr.hbm [resolvable:$true] %s854
          %s856 = sshll.u32 [#allocation12], 4
          %s857 = int_to_ptr.vmem [resolvable:$true] %s856
          %862 = dma.hbm_to_vmem [thread:$0]  %s855, 512, %s857, [#allocation11], 128, 128, 8
        $region52: #{predictor_forward.1} parent=11 // pred_fallthru
          _
        // Predicated region
        $region53: #{predictor_forward.1} parent=11 // pred_check
          %p863 = pneg %p379
        $region54: #{predictor_forward.1} parent=11 // pred_check_branch
          %865 = sbr.rel (%p863) target = $region56
        $region55: #{predictor_forward.1} parent=11 // pred_region
          %867 = vsyncadd [#allocation14], 0
          %s869 = sshll.u32 %s29, 4
          %s870 = int_to_ptr.hbm [resolvable:$true] %s869
          %s871 = sshll.u32 [#allocation13], 4
          %s872 = int_to_ptr.vmem [resolvable:$true] %s871
          %874 = dma.hbm_to_vmem [thread:$0]  %s870, 16, %s872, [#allocation14]
        $region56: #{predictor_forward.1} parent=11 // pred_fallthru
          _
        // Predicated region
        $region57: #{predictor_forward.1} parent=11 // pred_check
          %p875 = pneg %p400
        $region58: #{predictor_forward.1} parent=11 // pred_check_branch
          %877 = sbr.rel (%p875) target = $region60
        $region59: #{predictor_forward.1} parent=11 // pred_region
          %879 = vsyncadd [#allocation14], 0
          %s880 = sshll.u32 %s31, 4
          %s881 = int_to_ptr.hbm [resolvable:$true] %s880
          %s882 = sshll.u32 [#allocation15], 4
          %s883 = int_to_ptr.vmem [resolvable:$true] %s882
          %888 = dma.hbm_to_vmem [thread:$0]  %s881, 512, %s883, [#allocation14], 128, 128, 8
        $region60: #{predictor_forward.1} parent=11 // pred_fallthru
          _
        // Predicated region
        $region61: #{predictor_forward.1} parent=11 // pred_check
          %p889 = pneg %p421
        $region62: #{predictor_forward.1} parent=11 // pred_check_branch
          %891 = sbr.rel (%p889) target = $region64
        $region63: #{predictor_forward.1} parent=11 // pred_region
          %893 = vsyncadd [#allocation17], 0
          %s895 = sshll.u32 %s33, 4
          %s896 = int_to_ptr.hbm [resolvable:$true] %s895
          %s897 = sshll.u32 [#allocation16], 4
          %s898 = int_to_ptr.vmem [resolvable:$true] %s897
          %900 = dma.hbm_to_vmem [thread:$0]  %s896, 16, %s898, [#allocation17]
        $region64: #{predictor_forward.1} parent=11 // pred_fallthru
          _
        // Predicated region
        $region65: #{predictor_forward.1} parent=11 // pred_check
          %p901 = pneg %p442
        $region66: #{predictor_forward.1} parent=11 // pred_check_branch
          %903 = sbr.rel (%p901) target = $region68
        $region67: #{predictor_forward.1} parent=11 // pred_region
          %905 = vsyncadd [#allocation17], 0
          %s906 = sshll.u32 %s35, 4
          %s907 = int_to_ptr.hbm [resolvable:$true] %s906
          %s908 = sshll.u32 [#allocation18], 4
          %s909 = int_to_ptr.vmem [resolvable:$true] %s908
          %914 = dma.hbm_to_vmem [thread:$0]  %s907, 512, %s909, [#allocation17], 128, 128, 8
        $region68: #{predictor_forward.1} parent=11 // pred_fallthru
          _
        // Predicated region
        $region69: #{predictor_forward.1} parent=11 // pred_check
          %p915 = pneg %p463
        $region70: #{predictor_forward.1} parent=11 // pred_check_branch
          %917 = sbr.rel (%p915) target = $region72
        $region71: #{predictor_forward.1} parent=11 // pred_region
          %919 = vsyncadd [#allocation20], 0
          %s921 = sshll.u32 %s37, 4
          %s922 = int_to_ptr.hbm [resolvable:$true] %s921
          %s923 = sshll.u32 [#allocation19], 4
          %s924 = int_to_ptr.vmem [resolvable:$true] %s923
          %926 = dma.hbm_to_vmem [thread:$0]  %s922, 16, %s924, [#allocation20]
        $region72: #{predictor_forward.1} parent=11 // pred_fallthru
          _
        // Predicated region
        $region73: #{predictor_forward.1} parent=11 // pred_check
          %p927 = pneg %p484
        $region74: #{predictor_forward.1} parent=11 // pred_check_branch
          %929 = sbr.rel (%p927) target = $region76
        $region75: #{predictor_forward.1} parent=11 // pred_region
          %931 = vsyncadd [#allocation20], 0
          %s932 = sshll.u32 %s39, 4
          %s933 = int_to_ptr.hbm [resolvable:$true] %s932
          %s934 = sshll.u32 [#allocation21], 4
          %s935 = int_to_ptr.vmem [resolvable:$true] %s934
          %940 = dma.hbm_to_vmem [thread:$0]  %s933, 512, %s935, [#allocation20], 128, 128, 8
        $region76: #{predictor_forward.1} parent=11 // pred_fallthru
          _
        // Predicated region
        $region77: #{predictor_forward.1} parent=11 // pred_check
          %p941 = pneg %p505
        $region78: #{predictor_forward.1} parent=11 // pred_check_branch
          %943 = sbr.rel (%p941) target = $region80
        $region79: #{predictor_forward.1} parent=11 // pred_region
          %945 = vsyncadd [#allocation23], 0
          %s947 = sshll.u32 %s41, 4
          %s948 = int_to_ptr.hbm [resolvable:$true] %s947
          %s949 = sshll.u32 [#allocation22], 4
          %s950 = int_to_ptr.vmem [resolvable:$true] %s949
          %952 = dma.hbm_to_vmem [thread:$0]  %s948, 16, %s950, [#allocation23]
        $region80: #{predictor_forward.1} parent=11 // pred_fallthru
          _
        // Predicated region
        $region81: #{predictor_forward.1} parent=11 // pred_check
          %p953 = pneg %p526
        $region82: #{predictor_forward.1} parent=11 // pred_check_branch
          %955 = sbr.rel (%p953) target = $region84
        $region83: #{predictor_forward.1} parent=11 // pred_region
          %957 = vsyncadd [#allocation23], 0
          %s958 = sshll.u32 %s43, 4
          %s959 = int_to_ptr.hbm [resolvable:$true] %s958
          %s960 = sshll.u32 [#allocation24], 4
          %s961 = int_to_ptr.vmem [resolvable:$true] %s960
          %966 = dma.hbm_to_vmem [thread:$0]  %s959, 48, %s961, [#allocation23], 16, 16, 1
        $region84: #{predictor_forward.1} parent=11 // pred_fallthru
          _
        // Predicated region
        $region85: #{predictor_forward.1} parent=11 // pred_check
          %p967 = pneg %p547
        $region86: #{predictor_forward.1} parent=11 // pred_check_branch
          %969 = sbr.rel (%p967) target = $region88
        $region87: #{predictor_forward.1} parent=11 // pred_region
          %971 = vsyncadd [#allocation26], 0
          %s972 = sshll.u32 %s45, 4
          %s973 = int_to_ptr.hbm [resolvable:$true] %s972
          %s974 = sshll.u32 [#allocation25], 4
          %s975 = int_to_ptr.vmem [resolvable:$true] %s974
          %980 = dma.hbm_to_vmem [thread:$0]  %s973, 48, %s975, [#allocation26], 16, 16, 1
        $region88: #{predictor_forward.1} parent=11 // pred_fallthru
          _
        // Predicated region
        $region89: #{predictor_forward.1} parent=11 // pred_check
          %p981 = pneg %p568
        $region90: #{predictor_forward.1} parent=11 // pred_check_branch
          %983 = sbr.rel (%p981) target = $region92
        $region91: #{predictor_forward.1} parent=11 // pred_region
          %985 = vsyncadd [#allocation26], 0
          %s986 = sshll.u32 %s47, 4
          %s987 = int_to_ptr.hbm [resolvable:$true] %s986
          %s988 = sshll.u32 [#allocation27], 4
          %s989 = int_to_ptr.vmem [resolvable:$true] %s988
          %994 = dma.hbm_to_vmem [thread:$0]  %s987, 512, %s989, [#allocation26], 128, 128, 8
        $region92: #{predictor_forward.1} parent=11 // pred_fallthru
          _
        // Predicated region
        $region93: #{predictor_forward.1} parent=11 // pred_check
          %p995 = pneg %p589
        $region94: #{predictor_forward.1} parent=11 // pred_check_branch
          %997 = sbr.rel (%p995) target = $region96
        $region95: #{predictor_forward.1} parent=11 // pred_region
          %999 = vsyncadd [#allocation29], 0
          %s1001 = sshll.u32 %s49, 4
          %s1002 = int_to_ptr.hbm [resolvable:$true] %s1001
          %s1003 = sshll.u32 [#allocation28], 4
          %s1004 = int_to_ptr.vmem [resolvable:$true] %s1003
          %1006 = dma.hbm_to_vmem [thread:$0]  %s1002, 16, %s1004, [#allocation29]
        $region96: #{predictor_forward.1} parent=11 // pred_fallthru
          _
        // Predicated region
        $region97: #{predictor_forward.1} parent=11 // pred_check
          %p1007 = pneg %p610
        $region98: #{predictor_forward.1} parent=11 // pred_check_branch
          %1009 = sbr.rel (%p1007) target = $region100
        $region99: #{predictor_forward.1} parent=11 // pred_region
          _
        $region100: #{predictor_forward.1} parent=11 // pred_fallthru
          _
        // Predicated region
        $region101: #{predictor_forward.1} parent=11 // pred_check
          %p1010 = pneg %p631
        $region102: #{predictor_forward.1} parent=11 // pred_check_branch
          %1012 = sbr.rel (%p1010) target = $region104
        $region103: #{predictor_forward.1} parent=11 // pred_region
          %1014 = vsyncadd [#allocation29], 0
          %s1016 = sshll.u32 %s53, 4
          %s1017 = int_to_ptr.hbm [resolvable:$true] %s1016
          %s1018 = sshll.u32 [#allocation30], 4
          %s1019 = int_to_ptr.vmem [resolvable:$true] %s1018
          %1021 = dma.hbm_to_vmem [thread:$0]  %s1017, 16, %s1019, [#allocation29]
        $region104: #{predictor_forward.1} parent=11 // pred_fallthru
          _
        // Predicated region
        $region105: #{predictor_forward.1} parent=11 // pred_check
          %p1022 = pneg %p652
        $region106: #{predictor_forward.1} parent=11 // pred_check_branch
          %1024 = sbr.rel (%p1022) target = $region108
        $region107: #{predictor_forward.1} parent=11 // pred_region
          %1026 = vsyncadd [#allocation32], 0
          %s1027 = sshll.u32 %s55, 4
          %s1028 = int_to_ptr.hbm [resolvable:$true] %s1027
          %s1029 = sshll.u32 [#allocation31], 4
          %s1030 = int_to_ptr.vmem [resolvable:$true] %s1029
          %1035 = dma.hbm_to_vmem [thread:$0]  %s1028, 512, %s1030, [#allocation32], 128, 128, 8
        $region108: #{predictor_forward.1} parent=11 // pred_fallthru
          _
        // Predicated region
        $region109: #{predictor_forward.1} parent=11 // pred_check
          %p1036 = pneg %p673
        $region110: #{predictor_forward.1} parent=11 // pred_check_branch
          %1038 = sbr.rel (%p1036) target = $region112
        $region111: #{predictor_forward.1} parent=11 // pred_region
          %1040 = vsyncadd [#allocation32], 0
          %s1042 = sshll.u32 %s57, 4
          %s1043 = int_to_ptr.hbm [resolvable:$true] %s1042
          %s1044 = sshll.u32 [#allocation33], 4
          %s1045 = int_to_ptr.vmem [resolvable:$true] %s1044
          %1047 = dma.hbm_to_vmem [thread:$0]  %s1043, 16, %s1045, [#allocation32]
        $region112: #{predictor_forward.1} parent=11 // pred_fallthru
          _
        // Predicated region
        $region113: #{predictor_forward.1} parent=11 // pred_check
          %p1048 = pneg %p694
        $region114: #{predictor_forward.1} parent=11 // pred_check_branch
          %1050 = sbr.rel (%p1048) target = $region116
        $region115: #{predictor_forward.1} parent=11 // pred_region
          %1052 = vsyncadd [#allocation35], 0
          %s1053 = sshll.u32 %s59, 4
          %s1054 = int_to_ptr.hbm [resolvable:$true] %s1053
          %s1055 = sshll.u32 [#allocation34], 4
          %s1056 = int_to_ptr.vmem [resolvable:$true] %s1055
          %1061 = dma.hbm_to_vmem [thread:$0]  %s1054, 512, %s1056, [#allocation35], 128, 128, 8
        $region116: #{predictor_forward.1} parent=11 // pred_fallthru
          _
        // Predicated region
        $region117: #{predictor_forward.1} parent=11 // pred_check
          %p1062 = pneg %p715
        $region118: #{predictor_forward.1} parent=11 // pred_check_branch
          %1064 = sbr.rel (%p1062) target = $region120
        $region119: #{predictor_forward.1} parent=11 // pred_region
          %1066 = vsyncadd [#allocation35], 0
          %s1068 = sshll.u32 %s61, 4
          %s1069 = int_to_ptr.hbm [resolvable:$true] %s1068
          %s1070 = sshll.u32 [#allocation36], 4
          %s1071 = int_to_ptr.vmem [resolvable:$true] %s1070
          %1073 = dma.hbm_to_vmem [thread:$0]  %s1069, 16, %s1071, [#allocation35]
        $region120: #{predictor_forward.1} parent=11 // pred_fallthru
          _
      $region12: #{predictor_forward.1} parent=5 // pred_fallthru
        _
      %p1074 = scmp.lt.s32.totalorder %s96, 2
      // Predicated region
      $region121: #{predictor_forward.1} parent=5 // pred_check
        %p1075 = pneg %p1074
      $region122: #{predictor_forward.1} parent=5 // pred_check_branch
        %1077 = sbr.rel (%p1075) target = $region124
      $region123: #{predictor_forward.1} parent=5 // pred_region
        // Predicated region
        $region125: #{predictor_forward.1} parent=123 // pred_check
          %p1078 = pneg %p116
        $region126: #{predictor_forward.1} parent=123 // pred_check_branch
          %1080 = sbr.rel (%p1078) target = $region128
        $region127: #{predictor_forward.1} parent=123 // pred_region
          %p1081 = scmp.lt.s32.totalorder %s96, 1
          %s1082 = scalar_select %p1081, %s96, 1
          %s1083 = smul.addr %s1082, 2
          %s1084 = smul.addr %s1083, 8
          %s1085 = scalar_lea.vmem %s5, %s1084
        $region128: #{predictor_forward.1} parent=123 // pred_fallthru
          _
        // Predicated region
        $region129: #{predictor_forward.1} parent=123 // pred_check
          %p1086 = pneg %p142
        $region130: #{predictor_forward.1} parent=123 // pred_check_branch
          %1088 = sbr.rel (%p1086) target = $region132
        $region131: #{predictor_forward.1} parent=123 // pred_region
          %p1089 = scmp.lt.s32.totalorder %s96, 1
          %s1090 = scalar_select %p1089, %s96, 1
          %s1091 = smul.addr %s1090, 8
          %s1092 = scalar_lea.vmem %s7, %s1091
        $region132: #{predictor_forward.1} parent=123 // pred_fallthru
          _
      $region124: #{predictor_forward.1} parent=5 // pred_fallthru
        _
      %p1093 = scmp.le.s32.totalorder 1, %s96
      %p1094 = scmp.lt.s32.totalorder %s96, 3
      %p1095 = pnand %p1093, %p1094
      %p1096 = pneg %p1095
      // Predicated region
      $region133: #{predictor_forward.1} parent=5 // pred_check
        _
      $region134: #{predictor_forward.1} parent=5 // pred_check_branch
        %1098 = sbr.rel (%p1095) target = $region136
      $region135: #{predictor_forward.1} parent=5 // pred_region
        %s1099 = ssub.s32 %s96, 1
        // Predicated region
        $region137: #{predictor_forward.1} parent=135 // pred_check
          %p1100 = pneg %p211
        $region138: #{predictor_forward.1} parent=135 // pred_check_branch
          %1102 = sbr.rel (%p1100) target = $region140
        $region139: #{predictor_forward.1} parent=135 // pred_region
          %1104 = dma.done [#allocation6], 3072
        $region140: #{predictor_forward.1} parent=135 // pred_fallthru
          _
        // Predicated region
        $region141: #{predictor_forward.1} parent=135 // pred_check
          %p1105 = pneg %p295
        $region142: #{predictor_forward.1} parent=135 // pred_check_branch
          %1107 = sbr.rel (%p1105) target = $region144
        $region143: #{predictor_forward.1} parent=135 // pred_region
          %1109 = dma.done [#allocation8], 16
        $region144: #{predictor_forward.1} parent=135 // pred_fallthru
          _
        // Predicated region
        $region145: #{predictor_forward.1} parent=135 // pred_check
          %p1110 = pneg %p316
        $region146: #{predictor_forward.1} parent=135 // pred_check_branch
          %1112 = sbr.rel (%p1110) target = $region148
        $region147: #{predictor_forward.1} parent=135 // pred_region
          %1114 = dma.done [#allocation8], 512
        $region148: #{predictor_forward.1} parent=135 // pred_fallthru
          _
        // Predicated region
        $region149: #{predictor_forward.1} parent=135 // pred_check
          %p1115 = pneg %p337
        $region150: #{predictor_forward.1} parent=135 // pred_check_branch
          %1117 = sbr.rel (%p1115) target = $region152
        $region151: #{predictor_forward.1} parent=135 // pred_region
          %1119 = dma.done [#allocation11], 16
        $region152: #{predictor_forward.1} parent=135 // pred_fallthru
          _
        // Predicated region
        $region153: #{predictor_forward.1} parent=135 // pred_check
          %p1120 = pneg %p358
        $region154: #{predictor_forward.1} parent=135 // pred_check_branch
          %1122 = sbr.rel (%p1120) target = $region156
        $region155: #{predictor_forward.1} parent=135 // pred_region
          %1124 = dma.done [#allocation11], 512
        $region156: #{predictor_forward.1} parent=135 // pred_fallthru
          _
        // Predicated region
        $region157: #{predictor_forward.1} parent=135 // pred_check
          %p1125 = pneg %p379
        $region158: #{predictor_forward.1} parent=135 // pred_check_branch
          %1127 = sbr.rel (%p1125) target = $region160
        $region159: #{predictor_forward.1} parent=135 // pred_region
          %1129 = dma.done [#allocation14], 16
        $region160: #{predictor_forward.1} parent=135 // pred_fallthru
          _
        // Predicated region
        $region161: #{predictor_forward.1} parent=135 // pred_check
          %p1130 = pneg %p400
        $region162: #{predictor_forward.1} parent=135 // pred_check_branch
          %1132 = sbr.rel (%p1130) target = $region164
        $region163: #{predictor_forward.1} parent=135 // pred_region
          %1134 = dma.done [#allocation14], 512
        $region164: #{predictor_forward.1} parent=135 // pred_fallthru
          _
        // Predicated region
        $region165: #{predictor_forward.1} parent=135 // pred_check
          %p1135 = pneg %p421
        $region166: #{predictor_forward.1} parent=135 // pred_check_branch
          %1137 = sbr.rel (%p1135) target = $region168
        $region167: #{predictor_forward.1} parent=135 // pred_region
          %1139 = dma.done [#allocation17], 16
        $region168: #{predictor_forward.1} parent=135 // pred_fallthru
          _
        // Predicated region
        $region169: #{predictor_forward.1} parent=135 // pred_check
          %p1140 = pneg %p442
        $region170: #{predictor_forward.1} parent=135 // pred_check_branch
          %1142 = sbr.rel (%p1140) target = $region172
        $region171: #{predictor_forward.1} parent=135 // pred_region
          %1144 = dma.done [#allocation17], 512
        $region172: #{predictor_forward.1} parent=135 // pred_fallthru
          _
        // Predicated region
        $region173: #{predictor_forward.1} parent=135 // pred_check
          %p1145 = pneg %p463
        $region174: #{predictor_forward.1} parent=135 // pred_check_branch
          %1147 = sbr.rel (%p1145) target = $region176
        $region175: #{predictor_forward.1} parent=135 // pred_region
          %1149 = dma.done [#allocation20], 16
        $region176: #{predictor_forward.1} parent=135 // pred_fallthru
          _
        // Predicated region
        $region177: #{predictor_forward.1} parent=135 // pred_check
          %p1150 = pneg %p484
        $region178: #{predictor_forward.1} parent=135 // pred_check_branch
          %1152 = sbr.rel (%p1150) target = $region180
        $region179: #{predictor_forward.1} parent=135 // pred_region
          %1154 = dma.done [#allocation20], 512
        $region180: #{predictor_forward.1} parent=135 // pred_fallthru
          _
        // Predicated region
        $region181: #{predictor_forward.1} parent=135 // pred_check
          %p1155 = pneg %p505
        $region182: #{predictor_forward.1} parent=135 // pred_check_branch
          %1157 = sbr.rel (%p1155) target = $region184
        $region183: #{predictor_forward.1} parent=135 // pred_region
          %1159 = dma.done [#allocation23], 16
        $region184: #{predictor_forward.1} parent=135 // pred_fallthru
          _
        // Predicated region
        $region185: #{predictor_forward.1} parent=135 // pred_check
          %p1160 = pneg %p526
        $region186: #{predictor_forward.1} parent=135 // pred_check_branch
          %1162 = sbr.rel (%p1160) target = $region188
        $region187: #{predictor_forward.1} parent=135 // pred_region
          %1164 = dma.done [#allocation23], 48
        $region188: #{predictor_forward.1} parent=135 // pred_fallthru
          _
        // Predicated region
        $region189: #{predictor_forward.1} parent=135 // pred_check
          %p1165 = pneg %p547
        $region190: #{predictor_forward.1} parent=135 // pred_check_branch
          %1167 = sbr.rel (%p1165) target = $region192
        $region191: #{predictor_forward.1} parent=135 // pred_region
          %1169 = dma.done [#allocation26], 48
        $region192: #{predictor_forward.1} parent=135 // pred_fallthru
          _
        // Predicated region
        $region193: #{predictor_forward.1} parent=135 // pred_check
          %p1170 = pneg %p568
        $region194: #{predictor_forward.1} parent=135 // pred_check_branch
          %1172 = sbr.rel (%p1170) target = $region196
        $region195: #{predictor_forward.1} parent=135 // pred_region
          %1174 = dma.done [#allocation26], 512
        $region196: #{predictor_forward.1} parent=135 // pred_fallthru
          _
        // Predicated region
        $region197: #{predictor_forward.1} parent=135 // pred_check
          %p1175 = pneg %p589
        $region198: #{predictor_forward.1} parent=135 // pred_check_branch
          %1177 = sbr.rel (%p1175) target = $region200
        $region199: #{predictor_forward.1} parent=135 // pred_region
          %1179 = dma.done [#allocation29], 16
        $region200: #{predictor_forward.1} parent=135 // pred_fallthru
          _
        // Predicated region
        $region201: #{predictor_forward.1} parent=135 // pred_check
          %p1180 = pneg %p631
        $region202: #{predictor_forward.1} parent=135 // pred_check_branch
          %1182 = sbr.rel (%p1180) target = $region204
        $region203: #{predictor_forward.1} parent=135 // pred_region
          %1184 = dma.done [#allocation29], 16
        $region204: #{predictor_forward.1} parent=135 // pred_fallthru
          _
        // Predicated region
        $region205: #{predictor_forward.1} parent=135 // pred_check
          %p1185 = pneg %p652
        $region206: #{predictor_forward.1} parent=135 // pred_check_branch
          %1187 = sbr.rel (%p1185) target = $region208
        $region207: #{predictor_forward.1} parent=135 // pred_region
          %1189 = dma.done [#allocation32], 512
        $region208: #{predictor_forward.1} parent=135 // pred_fallthru
          _
        // Predicated region
        $region209: #{predictor_forward.1} parent=135 // pred_check
          %p1190 = pneg %p673
        $region210: #{predictor_forward.1} parent=135 // pred_check_branch
          %1192 = sbr.rel (%p1190) target = $region212
        $region211: #{predictor_forward.1} parent=135 // pred_region
          %1194 = dma.done [#allocation32], 16
        $region212: #{predictor_forward.1} parent=135 // pred_fallthru
          _
        // Predicated region
        $region213: #{predictor_forward.1} parent=135 // pred_check
          %p1195 = pneg %p694
        $region214: #{predictor_forward.1} parent=135 // pred_check_branch
          %1197 = sbr.rel (%p1195) target = $region216
        $region215: #{predictor_forward.1} parent=135 // pred_region
          %1199 = dma.done [#allocation35], 512
        $region216: #{predictor_forward.1} parent=135 // pred_fallthru
          _
        // Predicated region
        $region217: #{predictor_forward.1} parent=135 // pred_check
          %p1200 = pneg %p715
        $region218: #{predictor_forward.1} parent=135 // pred_check_branch
          %1202 = sbr.rel (%p1200) target = $region220
        $region219: #{predictor_forward.1} parent=135 // pred_region
          %1204 = dma.done [#allocation35], 16
        $region220: #{predictor_forward.1} parent=135 // pred_fallthru
          _
        %p1205 = scmp.lt.s32.totalorder %s101, 1
        %s1206 = scalar_select %p1205, %s101, 1
        %s1207 = smul.addr %s1206, 2
        %s1208 = smul.addr %s1207, 8
        %s1209 = scalar_lea.vmem %s5, %s1208
        %p1210 = pneg %p122
        %p1211 = pneg %p119
        %p1212 = scmp.lt.s32.totalorder %s101, 1
        %s1213 = scalar_select %p1212, %s101, 1
        %s1214 = smul.addr %s1213, 8
        %s1215 = scalar_lea.vmem %s7, %s1214
        %p1216 = pneg %p148
        %p1217 = pneg %p145
        %p1218 = pneg %p169
        %p1219 = pneg %p166
        %p1220 = pneg %p190
        %p1221 = pneg %p187
        %p1222 = pneg %p211
        %p1223 = pneg %p208
        %p1224 = pneg %p232
        %p1225 = pneg %p229
        %p1226 = pneg %p253
        %p1227 = pneg %p250
        %p1228 = pneg %p274
        %p1229 = pneg %p271
        %p1230 = pneg %p295
        %p1231 = pneg %p292
        %p1232 = pneg %p316
        %p1233 = pneg %p313
        %p1234 = pneg %p337
        %p1235 = pneg %p334
        %p1236 = pneg %p358
        %p1237 = pneg %p355
        %p1238 = pneg %p379
        %p1239 = pneg %p376
        %p1240 = pneg %p400
        %p1241 = pneg %p397
        %p1242 = pneg %p421
        %p1243 = pneg %p418
        %p1244 = pneg %p442
        %p1245 = pneg %p439
        %p1246 = pneg %p463
        %p1247 = pneg %p460
        %p1248 = pneg %p484
        %p1249 = pneg %p481
        %p1250 = pneg %p505
        %p1251 = pneg %p502
        %p1252 = pneg %p526
        %p1253 = pneg %p523
        %p1254 = pneg %p547
        %p1255 = pneg %p544
        %p1256 = pneg %p568
        %p1257 = pneg %p565
        %p1258 = pneg %p589
        %p1259 = pneg %p586
        %p1260 = pneg %p610
        %p1261 = pneg %p607
        %p1262 = pneg %p631
        %p1263 = pneg %p628
        %p1264 = pneg %p652
        %p1265 = pneg %p649
        %p1266 = pneg %p673
        %p1267 = pneg %p670
        %p1268 = pneg %p694
        %p1269 = pneg %p691
        %p1270 = pneg %p715
        %p1271 = pneg %p712
        %p1272 = pneg %p741
        %p1273 = pneg %p738
        %p1274 = scmp.lt.s32.totalorder %s101, 1
        %s1275 = scalar_select %p1274, %s101, 1
        %s1276 = smul.addr %s1275, 8
        %s1277 = scalar_lea.vmem %s63, %s1276
        %p1278 = pneg %p767
        %p1279 = pneg %p764
        %p1280 = scmp.lt.s32.totalorder %s101, 1
        %s1281 = scalar_select %p1280, %s101, 1
        %s1282 = scalar_lea.vmem %s65, %s1281
        %p1283 = scmp.lt.s32.totalorder %s101, 1
        %s1284 = scalar_select %p1283, %s101, 1
        %s1285 = smul.addr %s1284, 2
        %s1286 = smul.addr %s1285, 8
        %s1287 = scalar_lea.vmem %s5, %s1286
        %p1288 = scmp.lt.s32.totalorder %s101, 1
        %s1289 = scalar_select %p1288, %s101, 1
        %s1290 = smul.addr %s1289, 8
        %s1291 = scalar_lea.vmem %s7, %s1290
        %p1292 = scmp.lt.s32.totalorder %s101, 1
        %s1293 = scalar_select %p1292, %s101, 1
        %s1294 = smul.addr %s1293, 8
        %s1295 = scalar_lea.vmem %s63, %s1294
        %p1296 = scmp.lt.s32.totalorder %s101, 1
        %s1297 = scalar_select %p1296, %s101, 1
        %s1298 = scalar_lea.vmem %s65, %s1297
        %s1299 = sld [smem:[#allocation3 + %s101]]
        %s1300 = sld [smem:[#allocation4 + %s101]]
        %v1301 = vlaneseq
        %v1302 = vshrl.u32 %v1301, 7
        %v1303 = vstv %s1299
        %vm1304 = vcmp.lt.s32.totalorder %v1302, %v1303
        %v1305 = vlaneseq
        %v1306 = vand.u32 %v1305, 127
        %v1307 = vstv %s1300
        %vm1308 = vcmp.lt.s32.totalorder %v1306, %v1307
        %v1309 = vadd.s32 %v1302, 8
        %v1310 = vadd.s32 %v1302, 16
        %v1311 = vadd.s32 %v1302, 24
        %v1312 = vadd.s32 %v1302, 32
        %v1313 = vadd.s32 %v1302, 40
        %v1314 = vadd.s32 %v1302, 48
        %v1315 = vadd.s32 %v1302, 56
        %v1316 = vadd.s32 %v1306, 32
        %vm1317 = vcmp.eq.s32.totalorder %v1302, %v1316
        %vm1318 = vcmp.eq.s32.totalorder %v1309, %v1316
        %vm1319 = vcmp.eq.s32.totalorder %v1310, %v1316
        %vm1320 = vcmp.eq.s32.totalorder %v1311, %v1316
        %vm1321 = vcmp.eq.s32.totalorder %v1312, %v1316
        %vm1322 = vcmp.eq.s32.totalorder %v1313, %v1316
        %vm1323 = vcmp.eq.s32.totalorder %v1314, %v1316
        %vm1324 = vcmp.eq.s32.totalorder %v1315, %v1316
        %v1325 = vsel %vm1317, 1.0, 0.0
        %v1326 = vsel %vm1318, 1.0, 0.0
        %v1327 = vsel %vm1319, 1.0, 0.0
        %v1328 = vsel %vm1320, 1.0, 0.0
        %v1329 = vsel %vm1321, 1.0, 0.0
        %v1330 = vsel %vm1322, 1.0, 0.0
        %v1331 = vsel %vm1323, 1.0, 0.0
        %v1332 = vsel %vm1324, 1.0, 0.0
        %v1333 = vadd.s32 %v1302, 64
        %v1334 = vadd.s32 %v1302, 72
        %v1335 = vadd.s32 %v1302, 80
        %v1336 = vadd.s32 %v1302, 88
        %vm1337 = vcmp.eq.s32.totalorder %v1333, %v1316
        %vm1338 = vcmp.eq.s32.totalorder %v1334, %v1316
        %vm1339 = vcmp.eq.s32.totalorder %v1335, %v1316
        %vm1340 = vcmp.eq.s32.totalorder %v1336, %v1316
        %v1341 = vsel %vm1337, 1.0, 0.0
        %v1342 = vsel %vm1338, 1.0, 0.0
        %v1343 = vsel %vm1339, 1.0, 0.0
        %v1344 = vsel %vm1340, 1.0, 0.0
        %v1345 = vadd.s32 %v1306, 64
        %vm1346 = vcmp.eq.s32.totalorder %v1302, %v1345
        %vm1347 = vcmp.eq.s32.totalorder %v1309, %v1345
        %vm1348 = vcmp.eq.s32.totalorder %v1310, %v1345
        %vm1349 = vcmp.eq.s32.totalorder %v1311, %v1345
        %vm1350 = vcmp.eq.s32.totalorder %v1312, %v1345
        %vm1351 = vcmp.eq.s32.totalorder %v1313, %v1345
        %vm1352 = vcmp.eq.s32.totalorder %v1314, %v1345
        %vm1353 = vcmp.eq.s32.totalorder %v1315, %v1345
        %vm1354 = vcmp.eq.s32.totalorder %v1333, %v1345
        %vm1355 = vcmp.eq.s32.totalorder %v1334, %v1345
        %vm1356 = vcmp.eq.s32.totalorder %v1335, %v1345
        %vm1357 = vcmp.eq.s32.totalorder %v1336, %v1345
        %v1358 = vsel %vm1346, 1.0, 0.0
        %v1359 = vsel %vm1347, 1.0, 0.0
        %v1360 = vsel %vm1348, 1.0, 0.0
        %v1361 = vsel %vm1349, 1.0, 0.0
        %v1362 = vsel %vm1350, 1.0, 0.0
        %v1363 = vsel %vm1351, 1.0, 0.0
        %v1364 = vsel %vm1352, 1.0, 0.0
        %v1365 = vsel %vm1353, 1.0, 0.0
        %v1366 = vsel %vm1354, 1.0, 0.0
        %v1367 = vsel %vm1355, 1.0, 0.0
        %v1368 = vsel %vm1356, 1.0, 0.0
        %v1369 = vsel %vm1357, 1.0, 0.0
        %v1370 = vld [vmem:[%s1287] sm:$0xff]
        %v1371 = vld [vmem:[%s1287 + $0x8] sm:$0xff]
        %v1372 = vld [vmem:[%s9] sm:$0xff]
        %v1373 = vld [vmem:[%s9 + $0x8] sm:$0xff]
        %v1374 = vld [vmem:[%s9 + $0x10] sm:$0xff]
        %v1375 = vld [vmem:[%s9 + $0x18] sm:$0xff]
        %v1376 = vld [vmem:[%s11] sm:$0x1]
        %v1378 = vperm.slane %v1376, 0
        %vm1380 = vcmask 261120
        %v1382 = vsel %vm1380, %v1370, 0
        %v1385 = vsel %vm1380, %v1371, 0
        %1387 = vmatpush.msra.mxu0 0.0
        %1388 = vmatpush.msra.mxu0 0.0
        %1389 = vmatpush.msra.mxu0 0.0
        %1390 = vmatpush.msra.mxu0 0.0
        %1391 = vmatpush.msra.mxu0 0.0
        %1392 = vmatpush.msra.mxu0 0.0
        %1393 = vmatpush.msra.mxu0 0.0
        %1394 = vmatpush.msra.mxu0 0.0
        %1395 = vmatpush.msra.mxu0 0.0
        %1396 = vmatpush.msra.mxu0 0.0
        %1397 = vmatpush.msra.mxu0 0.0
        %1398 = vmatpush.msra.mxu0 0.0
        %1399 = vmatpush.msra.mxu0 %v1375
        %1400 = vmatpush.msra.mxu0 %v1374
        %1401 = vmatpush.msra.mxu0 %v1373
        %1402 = vmatpush.msra.mxu0 %v1372
        %1403 = vmatmul.f32.gmra.mxu0 %v1382
        %v1404 = vpop.f32.mrf.mxu0
        %v1405 = vadd.f32 %v1378, %v1404
        %1406 = vmatmul.f32.gmra.mxu0 %v1385
        %v1407 = vpop.f32.mrf.mxu0
        %v1408 = vadd.f32 %v1378, %v1407
        %1409 = vdwg.mxu0
        %v1410 = vadd.s32 %v1306, 1
        %vm1411 = vcmp.eq.s32.totalorder %v1302, %v1410
        %vm1412 = vcmp.eq.s32.totalorder %v1309, %v1410
        %v1413 = vsel %vm1411, 1.0, 0.0
        %v1414 = vsel %vm1412, 1.0, 0.0
        %v1415 = vadd.s32 %v1306, 4294967295
        %vm1416 = vcmp.eq.s32.totalorder %v1302, %v1415
        %vm1417 = vcmp.eq.s32.totalorder %v1309, %v1415
        %v1418 = vsel %vm1416, 1.0, 0.0
        %v1419 = vsel %vm1417, 1.0, 0.0
        %vm1420 = vcmask 130048
        %v1422 = vsel %vm1420, %v1413, 0
        %v1425 = vsel %vm1420, %v1414, 0
        %1427 = vmatpush.msra.mxu0 0.0
        %1428 = vmatpush.msra.mxu0 0.0
        %1429 = vmatpush.msra.mxu0 0.0
        %1430 = vmatpush.msra.mxu0 0.0
        %1431 = vmatpush.msra.mxu0 0.0
        %1432 = vmatpush.msra.mxu0 0.0
        %1433 = vmatpush.msra.mxu0 0.0
        %1434 = vmatpush.msra.mxu0 0.0
        %1435 = vmatpush.msra.mxu0 0.0
        %1436 = vmatpush.msra.mxu0 0.0
        %1437 = vmatpush.msra.mxu0 0.0
        %1438 = vmatpush.msra.mxu0 0.0
        %1439 = vmatpush.msra.mxu0 0.0
        %1440 = vmatpush.msra.mxu0 0.0
        %1441 = vmatpush.msra.mxu0 %v1408
        %1442 = vmatpush.msra.mxu0 %v1405
        %1443 = vmatmul.f32.gmra.mxu0 %v1422
        %v1444 = vpop.f32.mrf.mxu0
        %v1445 = vadd.f32 0.0, %v1444
        %1446 = vmatmul.f32.gmra.mxu0 %v1425
        %v1447 = vpop.f32.mrf.mxu0
        %v1448 = vadd.f32 0.0, %v1447
        %1449 = vdwg.mxu0
        %v1451 = vsel %vm1420, %v1418, 0
        %v1454 = vsel %vm1420, %v1419, 0
        %1456 = vmatpush.msra.mxu0 0.0
        %1457 = vmatpush.msra.mxu0 0.0
        %1458 = vmatpush.msra.mxu0 0.0
        %1459 = vmatpush.msra.mxu0 0.0
        %1460 = vmatpush.msra.mxu0 0.0
        %1461 = vmatpush.msra.mxu0 0.0
        %1462 = vmatpush.msra.mxu0 0.0
        %1463 = vmatpush.msra.mxu0 0.0
        %1464 = vmatpush.msra.mxu0 0.0
        %1465 = vmatpush.msra.mxu0 0.0
        %1466 = vmatpush.msra.mxu0 0.0
        %1467 = vmatpush.msra.mxu0 0.0
        %1468 = vmatpush.msra.mxu0 0.0
        %1469 = vmatpush.msra.mxu0 0.0
        %1470 = vmatpush.msra.mxu0 %v1408
        %1471 = vmatpush.msra.mxu0 %v1405
        %1472 = vmatmul.f32.gmra.mxu0 %v1451
        %v1473 = vpop.f32.mrf.mxu0
        %v1474 = vadd.f32 0.0, %v1473
        %1475 = vmatmul.f32.gmra.mxu0 %v1454
        %v1476 = vpop.f32.mrf.mxu0
        %v1477 = vadd.f32 0.0, %v1476
        %1478 = vdwg.mxu0
        %v1479 = vld [vmem:[%s15] sm:$0x1]
        %v1480 = vld [vmem:[#allocation5] sm:$0xff]
        %v1481 = vld [vmem:[#allocation5 + $0x8] sm:$0xff]
        %v1482 = vld [vmem:[#allocation5 + $0x10] sm:$0xff]
        %v1483 = vld [vmem:[#allocation5 + $0x18] sm:$0xff]
        %v1485 = vsel %vm1380, %v1445, 0
        %v1488 = vsel %vm1380, %v1448, 0
        %1490 = vmatpush.msra.mxu0 0.0
        %1491 = vmatpush.msra.mxu0 0.0
        %1492 = vmatpush.msra.mxu0 0.0
        %1493 = vmatpush.msra.mxu0 0.0
        %1494 = vmatpush.msra.mxu0 0.0
        %1495 = vmatpush.msra.mxu0 0.0
        %1496 = vmatpush.msra.mxu0 0.0
        %1497 = vmatpush.msra.mxu0 0.0
        %1498 = vmatpush.msra.mxu0 0.0
        %1499 = vmatpush.msra.mxu0 0.0
        %1500 = vmatpush.msra.mxu0 0.0
        %1501 = vmatpush.msra.mxu0 0.0
        %1502 = vmatpush.msra.mxu0 %v1483
        %1503 = vmatpush.msra.mxu0 %v1482
        %1504 = vmatpush.msra.mxu0 %v1481
        %1505 = vmatpush.msra.mxu0 %v1480
        %1506 = vmatmul.f32.gmra.mxu0 %v1485
        %v1507 = vpop.f32.mrf.mxu0
        %v1508 = vadd.f32 0.0, %v1507
        %1509 = vmatmul.f32.gmra.mxu0 %v1488
        %v1510 = vpop.f32.mrf.mxu0
        %v1511 = vadd.f32 0.0, %v1510
        %1512 = vdwg.mxu0
        %v1514 = vperm.slane %v1479, 0
        %v1516 = vadd.f32 %v1514, %v1508
        %v1517 = vadd.f32 %v1514, %v1511
        %s1518 = scalar_lea.vmem [#allocation5], 32
        %v1519 = vld [vmem:[%s1518] sm:$0xff]
        %v1520 = vld [vmem:[%s1518 + $0x8] sm:$0xff]
        %v1521 = vld [vmem:[%s1518 + $0x10] sm:$0xff]
        %v1522 = vld [vmem:[%s1518 + $0x18] sm:$0xff]
        %v1524 = vsel %vm1380, %v1405, 0
        %v1527 = vsel %vm1380, %v1408, 0
        %1529 = vmatpush.msra.mxu0 0.0
        %1530 = vmatpush.msra.mxu0 0.0
        %1531 = vmatpush.msra.mxu0 0.0
        %1532 = vmatpush.msra.mxu0 0.0
        %1533 = vmatpush.msra.mxu0 0.0
        %1534 = vmatpush.msra.mxu0 0.0
        %1535 = vmatpush.msra.mxu0 0.0
        %1536 = vmatpush.msra.mxu0 0.0
        %1537 = vmatpush.msra.mxu0 0.0
        %1538 = vmatpush.msra.mxu0 0.0
        %1539 = vmatpush.msra.mxu0 0.0
        %1540 = vmatpush.msra.mxu0 0.0
        %1541 = vmatpush.msra.mxu0 %v1522
        %1542 = vmatpush.msra.mxu0 %v1521
        %1543 = vmatpush.msra.mxu0 %v1520
        %1544 = vmatpush.msra.mxu0 %v1519
        %1545 = vmatmul.f32.gmra.mxu0 %v1524
        %v1546 = vpop.f32.mrf.mxu0
        %v1547 = vadd.f32 0.0, %v1546
        %1548 = vmatmul.f32.gmra.mxu0 %v1527
        %v1549 = vpop.f32.mrf.mxu0
        %v1550 = vadd.f32 0.0, %v1549
        %1551 = vdwg.mxu0
        %v1552 = vadd.f32 %v1516, %v1547
        %v1553 = vadd.f32 %v1517, %v1550
        %s1554 = scalar_lea.vmem [#allocation5], 64
        %v1555 = vld [vmem:[%s1554] sm:$0xff]
        %v1556 = vld [vmem:[%s1554 + $0x8] sm:$0xff]
        %v1557 = vld [vmem:[%s1554 + $0x10] sm:$0xff]
        %v1558 = vld [vmem:[%s1554 + $0x18] sm:$0xff]
        %v1560 = vsel %vm1380, %v1474, 0
        %v1563 = vsel %vm1380, %v1477, 0
        %1565 = vmatpush.msra.mxu0 0.0
        %1566 = vmatpush.msra.mxu0 0.0
        %1567 = vmatpush.msra.mxu0 0.0
        %1568 = vmatpush.msra.mxu0 0.0
        %1569 = vmatpush.msra.mxu0 0.0
        %1570 = vmatpush.msra.mxu0 0.0
        %1571 = vmatpush.msra.mxu0 0.0
        %1572 = vmatpush.msra.mxu0 0.0
        %1573 = vmatpush.msra.mxu0 0.0
        %1574 = vmatpush.msra.mxu0 0.0
        %1575 = vmatpush.msra.mxu0 0.0
        %1576 = vmatpush.msra.mxu0 0.0
        %1577 = vmatpush.msra.mxu0 %v1558
        %1578 = vmatpush.msra.mxu0 %v1557
        %1579 = vmatpush.msra.mxu0 %v1556
        %1580 = vmatpush.msra.mxu0 %v1555
        %1581 = vmatmul.f32.gmra.mxu0 %v1560
        %v1582 = vpop.f32.mrf.mxu0
        %v1583 = vadd.f32 0.0, %v1582
        %1584 = vmatmul.f32.gmra.mxu0 %v1563
        %v1585 = vpop.f32.mrf.mxu0
        %v1586 = vadd.f32 0.0, %v1585
        %1587 = vdwg.mxu0
        %v1588 = vadd.f32 %v1552, %v1583
        %v1589 = vadd.f32 %v1553, %v1586
        %vm1590 = vcmask 523264
        %v1592 = vsel %vm1590, %v1588, 0
        %v1595 = vsel %vm1590, %v1589, 0
        %1597 = vmatpush.msra.mxu0 0.0
        %1598 = vmatpush.msra.mxu0 0.0
        %1599 = vmatpush.msra.mxu0 0.0
        %1600 = vmatpush.msra.mxu0 0.0
        %1601 = vmatpush.msra.mxu0 0.0
        %1602 = vmatpush.msra.mxu0 0.0
        %1603 = vmatpush.msra.mxu0 0.0
        %1604 = vmatpush.msra.mxu0 0.0
        %1605 = vmatpush.msra.mxu0 %v1332
        %1606 = vmatpush.msra.mxu0 %v1331
        %1607 = vmatpush.msra.mxu0 %v1330
        %1608 = vmatpush.msra.mxu0 %v1329
        %1609 = vmatpush.msra.mxu0 %v1328
        %1610 = vmatpush.msra.mxu0 %v1327
        %1611 = vmatpush.msra.mxu0 %v1326
        %1612 = vmatpush.msra.mxu0 %v1325
        %1613 = vmatmul.f32.gmra.mxu0 %v1592
        %v1614 = vpop.f32.mrf.mxu0
        %v1615 = vadd.f32 0.0, %v1614
        %1616 = vmatmul.f32.gmra.mxu0 %v1595
        %v1617 = vpop.f32.mrf.mxu0
        %v1618 = vadd.f32 0.0, %v1617
        %1619 = vdwg.mxu0
        %v1620 = vmul.f32 %v1615, 0.5
        %v1621 = vmul.f32 %v1618, 0.5
        %v1622 = vtanh.pop %v1620
        %v1623 = vtanh.pop %v1621
        %v1624 = vadd.f32 %v1622, 1.0
        %v1625 = vadd.f32 %v1623, 1.0
        %v1626 = vmul.f32 %v1624, 0.5
        %v1627 = vmul.f32 %v1625, 0.5
        %v1628 = vmul.f32 %v1588, %v1626
        %v1629 = vmul.f32 %v1589, %v1627
        %v1630 = vadd.f32 %v1628, %v1405
        %v1631 = vadd.f32 %v1629, %v1408
        %v1632 = vmul.f32 %v1630, 0.70710677
        %v1633 = vmul.f32 %v1631, 0.70710677
        %1634 = vmatpush.msra.mxu0 0.0
        %1635 = vmatpush.msra.mxu0 0.0
        %1636 = vmatpush.msra.mxu0 0.0
        %1637 = vmatpush.msra.mxu0 0.0
        %1638 = vmatpush.msra.mxu0 0.0
        %1639 = vmatpush.msra.mxu0 0.0
        %1640 = vmatpush.msra.mxu0 0.0
        %1641 = vmatpush.msra.mxu0 0.0
        %1642 = vmatpush.msra.mxu0 0.0
        %1643 = vmatpush.msra.mxu0 0.0
        %1644 = vmatpush.msra.mxu0 0.0
        %1645 = vmatpush.msra.mxu0 0.0
        %1646 = vmatpush.msra.mxu0 0.0
        %1647 = vmatpush.msra.mxu0 0.0
        %1648 = vmatpush.msra.mxu0 %v1633
        %1649 = vmatpush.msra.mxu0 %v1632
        %1650 = vmatmul.f32.gmra.mxu0 %v1422
        %v1651 = vpop.f32.mrf.mxu0
        %v1652 = vadd.f32 0.0, %v1651
        %1653 = vmatmul.f32.gmra.mxu0 %v1425
        %v1654 = vpop.f32.mrf.mxu0
        %v1655 = vadd.f32 0.0, %v1654
        %1656 = vdwg.mxu0
        %1657 = vmatpush.msra.mxu0 0.0
        %1658 = vmatpush.msra.mxu0 0.0
        %1659 = vmatpush.msra.mxu0 0.0
        %1660 = vmatpush.msra.mxu0 0.0
        %1661 = vmatpush.msra.mxu0 0.0
        %1662 = vmatpush.msra.mxu0 0.0
        %1663 = vmatpush.msra.mxu0 0.0
        %1664 = vmatpush.msra.mxu0 0.0
        %1665 = vmatpush.msra.mxu0 0.0
        %1666 = vmatpush.msra.mxu0 0.0
        %1667 = vmatpush.msra.mxu0 0.0
        %1668 = vmatpush.msra.mxu0 0.0
        %1669 = vmatpush.msra.mxu0 0.0
        %1670 = vmatpush.msra.mxu0 0.0
        %1671 = vmatpush.msra.mxu0 %v1633
        %1672 = vmatpush.msra.mxu0 %v1632
        %1673 = vmatmul.f32.gmra.mxu0 %v1451
        %v1674 = vpop.f32.mrf.mxu0
        %v1675 = vadd.f32 0.0, %v1674
        %1676 = vmatmul.f32.gmra.mxu0 %v1454
        %v1677 = vpop.f32.mrf.mxu0
        %v1678 = vadd.f32 0.0, %v1677
        %1679 = vdwg.mxu0
        %s1680 = scalar_lea.vmem %s15, 1
        %v1681 = vld [vmem:[%s1680] sm:$0x1]
        %s1682 = scalar_lea.vmem [#allocation5], 96
        %v1683 = vld [vmem:[%s1682] sm:$0xff]
        %v1684 = vld [vmem:[%s1682 + $0x8] sm:$0xff]
        %v1685 = vld [vmem:[%s1682 + $0x10] sm:$0xff]
        %v1686 = vld [vmem:[%s1682 + $0x18] sm:$0xff]
        %v1688 = vsel %vm1380, %v1652, 0
        %v1691 = vsel %vm1380, %v1655, 0
        %1693 = vmatpush.msra.mxu0 0.0
        %1694 = vmatpush.msra.mxu0 0.0
        %1695 = vmatpush.msra.mxu0 0.0
        %1696 = vmatpush.msra.mxu0 0.0
        %1697 = vmatpush.msra.mxu0 0.0
        %1698 = vmatpush.msra.mxu0 0.0
        %1699 = vmatpush.msra.mxu0 0.0
        %1700 = vmatpush.msra.mxu0 0.0
        %1701 = vmatpush.msra.mxu0 0.0
        %1702 = vmatpush.msra.mxu0 0.0
        %1703 = vmatpush.msra.mxu0 0.0
        %1704 = vmatpush.msra.mxu0 0.0
        %1705 = vmatpush.msra.mxu0 %v1686
        %1706 = vmatpush.msra.mxu0 %v1685
        %1707 = vmatpush.msra.mxu0 %v1684
        %1708 = vmatpush.msra.mxu0 %v1683
        %1709 = vmatmul.f32.gmra.mxu0 %v1688
        %v1710 = vpop.f32.mrf.mxu0
        %v1711 = vadd.f32 0.0, %v1710
        %1712 = vmatmul.f32.gmra.mxu0 %v1691
        %v1713 = vpop.f32.mrf.mxu0
        %v1714 = vadd.f32 0.0, %v1713
        %1715 = vdwg.mxu0
        %v1717 = vperm.slane %v1681, 0
        %v1719 = vadd.f32 %v1717, %v1711
        %v1720 = vadd.f32 %v1717, %v1714
        %s1721 = scalar_lea.vmem [#allocation5], 128
        %v1722 = vld [vmem:[%s1721] sm:$0xff]
        %v1723 = vld [vmem:[%s1721 + $0x8] sm:$0xff]
        %v1724 = vld [vmem:[%s1721 + $0x10] sm:$0xff]
        %v1725 = vld [vmem:[%s1721 + $0x18] sm:$0xff]
        %v1727 = vsel %vm1380, %v1632, 0
        %v1730 = vsel %vm1380, %v1633, 0
        %1732 = vmatpush.msra.mxu0 0.0
        %1733 = vmatpush.msra.mxu0 0.0
        %1734 = vmatpush.msra.mxu0 0.0
        %1735 = vmatpush.msra.mxu0 0.0
        %1736 = vmatpush.msra.mxu0 0.0
        %1737 = vmatpush.msra.mxu0 0.0
        %1738 = vmatpush.msra.mxu0 0.0
        %1739 = vmatpush.msra.mxu0 0.0
        %1740 = vmatpush.msra.mxu0 0.0
        %1741 = vmatpush.msra.mxu0 0.0
        %1742 = vmatpush.msra.mxu0 0.0
        %1743 = vmatpush.msra.mxu0 0.0
        %1744 = vmatpush.msra.mxu0 %v1725
        %1745 = vmatpush.msra.mxu0 %v1724
        %1746 = vmatpush.msra.mxu0 %v1723
        %1747 = vmatpush.msra.mxu0 %v1722
        %1748 = vmatmul.f32.gmra.mxu0 %v1727
        %v1749 = vpop.f32.mrf.mxu0
        %v1750 = vadd.f32 0.0, %v1749
        %1751 = vmatmul.f32.gmra.mxu0 %v1730
        %v1752 = vpop.f32.mrf.mxu0
        %v1753 = vadd.f32 0.0, %v1752
        %1754 = vdwg.mxu0
        %v1755 = vadd.f32 %v1719, %v1750
        %v1756 = vadd.f32 %v1720, %v1753
        %s1757 = scalar_lea.vmem [#allocation5], 160
        %v1758 = vld [vmem:[%s1757] sm:$0xff]
        %v1759 = vld [vmem:[%s1757 + $0x8] sm:$0xff]
        %v1760 = vld [vmem:[%s1757 + $0x10] sm:$0xff]
        %v1761 = vld [vmem:[%s1757 + $0x18] sm:$0xff]
        %v1763 = vsel %vm1380, %v1675, 0
        %v1766 = vsel %vm1380, %v1678, 0
        %1768 = vmatpush.msra.mxu0 0.0
        %1769 = vmatpush.msra.mxu0 0.0
        %1770 = vmatpush.msra.mxu0 0.0
        %1771 = vmatpush.msra.mxu0 0.0
        %1772 = vmatpush.msra.mxu0 0.0
        %1773 = vmatpush.msra.mxu0 0.0
        %1774 = vmatpush.msra.mxu0 0.0
        %1775 = vmatpush.msra.mxu0 0.0
        %1776 = vmatpush.msra.mxu0 0.0
        %1777 = vmatpush.msra.mxu0 0.0
        %1778 = vmatpush.msra.mxu0 0.0
        %1779 = vmatpush.msra.mxu0 0.0
        %1780 = vmatpush.msra.mxu0 %v1761
        %1781 = vmatpush.msra.mxu0 %v1760
        %1782 = vmatpush.msra.mxu0 %v1759
        %1783 = vmatpush.msra.mxu0 %v1758
        %1784 = vmatmul.f32.gmra.mxu0 %v1763
        %v1785 = vpop.f32.mrf.mxu0
        %v1786 = vadd.f32 0.0, %v1785
        %1787 = vmatmul.f32.gmra.mxu0 %v1766
        %v1788 = vpop.f32.mrf.mxu0
        %v1789 = vadd.f32 0.0, %v1788
        %1790 = vdwg.mxu0
        %v1791 = vadd.f32 %v1755, %v1786
        %v1792 = vadd.f32 %v1756, %v1789
        %v1794 = vsel %vm1590, %v1791, 0
        %v1797 = vsel %vm1590, %v1792, 0
        %1799 = vmatpush.msra.mxu0 0.0
        %1800 = vmatpush.msra.mxu0 0.0
        %1801 = vmatpush.msra.mxu0 0.0
        %1802 = vmatpush.msra.mxu0 0.0
        %1803 = vmatpush.msra.mxu0 0.0
        %1804 = vmatpush.msra.mxu0 0.0
        %1805 = vmatpush.msra.mxu0 0.0
        %1806 = vmatpush.msra.mxu0 0.0
        %1807 = vmatpush.msra.mxu0 %v1332
        %1808 = vmatpush.msra.mxu0 %v1331
        %1809 = vmatpush.msra.mxu0 %v1330
        %1810 = vmatpush.msra.mxu0 %v1329
        %1811 = vmatpush.msra.mxu0 %v1328
        %1812 = vmatpush.msra.mxu0 %v1327
        %1813 = vmatpush.msra.mxu0 %v1326
        %1814 = vmatpush.msra.mxu0 %v1325
        %1815 = vmatmul.f32.gmra.mxu0 %v1794
        %v1816 = vpop.f32.mrf.mxu0
        %v1817 = vadd.f32 0.0, %v1816
        %1818 = vmatmul.f32.gmra.mxu0 %v1797
        %v1819 = vpop.f32.mrf.mxu0
        %v1820 = vadd.f32 0.0, %v1819
        %1821 = vdwg.mxu0
        %v1822 = vmul.f32 %v1817, 0.5
        %v1823 = vmul.f32 %v1820, 0.5
        %v1824 = vtanh.pop %v1822
        %v1825 = vtanh.pop %v1823
        %v1826 = vadd.f32 %v1824, 1.0
        %v1827 = vadd.f32 %v1825, 1.0
        %v1828 = vmul.f32 %v1826, 0.5
        %v1829 = vmul.f32 %v1827, 0.5
        %v1830 = vmul.f32 %v1791, %v1828
        %v1831 = vmul.f32 %v1792, %v1829
        %v1832 = vadd.f32 %v1830, %v1632
        %v1833 = vadd.f32 %v1831, %v1633
        %v1834 = vmul.f32 %v1832, 0.70710677
        %v1835 = vmul.f32 %v1833, 0.70710677
        %v1836 = vld [vmem:[%s17] sm:$0x1]
        %s1837 = scalar_lea.vmem %s17, 1
        %v1838 = vld [vmem:[%s1837] sm:$0x1]
        %v1839 = vsel %vm1380, %v1834, 0.0
        %1840 = vadd.xlane.f32.xlu0 %v1839
        %v1841 = vpop.xlane.xlu0 %1840
        %v1842 = vsel %vm1380, %v1835, 0.0
        %1843 = vadd.xlane.f32.xlu0 %v1842
        %v1844 = vpop.xlane.xlu0 %1843
        %v1845 = vrcp.pop 32.0
        %v1846 = vmul.f32 32.0, %v1845
        %v1847 = vsub.f32 1.0, %v1846
        %v1848 = vmul.f32 %v1845, %v1847
        %v1849 = vadd.f32 %v1845, %v1848
        %vm1850 = vweird.f32 %v1845
        %v1851 = vsel %vm1850, %v1845, %v1849
        %v1852 = vmul.f32 %v1841, %v1851
        %v1853 = vmul.f32 %v1844, %v1851
        %v1854 = vsub.f32 %v1834, %v1852
        %v1855 = vsub.f32 %v1835, %v1853
        %v1856 = vmul.f32 %v1854, %v1854
        %v1857 = vmul.f32 %v1855, %v1855
        %v1858 = vsel %vm1380, %v1856, 0.0
        %1859 = vadd.xlane.f32.xlu0 %v1858
        %v1860 = vpop.xlane.xlu0 %1859
        %v1861 = vsel %vm1380, %v1857, 0.0
        %1862 = vadd.xlane.f32.xlu0 %v1861
        %v1863 = vpop.xlane.xlu0 %1862
        %v1864 = vmul.f32 %v1860, %v1851
        %v1865 = vmul.f32 %v1863, %v1851
        %v1866 = vadd.f32 %v1864, 1e-05
        %v1867 = vadd.f32 %v1865, 1e-05
        %v1868 = vrsqrt.pop %v1866
        %v1869 = vmul.f32 %v1868, %v1866
        %v1870 = vmul.f32 %v1869, %v1868
        %v1871 = vmul.f32 0.5, %v1870
        %v1872 = vsub.f32 1.5, %v1871
        %v1873 = vmul.f32 %v1868, %v1872
        %vm1874 = vweird.f32 %v1866
        %vm1875 = vweird.f32 %v1868
        %vm1876 = vmor %vm1874, %vm1875
        %v1877 = vsel %vm1876, %v1868, %v1873
        %v1878 = vrsqrt.pop %v1867
        %v1879 = vmul.f32 %v1878, %v1867
        %v1880 = vmul.f32 %v1879, %v1878
        %v1881 = vmul.f32 0.5, %v1880
        %v1882 = vsub.f32 1.5, %v1881
        %v1883 = vmul.f32 %v1878, %v1882
        %vm1884 = vweird.f32 %v1867
        %vm1885 = vweird.f32 %v1878
        %vm1886 = vmor %vm1884, %vm1885
        %v1887 = vsel %vm1886, %v1878, %v1883
        %v1888 = vmul.f32 %v1854, %v1877
        %v1889 = vmul.f32 %v1855, %v1887
        %v1891 = vperm.slane %v1836, 0
        %v1893 = vmul.f32 %v1888, %v1891
        %v1894 = vmul.f32 %v1889, %v1891
        %v1896 = vperm.slane %v1838, 0
        %v1898 = vadd.f32 %v1893, %v1896
        %v1899 = vadd.f32 %v1894, %v1896
        %v1900 = vld [vmem:[%s1291] sm:$0xff]
        %v1901 = vld [vmem:[%s19] sm:$0xff]
        %v1902 = vld [vmem:[%s19 + $0x8] sm:$0xff]
        %v1903 = vld [vmem:[%s19 + $0x10] sm:$0xff]
        %v1904 = vld [vmem:[%s19 + $0x18] sm:$0xff]
        %v1905 = vld [vmem:[#allocation7] sm:$0x1]
        %v1907 = vperm.slane %v1905, 0
        %v1910 = vsel %vm1380, %v1900, 0
        %1912 = vmatpush.msra.mxu0 0.0
        %1913 = vmatpush.msra.mxu0 0.0
        %1914 = vmatpush.msra.mxu0 0.0
        %1915 = vmatpush.msra.mxu0 0.0
        %1916 = vmatpush.msra.mxu0 0.0
        %1917 = vmatpush.msra.mxu0 0.0
        %1918 = vmatpush.msra.mxu0 0.0
        %1919 = vmatpush.msra.mxu0 0.0
        %1920 = vmatpush.msra.mxu0 0.0
        %1921 = vmatpush.msra.mxu0 0.0
        %1922 = vmatpush.msra.mxu0 0.0
        %1923 = vmatpush.msra.mxu0 0.0
        %1924 = vmatpush.msra.mxu0 %v1904
        %1925 = vmatpush.msra.mxu0 %v1903
        %1926 = vmatpush.msra.mxu0 %v1902
        %1927 = vmatpush.msra.mxu0 %v1901
        %1928 = vmatmul.f32.gmra.mxu0 %v1910
        %v1929 = vpop.f32.mrf.mxu0
        %v1930 = vadd.f32 %v1907, %v1929
        %1931 = vdwg.mxu0
        %v1932 = vld [vmem:[#allocation9] sm:$0xff]
        %v1933 = vld [vmem:[#allocation9 + $0x8] sm:$0xff]
        %v1934 = vld [vmem:[#allocation9 + $0x10] sm:$0xff]
        %v1935 = vld [vmem:[#allocation9 + $0x18] sm:$0xff]
        %v1936 = vld [vmem:[#allocation10] sm:$0x1]
        %v1938 = vperm.slane %v1936, 0
        %v1941 = vsel %vm1380, %v1930, 0
        %1943 = vmatpush.msra.mxu0 0.0
        %1944 = vmatpush.msra.mxu0 0.0
        %1945 = vmatpush.msra.mxu0 0.0
        %1946 = vmatpush.msra.mxu0 0.0
        %1947 = vmatpush.msra.mxu0 0.0
        %1948 = vmatpush.msra.mxu0 0.0
        %1949 = vmatpush.msra.mxu0 0.0
        %1950 = vmatpush.msra.mxu0 0.0
        %1951 = vmatpush.msra.mxu0 0.0
        %1952 = vmatpush.msra.mxu0 0.0
        %1953 = vmatpush.msra.mxu0 0.0
        %1954 = vmatpush.msra.mxu0 0.0
        %1955 = vmatpush.msra.mxu0 %v1935
        %1956 = vmatpush.msra.mxu0 %v1934
        %1957 = vmatpush.msra.mxu0 %v1933
        %1958 = vmatpush.msra.mxu0 %v1932
        %1959 = vmatmul.f32.gmra.mxu0 %v1941
        %v1960 = vpop.f32.mrf.mxu0
        %v1961 = vadd.f32 %v1938, %v1960
        %1962 = vdwg.mxu0
        %vm1963 = vcmask 785408
        %v1965 = vsel %vm1963, %v1961, 0
        %1967 = vmatpush.msra.mxu0 0.0
        %1968 = vmatpush.msra.mxu0 0.0
        %1969 = vmatpush.msra.mxu0 0.0
        %1970 = vmatpush.msra.mxu0 0.0
        %1971 = vmatpush.msra.mxu0 %v1344
        %1972 = vmatpush.msra.mxu0 %v1343
        %1973 = vmatpush.msra.mxu0 %v1342
        %1974 = vmatpush.msra.mxu0 %v1341
        %1975 = vmatpush.msra.mxu0 %v1332
        %1976 = vmatpush.msra.mxu0 %v1331
        %1977 = vmatpush.msra.mxu0 %v1330
        %1978 = vmatpush.msra.mxu0 %v1329
        %1979 = vmatpush.msra.mxu0 %v1328
        %1980 = vmatpush.msra.mxu0 %v1327
        %1981 = vmatpush.msra.mxu0 %v1326
        %1982 = vmatpush.msra.mxu0 %v1325
        %1983 = vmatmul.f32.gmra.mxu0 %v1965
        %v1984 = vpop.f32.mrf.mxu0
        %v1985 = vadd.f32 0.0, %v1984
        %1986 = vdwg.mxu0
        %1987 = vmatpush.msra.mxu0 0.0
        %1988 = vmatpush.msra.mxu0 0.0
        %1989 = vmatpush.msra.mxu0 0.0
        %1990 = vmatpush.msra.mxu0 0.0
        %1991 = vmatpush.msra.mxu0 %v1369
        %1992 = vmatpush.msra.mxu0 %v1368
        %1993 = vmatpush.msra.mxu0 %v1367
        %1994 = vmatpush.msra.mxu0 %v1366
        %1995 = vmatpush.msra.mxu0 %v1365
        %1996 = vmatpush.msra.mxu0 %v1364
        %1997 = vmatpush.msra.mxu0 %v1363
        %1998 = vmatpush.msra.mxu0 %v1362
        %1999 = vmatpush.msra.mxu0 %v1361
        %2000 = vmatpush.msra.mxu0 %v1360
        %2001 = vmatpush.msra.mxu0 %v1359
        %2002 = vmatpush.msra.mxu0 %v1358
        %2003 = vmatmul.f32.gmra.mxu0 %v1965
        %v2004 = vpop.f32.mrf.mxu0
        %v2005 = vadd.f32 0.0, %v2004
        %2006 = vdwg.mxu0
        %vm2007 = vcmp.ge.s32.totalorder %v1306, 0
        %vm2008 = vcmp.lt.s32.totalorder %v1306, 8
        %vm2009 = vmand %vm2007, %vm2008
        %v2010 = vsel %vm2009, 1.0, 0.0
        %v2011 = vmul.f32 %v1961, %v2010
        %v2013 = vsel %vm1380, %v2011, 0
        %v2016 = vsel %vm1380, %v1985, 0
        %2018 = vmatpush.xpose.msra.mxu0 0.0
        %2019 = vmatpush.xpose.msra.mxu0 0.0
        %2020 = vmatpush.xpose.msra.mxu0 0.0
        %2021 = vmatpush.xpose.msra.mxu0 0.0
        %2022 = vmatpush.xpose.msra.mxu0 0.0
        %2023 = vmatpush.xpose.msra.mxu0 0.0
        %2024 = vmatpush.xpose.msra.mxu0 0.0
        %2025 = vmatpush.xpose.msra.mxu0 0.0
        %2026 = vmatpush.xpose.msra.mxu0 0.0
        %2027 = vmatpush.xpose.msra.mxu0 0.0
        %2028 = vmatpush.xpose.msra.mxu0 0.0
        %2029 = vmatpush.xpose.msra.mxu0 0.0
        %2030 = vmatpush.xpose.msra.mxu0 0.0
        %2031 = vmatpush.xpose.msra.mxu0 0.0
        %2032 = vmatpush.xpose.msra.mxu0 0.0
        %2033 = vmatpush.xpose.msra.mxu0 %v2016
        %2034 = vmatmul.f32.gmra.mxu0 %v2013
        %v2035 = vpop.f32.mrf.mxu0
        %v2036 = vadd.f32 0.0, %v2035
        %2037 = vdwg.mxu0
        %v2038 = vmul.f32 %v2036, 0.35355338
        %v2039 = vsel %vm1304, 1, 0
        %vm2040 = vcmp.eq.s32.totalorder %v2039, 1
        %v2041 = vsel %vm2040, %v2038, -1e+10
        %vm2042 = vcmask 64512
        %v2043 = vsel %vm2042, %v2041, -inf
        %2044 = vmax.xlane.f32.xlu0 %v2043
        %v2045 = vpop.xlane.xlu0 %2044
        %v2046 = vsub.f32 %v2041, %v2045
        %v2047 = vmul.f32 %v2046, 1.442695
        %v2048 = vpow.pop %v2047
        %v2049 = vsel %vm2042, %v2048, 0.0
        %2050 = vadd.xlane.f32.xlu0 %v2049
        %v2051 = vpop.xlane.xlu0 %2050
        %v2052 = vrcp.pop %v2051
        %v2053 = vmul.f32 %v2051, %v2052
        %v2054 = vsub.f32 1.0, %v2053
        %v2055 = vmul.f32 %v2052, %v2054
        %v2056 = vadd.f32 %v2052, %v2055
        %vm2057 = vweird.f32 %v2051
        %vm2058 = vweird.f32 %v2052
        %vm2059 = vmor %vm2057, %vm2058
        %v2060 = vsel %vm2059, %v2052, %v2056
        %v2061 = vand.u32 2147483647, %v2051
        %vm2062 = vcmp.eq.f32.partialorder %v2061, 8.507059e+37
        %v2063 = vand.u32 %v2051, 2147483648
        %v2064 = vor.u32 1.1754944e-38, %v2063
        %v2065 = vsel %vm2062, %v2064, %v2060
        %v2066 = vmul.f32 %v2048, %v2065
        %v2067 = vmul.f32 %v2005, %v2010
        %vm2068 = vcmp.ge.s32.totalorder %v1306, 8
        %vm2069 = vcmp.lt.s32.totalorder %v1306, 16
        %vm2070 = vmand %vm2068, %vm2069
        %v2071 = vsel %vm2070, 1.0, 0.0
        %v2072 = vmul.f32 %v1961, %v2071
        %v2074 = vsel %vm1380, %v2072, 0
        %2076 = vmatpush.xpose.msra.mxu0 0.0
        %2077 = vmatpush.xpose.msra.mxu0 0.0
        %2078 = vmatpush.xpose.msra.mxu0 0.0
        %2079 = vmatpush.xpose.msra.mxu0 0.0
        %2080 = vmatpush.xpose.msra.mxu0 0.0
        %2081 = vmatpush.xpose.msra.mxu0 0.0
        %2082 = vmatpush.xpose.msra.mxu0 0.0
        %2083 = vmatpush.xpose.msra.mxu0 0.0
        %2084 = vmatpush.xpose.msra.mxu0 0.0
        %2085 = vmatpush.xpose.msra.mxu0 0.0
        %2086 = vmatpush.xpose.msra.mxu0 0.0
        %2087 = vmatpush.xpose.msra.mxu0 0.0
        %2088 = vmatpush.xpose.msra.mxu0 0.0
        %2089 = vmatpush.xpose.msra.mxu0 0.0
        %2090 = vmatpush.xpose.msra.mxu0 0.0
        %2091 = vmatpush.xpose.msra.mxu0 %v2016
        %2092 = vmatmul.f32.gmra.mxu0 %v2074
        %v2093 = vpop.f32.mrf.mxu0
        %v2094 = vadd.f32 0.0, %v2093
        %2095 = vdwg.mxu0
        %v2096 = vmul.f32 %v2094, 0.35355338
        %v2097 = vsel %vm2040, %v2096, -1e+10
        %v2098 = vsel %vm2042, %v2097, -inf
        %2099 = vmax.xlane.f32.xlu0 %v2098
        %v2100 = vpop.xlane.xlu0 %2099
        %v2101 = vsub.f32 %v2097, %v2100
        %v2102 = vmul.f32 %v2101, 1.442695
        %v2103 = vpow.pop %v2102
        %v2104 = vsel %vm2042, %v2103, 0.0
        %2105 = vadd.xlane.f32.xlu0 %v2104
        %v2106 = vpop.xlane.xlu0 %2105
        %v2107 = vrcp.pop %v2106
        %v2108 = vmul.f32 %v2106, %v2107
        %v2109 = vsub.f32 1.0, %v2108
        %v2110 = vmul.f32 %v2107, %v2109
        %v2111 = vadd.f32 %v2107, %v2110
        %vm2112 = vweird.f32 %v2106
        %vm2113 = vweird.f32 %v2107
        %vm2114 = vmor %vm2112, %vm2113
        %v2115 = vsel %vm2114, %v2107, %v2111
        %v2116 = vand.u32 2147483647, %v2106
        %vm2117 = vcmp.eq.f32.partialorder %v2116, 8.507059e+37
        %v2118 = vand.u32 %v2106, 2147483648
        %v2119 = vor.u32 1.1754944e-38, %v2118
        %v2120 = vsel %vm2117, %v2119, %v2115
        %v2121 = vmul.f32 %v2103, %v2120
        %v2122 = vmul.f32 %v2005, %v2071
        %v2124 = vsel %vm2042, %v2121, 0
        %2126 = vmatpush.msra.mxu0 0.0
        %2127 = vmatpush.msra.mxu0 0.0
        %2128 = vmatpush.msra.mxu0 0.0
        %2129 = vmatpush.msra.mxu0 0.0
        %2130 = vmatpush.msra.mxu0 0.0
        %2131 = vmatpush.msra.mxu0 0.0
        %2132 = vmatpush.msra.mxu0 0.0
        %2133 = vmatpush.msra.mxu0 0.0
        %2134 = vmatpush.msra.mxu0 0.0
        %2135 = vmatpush.msra.mxu0 0.0
        %2136 = vmatpush.msra.mxu0 0.0
        %2137 = vmatpush.msra.mxu0 0.0
        %2138 = vmatpush.msra.mxu0 0.0
        %2139 = vmatpush.msra.mxu0 0.0
        %2140 = vmatpush.msra.mxu0 0.0
        %2141 = vmatpush.msra.mxu0 %v2122
        %2142 = vmatmul.f32.gmra.mxu0 %v2124
        %v2143 = vpop.f32.mrf.mxu0
        %v2144 = vadd.f32 0.0, %v2143
        %2145 = vdwg.mxu0
        %v2147 = vsel %vm2042, %v2066, 0
        %2149 = vmatpush.msra.mxu0 0.0
        %2150 = vmatpush.msra.mxu0 0.0
        %2151 = vmatpush.msra.mxu0 0.0
        %2152 = vmatpush.msra.mxu0 0.0
        %2153 = vmatpush.msra.mxu0 0.0
        %2154 = vmatpush.msra.mxu0 0.0
        %2155 = vmatpush.msra.mxu0 0.0
        %2156 = vmatpush.msra.mxu0 0.0
        %2157 = vmatpush.msra.mxu0 0.0
        %2158 = vmatpush.msra.mxu0 0.0
        %2159 = vmatpush.msra.mxu0 0.0
        %2160 = vmatpush.msra.mxu0 0.0
        %2161 = vmatpush.msra.mxu0 0.0
        %2162 = vmatpush.msra.mxu0 0.0
        %2163 = vmatpush.msra.mxu0 0.0
        %2164 = vmatpush.msra.mxu0 %v2067
        %2165 = vmatmul.f32.gmra.mxu0 %v2147
        %v2166 = vpop.f32.mrf.mxu0
        %v2167 = vadd.f32 %v2144, %v2166
        %2168 = vdwg.mxu0
        %vm2169 = vcmp.ge.s32.totalorder %v1306, 16
        %vm2170 = vcmp.lt.s32.totalorder %v1306, 24
        %vm2171 = vmand %vm2169, %vm2170
        %v2172 = vsel %vm2171, 1.0, 0.0
        %v2173 = vmul.f32 %v1961, %v2172
        %v2175 = vsel %vm1380, %v2173, 0
        %2177 = vmatpush.xpose.msra.mxu0 0.0
        %2178 = vmatpush.xpose.msra.mxu0 0.0
        %2179 = vmatpush.xpose.msra.mxu0 0.0
        %2180 = vmatpush.xpose.msra.mxu0 0.0
        %2181 = vmatpush.xpose.msra.mxu0 0.0
        %2182 = vmatpush.xpose.msra.mxu0 0.0
        %2183 = vmatpush.xpose.msra.mxu0 0.0
        %2184 = vmatpush.xpose.msra.mxu0 0.0
        %2185 = vmatpush.xpose.msra.mxu0 0.0
        %2186 = vmatpush.xpose.msra.mxu0 0.0
        %2187 = vmatpush.xpose.msra.mxu0 0.0
        %2188 = vmatpush.xpose.msra.mxu0 0.0
        %2189 = vmatpush.xpose.msra.mxu0 0.0
        %2190 = vmatpush.xpose.msra.mxu0 0.0
        %2191 = vmatpush.xpose.msra.mxu0 0.0
        %2192 = vmatpush.xpose.msra.mxu0 %v2016
        %2193 = vmatmul.f32.gmra.mxu0 %v2175
        %v2194 = vpop.f32.mrf.mxu0
        %v2195 = vadd.f32 0.0, %v2194
        %2196 = vdwg.mxu0
        %v2197 = vmul.f32 %v2195, 0.35355338
        %v2198 = vsel %vm2040, %v2197, -1e+10
        %v2199 = vsel %vm2042, %v2198, -inf
        %2200 = vmax.xlane.f32.xlu0 %v2199
        %v2201 = vpop.xlane.xlu0 %2200
        %v2202 = vsub.f32 %v2198, %v2201
        %v2203 = vmul.f32 %v2202, 1.442695
        %v2204 = vpow.pop %v2203
        %v2205 = vsel %vm2042, %v2204, 0.0
        %2206 = vadd.xlane.f32.xlu0 %v2205
        %v2207 = vpop.xlane.xlu0 %2206
        %v2208 = vrcp.pop %v2207
        %v2209 = vmul.f32 %v2207, %v2208
        %v2210 = vsub.f32 1.0, %v2209
        %v2211 = vmul.f32 %v2208, %v2210
        %v2212 = vadd.f32 %v2208, %v2211
        %vm2213 = vweird.f32 %v2207
        %vm2214 = vweird.f32 %v2208
        %vm2215 = vmor %vm2213, %vm2214
        %v2216 = vsel %vm2215, %v2208, %v2212
        %v2217 = vand.u32 2147483647, %v2207
        %vm2218 = vcmp.eq.f32.partialorder %v2217, 8.507059e+37
        %v2219 = vand.u32 %v2207, 2147483648
        %v2220 = vor.u32 1.1754944e-38, %v2219
        %v2221 = vsel %vm2218, %v2220, %v2216
        %v2222 = vmul.f32 %v2204, %v2221
        %v2223 = vmul.f32 %v2005, %v2172
        %v2225 = vsel %vm2042, %v2222, 0
        %2227 = vmatpush.msra.mxu0 0.0
        %2228 = vmatpush.msra.mxu0 0.0
        %2229 = vmatpush.msra.mxu0 0.0
        %2230 = vmatpush.msra.mxu0 0.0
        %2231 = vmatpush.msra.mxu0 0.0
        %2232 = vmatpush.msra.mxu0 0.0
        %2233 = vmatpush.msra.mxu0 0.0
        %2234 = vmatpush.msra.mxu0 0.0
        %2235 = vmatpush.msra.mxu0 0.0
        %2236 = vmatpush.msra.mxu0 0.0
        %2237 = vmatpush.msra.mxu0 0.0
        %2238 = vmatpush.msra.mxu0 0.0
        %2239 = vmatpush.msra.mxu0 0.0
        %2240 = vmatpush.msra.mxu0 0.0
        %2241 = vmatpush.msra.mxu0 0.0
        %2242 = vmatpush.msra.mxu0 %v2223
        %2243 = vmatmul.f32.gmra.mxu0 %v2225
        %v2244 = vpop.f32.mrf.mxu0
        %v2245 = vadd.f32 0.0, %v2244
        %2246 = vdwg.mxu0
        %v2247 = vadd.f32 %v2167, %v2245
        %vm2248 = vcmp.ge.s32.totalorder %v1306, 24
        %vm2249 = vcmp.lt.s32.totalorder %v1306, 32
        %vm2250 = vmand %vm2248, %vm2249
        %v2251 = vsel %vm2250, 1.0, 0.0
        %v2252 = vmul.f32 %v1961, %v2251
        %v2254 = vsel %vm1380, %v2252, 0
        %2256 = vmatpush.xpose.msra.mxu0 0.0
        %2257 = vmatpush.xpose.msra.mxu0 0.0
        %2258 = vmatpush.xpose.msra.mxu0 0.0
        %2259 = vmatpush.xpose.msra.mxu0 0.0
        %2260 = vmatpush.xpose.msra.mxu0 0.0
        %2261 = vmatpush.xpose.msra.mxu0 0.0
        %2262 = vmatpush.xpose.msra.mxu0 0.0
        %2263 = vmatpush.xpose.msra.mxu0 0.0
        %2264 = vmatpush.xpose.msra.mxu0 0.0
        %2265 = vmatpush.xpose.msra.mxu0 0.0
        %2266 = vmatpush.xpose.msra.mxu0 0.0
        %2267 = vmatpush.xpose.msra.mxu0 0.0
        %2268 = vmatpush.xpose.msra.mxu0 0.0
        %2269 = vmatpush.xpose.msra.mxu0 0.0
        %2270 = vmatpush.xpose.msra.mxu0 0.0
        %2271 = vmatpush.xpose.msra.mxu0 %v2016
        %2272 = vmatmul.f32.gmra.mxu0 %v2254
        %v2273 = vpop.f32.mrf.mxu0
        %v2274 = vadd.f32 0.0, %v2273
        %2275 = vdwg.mxu0
        %v2276 = vmul.f32 %v2274, 0.35355338
        %v2277 = vsel %vm2040, %v2276, -1e+10
        %v2278 = vsel %vm2042, %v2277, -inf
        %2279 = vmax.xlane.f32.xlu0 %v2278
        %v2280 = vpop.xlane.xlu0 %2279
        %v2281 = vsub.f32 %v2277, %v2280
        %v2282 = vmul.f32 %v2281, 1.442695
        %v2283 = vpow.pop %v2282
        %v2284 = vsel %vm2042, %v2283, 0.0
        %2285 = vadd.xlane.f32.xlu0 %v2284
        %v2286 = vpop.xlane.xlu0 %2285
        %v2287 = vrcp.pop %v2286
        %v2288 = vmul.f32 %v2286, %v2287
        %v2289 = vsub.f32 1.0, %v2288
        %v2290 = vmul.f32 %v2287, %v2289
        %v2291 = vadd.f32 %v2287, %v2290
        %vm2292 = vweird.f32 %v2286
        %vm2293 = vweird.f32 %v2287
        %vm2294 = vmor %vm2292, %vm2293
        %v2295 = vsel %vm2294, %v2287, %v2291
        %v2296 = vand.u32 2147483647, %v2286
        %vm2297 = vcmp.eq.f32.partialorder %v2296, 8.507059e+37
        %v2298 = vand.u32 %v2286, 2147483648
        %v2299 = vor.u32 1.1754944e-38, %v2298
        %v2300 = vsel %vm2297, %v2299, %v2295
        %v2301 = vmul.f32 %v2283, %v2300
        %v2302 = vmul.f32 %v2005, %v2251
        %v2304 = vsel %vm2042, %v2301, 0
        %2306 = vmatpush.msra.mxu0 0.0
        %2307 = vmatpush.msra.mxu0 0.0
        %2308 = vmatpush.msra.mxu0 0.0
        %2309 = vmatpush.msra.mxu0 0.0
        %2310 = vmatpush.msra.mxu0 0.0
        %2311 = vmatpush.msra.mxu0 0.0
        %2312 = vmatpush.msra.mxu0 0.0
        %2313 = vmatpush.msra.mxu0 0.0
        %2314 = vmatpush.msra.mxu0 0.0
        %2315 = vmatpush.msra.mxu0 0.0
        %2316 = vmatpush.msra.mxu0 0.0
        %2317 = vmatpush.msra.mxu0 0.0
        %2318 = vmatpush.msra.mxu0 0.0
        %2319 = vmatpush.msra.mxu0 0.0
        %2320 = vmatpush.msra.mxu0 0.0
        %2321 = vmatpush.msra.mxu0 %v2302
        %2322 = vmatmul.f32.gmra.mxu0 %v2304
        %v2323 = vpop.f32.mrf.mxu0
        %v2324 = vadd.f32 0.0, %v2323
        %2325 = vdwg.mxu0
        %v2326 = vadd.f32 %v2247, %v2324
        %v2327 = vld [vmem:[#allocation12] sm:$0xff]
        %v2328 = vld [vmem:[#allocation12 + $0x8] sm:$0xff]
        %v2329 = vld [vmem:[#allocation12 + $0x10] sm:$0xff]
        %v2330 = vld [vmem:[#allocation12 + $0x18] sm:$0xff]
        %v2331 = vld [vmem:[#allocation13] sm:$0x1]
        %v2333 = vperm.slane %v2331, 0
        %v2336 = vsel %vm1380, %v2326, 0
        %2338 = vmatpush.msra.mxu0 0.0
        %2339 = vmatpush.msra.mxu0 0.0
        %2340 = vmatpush.msra.mxu0 0.0
        %2341 = vmatpush.msra.mxu0 0.0
        %2342 = vmatpush.msra.mxu0 0.0
        %2343 = vmatpush.msra.mxu0 0.0
        %2344 = vmatpush.msra.mxu0 0.0
        %2345 = vmatpush.msra.mxu0 0.0
        %2346 = vmatpush.msra.mxu0 0.0
        %2347 = vmatpush.msra.mxu0 0.0
        %2348 = vmatpush.msra.mxu0 0.0
        %2349 = vmatpush.msra.mxu0 0.0
        %2350 = vmatpush.msra.mxu0 %v2330
        %2351 = vmatpush.msra.mxu0 %v2329
        %2352 = vmatpush.msra.mxu0 %v2328
        %2353 = vmatpush.msra.mxu0 %v2327
        %2354 = vmatmul.f32.gmra.mxu0 %v2336
        %v2355 = vpop.f32.mrf.mxu0
        %v2356 = vadd.f32 %v2333, %v2355
        %2357 = vdwg.mxu0
        %v2358 = vadd.f32 %v1930, %v2356
        %v2359 = vld [vmem:[#allocation24] sm:$0x1]
        %v2360 = vld [vmem:[#allocation25] sm:$0x1]
        %v2361 = vsel %vm1380, %v2358, 0.0
        %2362 = vadd.xlane.f32.xlu0 %v2361
        %v2363 = vpop.xlane.xlu0 %2362
        %v2364 = vmul.f32 %v2363, %v1851
        %v2365 = vsub.f32 %v2358, %v2364
        %v2366 = vmul.f32 %v2365, %v2365
        %v2367 = vsel %vm1380, %v2366, 0.0
        %2368 = vadd.xlane.f32.xlu0 %v2367
        %v2369 = vpop.xlane.xlu0 %2368
        %v2370 = vmul.f32 %v2369, %v1851
        %v2371 = vadd.f32 %v2370, 1e-05
        %v2372 = vrsqrt.pop %v2371
        %v2373 = vmul.f32 %v2372, %v2371
        %v2374 = vmul.f32 %v2373, %v2372
        %v2375 = vmul.f32 0.5, %v2374
        %v2376 = vsub.f32 1.5, %v2375
        %v2377 = vmul.f32 %v2372, %v2376
        %vm2378 = vweird.f32 %v2371
        %vm2379 = vweird.f32 %v2372
        %vm2380 = vmor %vm2378, %vm2379
        %v2381 = vsel %vm2380, %v2372, %v2377
        %v2382 = vmul.f32 %v2365, %v2381
        %v2384 = vperm.slane %v2359, 0
        %v2386 = vmul.f32 %v2382, %v2384
        %v2388 = vperm.slane %v2360, 0
        %v2390 = vadd.f32 %v2386, %v2388
        %v2391 = vld [vmem:[#allocation15] sm:$0xff]
        %v2392 = vld [vmem:[#allocation15 + $0x8] sm:$0xff]
        %v2393 = vld [vmem:[#allocation15 + $0x10] sm:$0xff]
        %v2394 = vld [vmem:[#allocation15 + $0x18] sm:$0xff]
        %v2395 = vld [vmem:[#allocation16] sm:$0x1]
        %v2397 = vperm.slane %v2395, 0
        %v2400 = vsel %vm1380, %v2390, 0
        %2402 = vmatpush.msra.mxu0 0.0
        %2403 = vmatpush.msra.mxu0 0.0
        %2404 = vmatpush.msra.mxu0 0.0
        %2405 = vmatpush.msra.mxu0 0.0
        %2406 = vmatpush.msra.mxu0 0.0
        %2407 = vmatpush.msra.mxu0 0.0
        %2408 = vmatpush.msra.mxu0 0.0
        %2409 = vmatpush.msra.mxu0 0.0
        %2410 = vmatpush.msra.mxu0 0.0
        %2411 = vmatpush.msra.mxu0 0.0
        %2412 = vmatpush.msra.mxu0 0.0
        %2413 = vmatpush.msra.mxu0 0.0
        %2414 = vmatpush.msra.mxu0 %v2394
        %2415 = vmatpush.msra.mxu0 %v2393
        %2416 = vmatpush.msra.mxu0 %v2392
        %2417 = vmatpush.msra.mxu0 %v2391
        %2418 = vmatmul.f32.gmra.mxu0 %v2400
        %v2419 = vpop.f32.mrf.mxu0
        %v2420 = vadd.f32 %v2397, %v2419
        %2421 = vdwg.mxu0
        %v2422 = vld [vmem:[#allocation18] sm:$0xff]
        %v2423 = vld [vmem:[#allocation18 + $0x8] sm:$0xff]
        %v2424 = vld [vmem:[#allocation18 + $0x10] sm:$0xff]
        %v2425 = vld [vmem:[#allocation18 + $0x18] sm:$0xff]
        %v2426 = vld [vmem:[#allocation19] sm:$0x1]
        %v2428 = vperm.slane %v2426, 0
        %v2431 = vsel %vm1380, %v1898, 0
        %v2434 = vsel %vm1380, %v1899, 0
        %2436 = vmatpush.msra.mxu0 0.0
        %2437 = vmatpush.msra.mxu0 0.0
        %2438 = vmatpush.msra.mxu0 0.0
        %2439 = vmatpush.msra.mxu0 0.0
        %2440 = vmatpush.msra.mxu0 0.0
        %2441 = vmatpush.msra.mxu0 0.0
        %2442 = vmatpush.msra.mxu0 0.0
        %2443 = vmatpush.msra.mxu0 0.0
        %2444 = vmatpush.msra.mxu0 0.0
        %2445 = vmatpush.msra.mxu0 0.0
        %2446 = vmatpush.msra.mxu0 0.0
        %2447 = vmatpush.msra.mxu0 0.0
        %2448 = vmatpush.msra.mxu0 %v2425
        %2449 = vmatpush.msra.mxu0 %v2424
        %2450 = vmatpush.msra.mxu0 %v2423
        %2451 = vmatpush.msra.mxu0 %v2422
        %2452 = vmatmul.f32.gmra.mxu0 %v2431
        %v2453 = vpop.f32.mrf.mxu0
        %v2454 = vadd.f32 %v2428, %v2453
        %2455 = vmatmul.f32.gmra.mxu0 %v2434
        %v2456 = vpop.f32.mrf.mxu0
        %v2457 = vadd.f32 %v2428, %v2456
        %2458 = vdwg.mxu0
        %v2460 = vsel %vm1590, %v2454, 0
        %v2463 = vsel %vm1590, %v2457, 0
        %2465 = vmatpush.msra.mxu0 0.0
        %2466 = vmatpush.msra.mxu0 0.0
        %2467 = vmatpush.msra.mxu0 0.0
        %2468 = vmatpush.msra.mxu0 0.0
        %2469 = vmatpush.msra.mxu0 0.0
        %2470 = vmatpush.msra.mxu0 0.0
        %2471 = vmatpush.msra.mxu0 0.0
        %2472 = vmatpush.msra.mxu0 0.0
        %2473 = vmatpush.msra.mxu0 %v1332
        %2474 = vmatpush.msra.mxu0 %v1331
        %2475 = vmatpush.msra.mxu0 %v1330
        %2476 = vmatpush.msra.mxu0 %v1329
        %2477 = vmatpush.msra.mxu0 %v1328
        %2478 = vmatpush.msra.mxu0 %v1327
        %2479 = vmatpush.msra.mxu0 %v1326
        %2480 = vmatpush.msra.mxu0 %v1325
        %2481 = vmatmul.f32.gmra.mxu0 %v2460
        %v2482 = vpop.f32.mrf.mxu0
        %v2483 = vadd.f32 0.0, %v2482
        %2484 = vmatmul.f32.gmra.mxu0 %v2463
        %v2485 = vpop.f32.mrf.mxu0
        %v2486 = vadd.f32 0.0, %v2485
        %2487 = vdwg.mxu0
        %v2488 = vmul.f32 %v2420, %v2010
        %v2490 = vsel %vm1380, %v2488, 0
        %v2492 = vsel %vm1380, %v2454, 0
        %v2494 = vsel %vm1380, %v2457, 0
        %2496 = vmatpush.xpose.msra.mxu0 0.0
        %2497 = vmatpush.xpose.msra.mxu0 0.0
        %2498 = vmatpush.xpose.msra.mxu0 0.0
        %2499 = vmatpush.xpose.msra.mxu0 0.0
        %2500 = vmatpush.xpose.msra.mxu0 0.0
        %2501 = vmatpush.xpose.msra.mxu0 0.0
        %2502 = vmatpush.xpose.msra.mxu0 0.0
        %2503 = vmatpush.xpose.msra.mxu0 0.0
        %2504 = vmatpush.xpose.msra.mxu0 0.0
        %2505 = vmatpush.xpose.msra.mxu0 0.0
        %2506 = vmatpush.xpose.msra.mxu0 0.0
        %2507 = vmatpush.xpose.msra.mxu0 0.0
        %2508 = vmatpush.xpose.msra.mxu0 0.0
        %2509 = vmatpush.xpose.msra.mxu0 0.0
        %2510 = vmatpush.xpose.msra.mxu0 %v2494
        %2511 = vmatpush.xpose.msra.mxu0 %v2492
        %2512 = vmatmul.f32.gmra.mxu0 %v2490
        %v2513 = vpop.f32.mrf.mxu0
        %v2514 = vadd.f32 0.0, %v2513
        %2515 = vdwg.mxu0
        %v2516 = vmul.f32 %v2514, 0.35355338
        %v2517 = vsel %vm1308, 1, 0
        %vm2518 = vcmp.eq.s32.totalorder %v2517, 1
        %v2519 = vsel %vm2518, %v2516, -1e+10
        %v2520 = vsel %vm1420, %v2519, -inf
        %2521 = vmax.xlane.f32.xlu0 %v2520
        %v2522 = vpop.xlane.xlu0 %2521
        %v2523 = vsub.f32 %v2519, %v2522
        %v2524 = vmul.f32 %v2523, 1.442695
        %v2525 = vpow.pop %v2524
        %v2526 = vsel %vm1420, %v2525, 0.0
        %2527 = vadd.xlane.f32.xlu0 %v2526
        %v2528 = vpop.xlane.xlu0 %2527
        %v2529 = vrcp.pop %v2528
        %v2530 = vmul.f32 %v2528, %v2529
        %v2531 = vsub.f32 1.0, %v2530
        %v2532 = vmul.f32 %v2529, %v2531
        %v2533 = vadd.f32 %v2529, %v2532
        %vm2534 = vweird.f32 %v2528
        %vm2535 = vweird.f32 %v2529
        %vm2536 = vmor %vm2534, %vm2535
        %v2537 = vsel %vm2536, %v2529, %v2533
        %v2538 = vand.u32 2147483647, %v2528
        %vm2539 = vcmp.eq.f32.partialorder %v2538, 8.507059e+37
        %v2540 = vand.u32 %v2528, 2147483648
        %v2541 = vor.u32 1.1754944e-38, %v2540
        %v2542 = vsel %vm2539, %v2541, %v2537
        %v2543 = vmul.f32 %v2525, %v2542
        %vm2544 = vcmp.eq.s32.totalorder %v1302, %v1306
        %vm2545 = vcmp.eq.s32.totalorder %v1309, %v1306
        %v2546 = vsel %vm2544, 1.0, 0.0
        %v2547 = vsel %vm2545, 1.0, 0.0
        %v2548 = vmul.f32 %v2483, %v2010
        %v2549 = vmul.f32 %v2486, %v2010
        %v2550 = vmul.f32 %v2420, %v2071
        %v2552 = vsel %vm1380, %v2550, 0
        %2554 = vmatpush.xpose.msra.mxu0 0.0
        %2555 = vmatpush.xpose.msra.mxu0 0.0
        %2556 = vmatpush.xpose.msra.mxu0 0.0
        %2557 = vmatpush.xpose.msra.mxu0 0.0
        %2558 = vmatpush.xpose.msra.mxu0 0.0
        %2559 = vmatpush.xpose.msra.mxu0 0.0
        %2560 = vmatpush.xpose.msra.mxu0 0.0
        %2561 = vmatpush.xpose.msra.mxu0 0.0
        %2562 = vmatpush.xpose.msra.mxu0 0.0
        %2563 = vmatpush.xpose.msra.mxu0 0.0
        %2564 = vmatpush.xpose.msra.mxu0 0.0
        %2565 = vmatpush.xpose.msra.mxu0 0.0
        %2566 = vmatpush.xpose.msra.mxu0 0.0
        %2567 = vmatpush.xpose.msra.mxu0 0.0
        %2568 = vmatpush.xpose.msra.mxu0 %v2494
        %2569 = vmatpush.xpose.msra.mxu0 %v2492
        %2570 = vmatmul.f32.gmra.mxu0 %v2552
        %v2571 = vpop.f32.mrf.mxu0
        %v2572 = vadd.f32 0.0, %v2571
        %2573 = vdwg.mxu0
        %v2574 = vmul.f32 %v2572, 0.35355338
        %v2575 = vsel %vm2518, %v2574, -1e+10
        %v2576 = vsel %vm1420, %v2575, -inf
        %2577 = vmax.xlane.f32.xlu0 %v2576
        %v2578 = vpop.xlane.xlu0 %2577
        %v2579 = vsub.f32 %v2575, %v2578
        %v2580 = vmul.f32 %v2579, 1.442695
        %v2581 = vpow.pop %v2580
        %v2582 = vsel %vm1420, %v2581, 0.0
        %2583 = vadd.xlane.f32.xlu0 %v2582
        %v2584 = vpop.xlane.xlu0 %2583
        %v2585 = vrcp.pop %v2584
        %v2586 = vmul.f32 %v2584, %v2585
        %v2587 = vsub.f32 1.0, %v2586
        %v2588 = vmul.f32 %v2585, %v2587
        %v2589 = vadd.f32 %v2585, %v2588
        %vm2590 = vweird.f32 %v2584
        %vm2591 = vweird.f32 %v2585
        %vm2592 = vmor %vm2590, %vm2591
        %v2593 = vsel %vm2592, %v2585, %v2589
        %v2594 = vand.u32 2147483647, %v2584
        %vm2595 = vcmp.eq.f32.partialorder %v2594, 8.507059e+37
        %v2596 = vand.u32 %v2584, 2147483648
        %v2597 = vor.u32 1.1754944e-38, %v2596
        %v2598 = vsel %vm2595, %v2597, %v2593
        %v2599 = vmul.f32 %v2581, %v2598
        %v2600 = vadd.s32 %v1306, 4294967280
        %vm2601 = vcmp.eq.s32.totalorder %v1302, %v2600
        %vm2602 = vcmp.eq.s32.totalorder %v1309, %v2600
        %v2603 = vsel %vm2601, 1.0, 0.0
        %v2604 = vsel %vm2602, 1.0, 0.0
        %v2606 = vsel %vm1420, %v2599, 0
        %2608 = vmatpush.msra.mxu0 0.0
        %2609 = vmatpush.msra.mxu0 0.0
        %2610 = vmatpush.msra.mxu0 0.0
        %2611 = vmatpush.msra.mxu0 0.0
        %2612 = vmatpush.msra.mxu0 0.0
        %2613 = vmatpush.msra.mxu0 0.0
        %2614 = vmatpush.msra.mxu0 0.0
        %2615 = vmatpush.msra.mxu0 0.0
        %2616 = vmatpush.msra.mxu0 0.0
        %2617 = vmatpush.msra.mxu0 0.0
        %2618 = vmatpush.msra.mxu0 0.0
        %2619 = vmatpush.msra.mxu0 0.0
        %2620 = vmatpush.msra.mxu0 0.0
        %2621 = vmatpush.msra.mxu0 0.0
        %2622 = vmatpush.msra.mxu0 %v2604
        %2623 = vmatpush.msra.mxu0 %v2603
        %2624 = vmatmul.f32.gmra.mxu0 %v2606
        %v2625 = vpop.f32.mrf.mxu0
        %v2626 = vadd.f32 0.0, %v2625
        %2627 = vdwg.mxu0
        %v2629 = vsel %vm1420, %v2543, 0
        %2631 = vmatpush.msra.mxu0 0.0
        %2632 = vmatpush.msra.mxu0 0.0
        %2633 = vmatpush.msra.mxu0 0.0
        %2634 = vmatpush.msra.mxu0 0.0
        %2635 = vmatpush.msra.mxu0 0.0
        %2636 = vmatpush.msra.mxu0 0.0
        %2637 = vmatpush.msra.mxu0 0.0
        %2638 = vmatpush.msra.mxu0 0.0
        %2639 = vmatpush.msra.mxu0 0.0
        %2640 = vmatpush.msra.mxu0 0.0
        %2641 = vmatpush.msra.mxu0 0.0
        %2642 = vmatpush.msra.mxu0 0.0
        %2643 = vmatpush.msra.mxu0 0.0
        %2644 = vmatpush.msra.mxu0 0.0
        %2645 = vmatpush.msra.mxu0 %v2547
        %2646 = vmatpush.msra.mxu0 %v2546
        %2647 = vmatmul.f32.gmra.mxu0 %v2629
        %v2648 = vpop.f32.mrf.mxu0
        %v2649 = vadd.f32 %v2626, %v2648
        %2650 = vdwg.mxu0
        %v2651 = vmul.f32 %v2483, %v2071
        %v2652 = vmul.f32 %v2486, %v2071
        %2653 = vmatpush.msra.mxu0 0.0
        %2654 = vmatpush.msra.mxu0 0.0
        %2655 = vmatpush.msra.mxu0 0.0
        %2656 = vmatpush.msra.mxu0 0.0
        %2657 = vmatpush.msra.mxu0 0.0
        %2658 = vmatpush.msra.mxu0 0.0
        %2659 = vmatpush.msra.mxu0 0.0
        %2660 = vmatpush.msra.mxu0 0.0
        %2661 = vmatpush.msra.mxu0 0.0
        %2662 = vmatpush.msra.mxu0 0.0
        %2663 = vmatpush.msra.mxu0 0.0
        %2664 = vmatpush.msra.mxu0 0.0
        %2665 = vmatpush.msra.mxu0 0.0
        %2666 = vmatpush.msra.mxu0 0.0
        %2667 = vmatpush.msra.mxu0 %v2652
        %2668 = vmatpush.msra.mxu0 %v2651
        %2669 = vmatmul.f32.gmra.mxu0 %v2606
        %v2670 = vpop.f32.mrf.mxu0
        %v2671 = vadd.f32 0.0, %v2670
        %2672 = vdwg.mxu0
        %2673 = vmatpush.msra.mxu0 0.0
        %2674 = vmatpush.msra.mxu0 0.0
        %2675 = vmatpush.msra.mxu0 0.0
        %2676 = vmatpush.msra.mxu0 0.0
        %2677 = vmatpush.msra.mxu0 0.0
        %2678 = vmatpush.msra.mxu0 0.0
        %2679 = vmatpush.msra.mxu0 0.0
        %2680 = vmatpush.msra.mxu0 0.0
        %2681 = vmatpush.msra.mxu0 0.0
        %2682 = vmatpush.msra.mxu0 0.0
        %2683 = vmatpush.msra.mxu0 0.0
        %2684 = vmatpush.msra.mxu0 0.0
        %2685 = vmatpush.msra.mxu0 0.0
        %2686 = vmatpush.msra.mxu0 0.0
        %2687 = vmatpush.msra.mxu0 %v2549
        %2688 = vmatpush.msra.mxu0 %v2548
        %2689 = vmatmul.f32.gmra.mxu0 %v2629
        %v2690 = vpop.f32.mrf.mxu0
        %v2691 = vadd.f32 %v2671, %v2690
        %2692 = vdwg.mxu0
        %v2693 = vmul.f32 %v2420, %v2172
        %v2695 = vsel %vm1380, %v2693, 0
        %2697 = vmatpush.xpose.msra.mxu0 0.0
        %2698 = vmatpush.xpose.msra.mxu0 0.0
        %2699 = vmatpush.xpose.msra.mxu0 0.0
        %2700 = vmatpush.xpose.msra.mxu0 0.0
        %2701 = vmatpush.xpose.msra.mxu0 0.0
        %2702 = vmatpush.xpose.msra.mxu0 0.0
        %2703 = vmatpush.xpose.msra.mxu0 0.0
        %2704 = vmatpush.xpose.msra.mxu0 0.0
        %2705 = vmatpush.xpose.msra.mxu0 0.0
        %2706 = vmatpush.xpose.msra.mxu0 0.0
        %2707 = vmatpush.xpose.msra.mxu0 0.0
        %2708 = vmatpush.xpose.msra.mxu0 0.0
        %2709 = vmatpush.xpose.msra.mxu0 0.0
        %2710 = vmatpush.xpose.msra.mxu0 0.0
        %2711 = vmatpush.xpose.msra.mxu0 %v2494
        %2712 = vmatpush.xpose.msra.mxu0 %v2492
        %2713 = vmatmul.f32.gmra.mxu0 %v2695
        %v2714 = vpop.f32.mrf.mxu0
        %v2715 = vadd.f32 0.0, %v2714
        %2716 = vdwg.mxu0
        %v2717 = vmul.f32 %v2715, 0.35355338
        %v2718 = vsel %vm2518, %v2717, -1e+10
        %v2719 = vsel %vm1420, %v2718, -inf
        %2720 = vmax.xlane.f32.xlu0 %v2719
        %v2721 = vpop.xlane.xlu0 %2720
        %v2722 = vsub.f32 %v2718, %v2721
        %v2723 = vmul.f32 %v2722, 1.442695
        %v2724 = vpow.pop %v2723
        %v2725 = vsel %vm1420, %v2724, 0.0
        %2726 = vadd.xlane.f32.xlu0 %v2725
        %v2727 = vpop.xlane.xlu0 %2726
        %v2728 = vrcp.pop %v2727
        %v2729 = vmul.f32 %v2727, %v2728
        %v2730 = vsub.f32 1.0, %v2729
        %v2731 = vmul.f32 %v2728, %v2730
        %v2732 = vadd.f32 %v2728, %v2731
        %vm2733 = vweird.f32 %v2727
        %vm2734 = vweird.f32 %v2728
        %vm2735 = vmor %vm2733, %vm2734
        %v2736 = vsel %vm2735, %v2728, %v2732
        %v2737 = vand.u32 2147483647, %v2727
        %vm2738 = vcmp.eq.f32.partialorder %v2737, 8.507059e+37
        %v2739 = vand.u32 %v2727, 2147483648
        %v2740 = vor.u32 1.1754944e-38, %v2739
        %v2741 = vsel %vm2738, %v2740, %v2736
        %v2742 = vmul.f32 %v2724, %v2741
        %v2743 = vadd.s32 %v1306, 4294967264
        %vm2744 = vcmp.eq.s32.totalorder %v1302, %v2743
        %vm2745 = vcmp.eq.s32.totalorder %v1309, %v2743
        %v2746 = vsel %vm2744, 1.0, 0.0
        %v2747 = vsel %vm2745, 1.0, 0.0
        %v2749 = vsel %vm1420, %v2742, 0
        %2751 = vmatpush.msra.mxu0 0.0
        %2752 = vmatpush.msra.mxu0 0.0
        %2753 = vmatpush.msra.mxu0 0.0
        %2754 = vmatpush.msra.mxu0 0.0
        %2755 = vmatpush.msra.mxu0 0.0
        %2756 = vmatpush.msra.mxu0 0.0
        %2757 = vmatpush.msra.mxu0 0.0
        %2758 = vmatpush.msra.mxu0 0.0
        %2759 = vmatpush.msra.mxu0 0.0
        %2760 = vmatpush.msra.mxu0 0.0
        %2761 = vmatpush.msra.mxu0 0.0
        %2762 = vmatpush.msra.mxu0 0.0
        %2763 = vmatpush.msra.mxu0 0.0
        %2764 = vmatpush.msra.mxu0 0.0
        %2765 = vmatpush.msra.mxu0 %v2747
        %2766 = vmatpush.msra.mxu0 %v2746
        %2767 = vmatmul.f32.gmra.mxu0 %v2749
        %v2768 = vpop.f32.mrf.mxu0
        %v2769 = vadd.f32 0.0, %v2768
        %2770 = vdwg.mxu0
        %v2771 = vadd.f32 %v2649, %v2769
        %v2772 = vmul.f32 %v2483, %v2172
        %v2773 = vmul.f32 %v2486, %v2172
        %2774 = vmatpush.msra.mxu0 0.0
        %2775 = vmatpush.msra.mxu0 0.0
        %2776 = vmatpush.msra.mxu0 0.0
        %2777 = vmatpush.msra.mxu0 0.0
        %2778 = vmatpush.msra.mxu0 0.0
        %2779 = vmatpush.msra.mxu0 0.0
        %2780 = vmatpush.msra.mxu0 0.0
        %2781 = vmatpush.msra.mxu0 0.0
        %2782 = vmatpush.msra.mxu0 0.0
        %2783 = vmatpush.msra.mxu0 0.0
        %2784 = vmatpush.msra.mxu0 0.0
        %2785 = vmatpush.msra.mxu0 0.0
        %2786 = vmatpush.msra.mxu0 0.0
        %2787 = vmatpush.msra.mxu0 0.0
        %2788 = vmatpush.msra.mxu0 %v2773
        %2789 = vmatpush.msra.mxu0 %v2772
        %2790 = vmatmul.f32.gmra.mxu0 %v2749
        %v2791 = vpop.f32.mrf.mxu0
        %v2792 = vadd.f32 0.0, %v2791
        %2793 = vdwg.mxu0
        %v2794 = vadd.f32 %v2691, %v2792
        %v2795 = vmul.f32 %v2420, %v2251
        %v2797 = vsel %vm1380, %v2795, 0
        %2799 = vmatpush.xpose.msra.mxu0 0.0
        %2800 = vmatpush.xpose.msra.mxu0 0.0
        %2801 = vmatpush.xpose.msra.mxu0 0.0
        %2802 = vmatpush.xpose.msra.mxu0 0.0
        %2803 = vmatpush.xpose.msra.mxu0 0.0
        %2804 = vmatpush.xpose.msra.mxu0 0.0
        %2805 = vmatpush.xpose.msra.mxu0 0.0
        %2806 = vmatpush.xpose.msra.mxu0 0.0
        %2807 = vmatpush.xpose.msra.mxu0 0.0
        %2808 = vmatpush.xpose.msra.mxu0 0.0
        %2809 = vmatpush.xpose.msra.mxu0 0.0
        %2810 = vmatpush.xpose.msra.mxu0 0.0
        %2811 = vmatpush.xpose.msra.mxu0 0.0
        %2812 = vmatpush.xpose.msra.mxu0 0.0
        %2813 = vmatpush.xpose.msra.mxu0 %v2494
        %2814 = vmatpush.xpose.msra.mxu0 %v2492
        %2815 = vmatmul.f32.gmra.mxu0 %v2797
        %v2816 = vpop.f32.mrf.mxu0
        %v2817 = vadd.f32 0.0, %v2816
        %2818 = vdwg.mxu0
        %v2819 = vmul.f32 %v2817, 0.35355338
        %v2820 = vsel %vm2518, %v2819, -1e+10
        %v2821 = vsel %vm1420, %v2820, -inf
        %2822 = vmax.xlane.f32.xlu0 %v2821
        %v2823 = vpop.xlane.xlu0 %2822
        %v2824 = vsub.f32 %v2820, %v2823
        %v2825 = vmul.f32 %v2824, 1.442695
        %v2826 = vpow.pop %v2825
        %v2827 = vsel %vm1420, %v2826, 0.0
        %2828 = vadd.xlane.f32.xlu0 %v2827
        %v2829 = vpop.xlane.xlu0 %2828
        %v2830 = vrcp.pop %v2829
        %v2831 = vmul.f32 %v2829, %v2830
        %v2832 = vsub.f32 1.0, %v2831
        %v2833 = vmul.f32 %v2830, %v2832
        %v2834 = vadd.f32 %v2830, %v2833
        %vm2835 = vweird.f32 %v2829
        %vm2836 = vweird.f32 %v2830
        %vm2837 = vmor %vm2835, %vm2836
        %v2838 = vsel %vm2837, %v2830, %v2834
        %v2839 = vand.u32 2147483647, %v2829
        %vm2840 = vcmp.eq.f32.partialorder %v2839, 8.507059e+37
        %v2841 = vand.u32 %v2829, 2147483648
        %v2842 = vor.u32 1.1754944e-38, %v2841
        %v2843 = vsel %vm2840, %v2842, %v2838
        %v2844 = vmul.f32 %v2826, %v2843
        %v2845 = vadd.s32 %v1306, 4294967248
        %vm2846 = vcmp.eq.s32.totalorder %v1302, %v2845
        %vm2847 = vcmp.eq.s32.totalorder %v1309, %v2845
        %v2848 = vsel %vm2846, 1.0, 0.0
        %v2849 = vsel %vm2847, 1.0, 0.0
        %v2851 = vsel %vm1420, %v2844, 0
        %2853 = vmatpush.msra.mxu0 0.0
        %2854 = vmatpush.msra.mxu0 0.0
        %2855 = vmatpush.msra.mxu0 0.0
        %2856 = vmatpush.msra.mxu0 0.0
        %2857 = vmatpush.msra.mxu0 0.0
        %2858 = vmatpush.msra.mxu0 0.0
        %2859 = vmatpush.msra.mxu0 0.0
        %2860 = vmatpush.msra.mxu0 0.0
        %2861 = vmatpush.msra.mxu0 0.0
        %2862 = vmatpush.msra.mxu0 0.0
        %2863 = vmatpush.msra.mxu0 0.0
        %2864 = vmatpush.msra.mxu0 0.0
        %2865 = vmatpush.msra.mxu0 0.0
        %2866 = vmatpush.msra.mxu0 0.0
        %2867 = vmatpush.msra.mxu0 %v2849
        %2868 = vmatpush.msra.mxu0 %v2848
        %2869 = vmatmul.f32.gmra.mxu0 %v2851
        %v2870 = vpop.f32.mrf.mxu0
        %v2871 = vadd.f32 0.0, %v2870
        %2872 = vdwg.mxu0
        %v2873 = vadd.f32 %v2771, %v2871
        %v2874 = vmul.f32 %v2483, %v2251
        %v2875 = vmul.f32 %v2486, %v2251
        %2876 = vmatpush.msra.mxu0 0.0
        %2877 = vmatpush.msra.mxu0 0.0
        %2878 = vmatpush.msra.mxu0 0.0
        %2879 = vmatpush.msra.mxu0 0.0
        %2880 = vmatpush.msra.mxu0 0.0
        %2881 = vmatpush.msra.mxu0 0.0
        %2882 = vmatpush.msra.mxu0 0.0
        %2883 = vmatpush.msra.mxu0 0.0
        %2884 = vmatpush.msra.mxu0 0.0
        %2885 = vmatpush.msra.mxu0 0.0
        %2886 = vmatpush.msra.mxu0 0.0
        %2887 = vmatpush.msra.mxu0 0.0
        %2888 = vmatpush.msra.mxu0 0.0
        %2889 = vmatpush.msra.mxu0 0.0
        %2890 = vmatpush.msra.mxu0 %v2875
        %2891 = vmatpush.msra.mxu0 %v2874
        %2892 = vmatmul.f32.gmra.mxu0 %v2851
        %v2893 = vpop.f32.mrf.mxu0
        %v2894 = vadd.f32 0.0, %v2893
        %2895 = vdwg.mxu0
        %v2896 = vadd.f32 %v2794, %v2894
        %v2897 = vld [vmem:[#allocation21] sm:$0xff]
        %v2898 = vld [vmem:[#allocation21 + $0x8] sm:$0xff]
        %v2899 = vld [vmem:[#allocation21 + $0x10] sm:$0xff]
        %v2900 = vld [vmem:[#allocation21 + $0x18] sm:$0xff]
        %v2901 = vld [vmem:[#allocation22] sm:$0x1]
        %v2903 = vperm.slane %v2901, 0
        %v2906 = vsel %vm1380, %v2896, 0
        %2908 = vmatpush.msra.mxu0 0.0
        %2909 = vmatpush.msra.mxu0 0.0
        %2910 = vmatpush.msra.mxu0 0.0
        %2911 = vmatpush.msra.mxu0 0.0
        %2912 = vmatpush.msra.mxu0 0.0
        %2913 = vmatpush.msra.mxu0 0.0
        %2914 = vmatpush.msra.mxu0 0.0
        %2915 = vmatpush.msra.mxu0 0.0
        %2916 = vmatpush.msra.mxu0 0.0
        %2917 = vmatpush.msra.mxu0 0.0
        %2918 = vmatpush.msra.mxu0 0.0
        %2919 = vmatpush.msra.mxu0 0.0
        %2920 = vmatpush.msra.mxu0 %v2900
        %2921 = vmatpush.msra.mxu0 %v2899
        %2922 = vmatpush.msra.mxu0 %v2898
        %2923 = vmatpush.msra.mxu0 %v2897
        %2924 = vmatmul.f32.gmra.mxu0 %v2906
        %v2925 = vpop.f32.mrf.mxu0
        %v2926 = vadd.f32 %v2903, %v2925
        %2927 = vdwg.mxu0
        %2928 = vst.msk [vmem:[%s1295] sm:$0xff] %vm1590, %v2873
        %v2929 = vadd.f32 %v2390, %v2926
        %s2930 = scalar_lea.vmem [#allocation24], 1
        %v2931 = vld [vmem:[%s2930] sm:$0x1]
        %s2932 = scalar_lea.vmem [#allocation25], 1
        %v2933 = vld [vmem:[%s2932] sm:$0x1]
        %v2934 = vsel %vm1380, %v2929, 0.0
        %2935 = vadd.xlane.f32.xlu0 %v2934
        %v2936 = vpop.xlane.xlu0 %2935
        %v2937 = vmul.f32 %v2936, %v1851
        %v2938 = vsub.f32 %v2929, %v2937
        %v2939 = vmul.f32 %v2938, %v2938
        %v2940 = vsel %vm1380, %v2939, 0.0
        %2941 = vadd.xlane.f32.xlu0 %v2940
        %v2942 = vpop.xlane.xlu0 %2941
        %v2943 = vmul.f32 %v2942, %v1851
        %v2944 = vadd.f32 %v2943, 1e-05
        %v2945 = vrsqrt.pop %v2944
        %v2946 = vmul.f32 %v2945, %v2944
        %v2947 = vmul.f32 %v2946, %v2945
        %v2948 = vmul.f32 0.5, %v2947
        %v2949 = vsub.f32 1.5, %v2948
        %v2950 = vmul.f32 %v2945, %v2949
        %vm2951 = vweird.f32 %v2944
        %vm2952 = vweird.f32 %v2945
        %vm2953 = vmor %vm2951, %vm2952
        %v2954 = vsel %vm2953, %v2945, %v2950
        %v2955 = vmul.f32 %v2938, %v2954
        %v2957 = vperm.slane %v2931, 0
        %v2959 = vmul.f32 %v2955, %v2957
        %v2961 = vperm.slane %v2933, 0
        %v2963 = vadd.f32 %v2959, %v2961
        %v2964 = vld [vmem:[#allocation27] sm:$0xff]
        %v2965 = vld [vmem:[#allocation27 + $0x8] sm:$0xff]
        %v2966 = vld [vmem:[#allocation27 + $0x10] sm:$0xff]
        %v2967 = vld [vmem:[#allocation27 + $0x18] sm:$0xff]
        %v2968 = vld [vmem:[#allocation28] sm:$0x1]
        %v2970 = vperm.slane %v2968, 0
        %v2973 = vsel %vm1380, %v2963, 0
        %2975 = vmatpush.msra.mxu0 0.0
        %2976 = vmatpush.msra.mxu0 0.0
        %2977 = vmatpush.msra.mxu0 0.0
        %2978 = vmatpush.msra.mxu0 0.0
        %2979 = vmatpush.msra.mxu0 0.0
        %2980 = vmatpush.msra.mxu0 0.0
        %2981 = vmatpush.msra.mxu0 0.0
        %2982 = vmatpush.msra.mxu0 0.0
        %2983 = vmatpush.msra.mxu0 0.0
        %2984 = vmatpush.msra.mxu0 0.0
        %2985 = vmatpush.msra.mxu0 0.0
        %2986 = vmatpush.msra.mxu0 0.0
        %2987 = vmatpush.msra.mxu0 %v2967
        %2988 = vmatpush.msra.mxu0 %v2966
        %2989 = vmatpush.msra.mxu0 %v2965
        %2990 = vmatpush.msra.mxu0 %v2964
        %2991 = vmatmul.f32.gmra.mxu0 %v2973
        %v2992 = vpop.f32.mrf.mxu0
        %v2993 = vadd.f32 %v2970, %v2992
        %2994 = vdwg.mxu0
        %v2995 = vmax.f32 %v2993, 0.0
        %v2996 = vld [vmem:[%s51] sm:$0xff]
        %v2997 = vld [vmem:[%s51 + $0x8] sm:$0xff]
        %v2998 = vld [vmem:[%s51 + $0x10] sm:$0xff]
        %v2999 = vld [vmem:[%s51 + $0x18] sm:$0xff]
        %v3000 = vld [vmem:[%s51 + $0x20] sm:$0xff]
        %v3001 = vld [vmem:[%s51 + $0x28] sm:$0xff]
        %v3002 = vld [vmem:[%s51 + $0x30] sm:$0xff]
        %v3003 = vld [vmem:[%s51 + $0x38] sm:$0xff]
        %v3004 = vld [vmem:[#allocation30] sm:$0x1]
        %v3006 = vperm.slane %v3004, 0
        %v3009 = vsel %vm1590, %v2995, 0
        %3011 = vmatpush.msra.mxu0 0.0
        %3012 = vmatpush.msra.mxu0 0.0
        %3013 = vmatpush.msra.mxu0 0.0
        %3014 = vmatpush.msra.mxu0 0.0
        %3015 = vmatpush.msra.mxu0 0.0
        %3016 = vmatpush.msra.mxu0 0.0
        %3017 = vmatpush.msra.mxu0 0.0
        %3018 = vmatpush.msra.mxu0 0.0
        %3019 = vmatpush.msra.mxu0 %v3003
        %3020 = vmatpush.msra.mxu0 %v3002
        %3021 = vmatpush.msra.mxu0 %v3001
        %3022 = vmatpush.msra.mxu0 %v3000
        %3023 = vmatpush.msra.mxu0 %v2999
        %3024 = vmatpush.msra.mxu0 %v2998
        %3025 = vmatpush.msra.mxu0 %v2997
        %3026 = vmatpush.msra.mxu0 %v2996
        %3027 = vmatmul.f32.gmra.mxu0 %v3009
        %v3028 = vpop.f32.mrf.mxu0
        %v3029 = vadd.f32 %v3006, %v3028
        %3030 = vdwg.mxu0
        %v3031 = vadd.f32 %v2963, %v3029
        %s3032 = scalar_lea.vmem [#allocation24], 2
        %v3033 = vld [vmem:[%s3032] sm:$0x1]
        %s3034 = scalar_lea.vmem [#allocation25], 2
        %v3035 = vld [vmem:[%s3034] sm:$0x1]
        %v3036 = vsel %vm1380, %v3031, 0.0
        %3037 = vadd.xlane.f32.xlu0 %v3036
        %v3038 = vpop.xlane.xlu0 %3037
        %v3039 = vmul.f32 %v3038, %v1851
        %v3040 = vsub.f32 %v3031, %v3039
        %v3041 = vmul.f32 %v3040, %v3040
        %v3042 = vsel %vm1380, %v3041, 0.0
        %3043 = vadd.xlane.f32.xlu0 %v3042
        %v3044 = vpop.xlane.xlu0 %3043
        %v3045 = vmul.f32 %v3044, %v1851
        %v3046 = vadd.f32 %v3045, 1e-05
        %v3047 = vrsqrt.pop %v3046
        %v3048 = vmul.f32 %v3047, %v3046
        %v3049 = vmul.f32 %v3048, %v3047
        %v3050 = vmul.f32 0.5, %v3049
        %v3051 = vsub.f32 1.5, %v3050
        %v3052 = vmul.f32 %v3047, %v3051
        %vm3053 = vweird.f32 %v3046
        %vm3054 = vweird.f32 %v3047
        %vm3055 = vmor %vm3053, %vm3054
        %v3056 = vsel %vm3055, %v3047, %v3052
        %v3057 = vmul.f32 %v3040, %v3056
        %v3059 = vperm.slane %v3033, 0
        %v3061 = vmul.f32 %v3057, %v3059
        %v3063 = vperm.slane %v3035, 0
        %v3065 = vadd.f32 %v3061, %v3063
        %v3066 = vmul.f32 %v3065, %v3065
        %v3067 = vsel %vm1380, %v3066, 0.0
        %3068 = vadd.xlane.f32.xlu0 %v3067
        %v3069 = vpop.xlane.xlu0 %3068
        %v3070 = vrsqrt.pop %v3069
        %v3071 = vmul.f32 %v3070, %v3069
        %v3072 = vmul.f32 %v3071, %v3070
        %v3073 = vmul.f32 0.5, %v3072
        %v3074 = vsub.f32 1.5, %v3073
        %v3075 = vmul.f32 %v3070, %v3074
        %v3076 = vmul.f32 %v3069, %v3075
        %vm3077 = vcmp.eq.f32.partialorder %v3069, inf
        %v3078 = vsel %vm3077, %v3069, %v3076
        %vm3079 = vcmp.eq.f32.partialorder %v3069, 0.0
        %v3080 = vand.u32 %v3069, 2147483648
        %v3081 = vsel %vm3079, %v3080, %v3078
        %v3082 = vrot.slane %v3081, 4
        %v3083 = vmax.f32 %v3081, %v3082
        %v3084 = vrot.slane %v3083, 2
        %v3085 = vmax.f32 %v3083, %v3084
        %v3086 = vrot.slane %v3085, 1
        %v3087 = vmax.f32 %v3085, %v3086
        %v3088 = vsub.f32 %v3081, %v3087
        %v3089 = vmul.f32 %v3088, 1.442695
        %v3090 = vpow.pop %v3089
        %v3091 = vrot.slane %v3090, 4
        %v3092 = vadd.f32 %v3090, %v3091
        %v3093 = vrot.slane %v3092, 2
        %v3094 = vadd.f32 %v3092, %v3093
        %v3095 = vrot.slane %v3094, 1
        %v3096 = vadd.f32 %v3094, %v3095
        %v3097 = vrcp.pop %v3096
        %v3098 = vmul.f32 %v3096, %v3097
        %v3099 = vsub.f32 1.0, %v3098
        %v3100 = vmul.f32 %v3097, %v3099
        %v3101 = vadd.f32 %v3097, %v3100
        %vm3102 = vweird.f32 %v3096
        %vm3103 = vweird.f32 %v3097
        %vm3104 = vmor %vm3102, %vm3103
        %v3105 = vsel %vm3104, %v3097, %v3101
        %v3106 = vand.u32 2147483647, %v3096
        %vm3107 = vcmp.eq.f32.partialorder %v3106, 8.507059e+37
        %v3108 = vand.u32 %v3096, 2147483648
        %v3109 = vor.u32 1.1754944e-38, %v3108
        %v3110 = vsel %vm3107, %v3109, %v3105
        %v3111 = vmul.f32 %v3090, %v3110
        %v3112 = vmul.f32 %v3065, %v3111
        %v3113 = vsel %vm1380, %v3112, 0.0
        %v3114 = vrot.slane %v3113, 4
        %v3115 = vadd.f32 %v3113, %v3114
        %v3116 = vrot.slane %v3115, 2
        %v3117 = vadd.f32 %v3115, %v3116
        %v3118 = vrot.slane %v3117, 1
        %v3119 = vadd.f32 %v3117, %v3118
        %v3120 = vld [vmem:[#allocation31] sm:$0xff]
        %v3121 = vld [vmem:[#allocation31 + $0x8] sm:$0xff]
        %v3122 = vld [vmem:[#allocation31 + $0x10] sm:$0xff]
        %v3123 = vld [vmem:[#allocation31 + $0x18] sm:$0xff]
        %v3124 = vld [vmem:[#allocation33] sm:$0x1]
        %v3126 = vsel %vm1380, %v3119, 0
        %3128 = vmatpush.msra.mxu0 0.0
        %3129 = vmatpush.msra.mxu0 0.0
        %3130 = vmatpush.msra.mxu0 0.0
        %3131 = vmatpush.msra.mxu0 0.0
        %3132 = vmatpush.msra.mxu0 0.0
        %3133 = vmatpush.msra.mxu0 0.0
        %3134 = vmatpush.msra.mxu0 0.0
        %3135 = vmatpush.msra.mxu0 0.0
        %3136 = vmatpush.msra.mxu0 0.0
        %3137 = vmatpush.msra.mxu0 0.0
        %3138 = vmatpush.msra.mxu0 0.0
        %3139 = vmatpush.msra.mxu0 0.0
        %3140 = vmatpush.msra.mxu0 %v3123
        %3141 = vmatpush.msra.mxu0 %v3122
        %3142 = vmatpush.msra.mxu0 %v3121
        %3143 = vmatpush.msra.mxu0 %v3120
        %3144 = vmatmul.f32.gmra.mxu0 %v3126
        %v3145 = vpop.f32.mrf.mxu0
        %v3146 = vadd.f32 %v3124, %v3145
        %3147 = vdwg.mxu0
        %v3148 = vmax.f32 %v3146, 0.0
        %v3149 = vld [vmem:[#allocation34] sm:$0xff]
        %v3150 = vld [vmem:[#allocation34 + $0x8] sm:$0xff]
        %v3151 = vld [vmem:[#allocation34 + $0x10] sm:$0xff]
        %v3152 = vld [vmem:[#allocation34 + $0x18] sm:$0xff]
        %v3153 = vld [vmem:[#allocation36] sm:$0x1]
        %v3155 = vsel %vm1380, %v3148, 0
        %3157 = vmatpush.msra.mxu0 0.0
        %3158 = vmatpush.msra.mxu0 0.0
        %3159 = vmatpush.msra.mxu0 0.0
        %3160 = vmatpush.msra.mxu0 0.0
        %3161 = vmatpush.msra.mxu0 0.0
        %3162 = vmatpush.msra.mxu0 0.0
        %3163 = vmatpush.msra.mxu0 0.0
        %3164 = vmatpush.msra.mxu0 0.0
        %3165 = vmatpush.msra.mxu0 0.0
        %3166 = vmatpush.msra.mxu0 0.0
        %3167 = vmatpush.msra.mxu0 0.0
        %3168 = vmatpush.msra.mxu0 0.0
        %3169 = vmatpush.msra.mxu0 %v3152
        %3170 = vmatpush.msra.mxu0 %v3151
        %3171 = vmatpush.msra.mxu0 %v3150
        %3172 = vmatpush.msra.mxu0 %v3149
        %3173 = vmatmul.f32.gmra.mxu0 %v3155
        %v3174 = vpop.f32.mrf.mxu0
        %v3175 = vadd.f32 %v3153, %v3174
        %3176 = vdwg.mxu0
        %vm3177 = vcmask 516096
        %3178 = vst.msk [vmem:[%s1298] sm:$0x1] %vm3177, %v3175
        %vm3179 = vcmask 253952
        %3180 = vst.msk [vmem:[%s1298] sm:$0x1] %vm3179, %v3119
        %p3181 = scmp.lt.s32.totalorder %s101, 1
        %s3182 = scalar_select %p3181, %s101, 1
        %s3183 = smul.addr %s3182, 8
        %s3184 = scalar_lea.vmem %s63, %s3183
        %p3185 = scmp.lt.s32.totalorder %s101, 1
        %s3186 = scalar_select %p3185, %s101, 1
        %s3187 = scalar_lea.vmem %s65, %s3186
        // Predicated region
        $region221: #{predictor_forward.1} parent=135 // pred_check
          %p3188 = pneg %p738
        $region222: #{predictor_forward.1} parent=135 // pred_check_branch
          %3190 = sbr.rel (%p3188) target = $region224
        $region223: #{predictor_forward.1} parent=135 // pred_region
          _
        $region224: #{predictor_forward.1} parent=135 // pred_fallthru
          _
        // Predicated region
        $region225: #{predictor_forward.1} parent=135 // pred_check
          %p3191 = pneg %p764
        $region226: #{predictor_forward.1} parent=135 // pred_check_branch
          %3193 = sbr.rel (%p3191) target = $region228
        $region227: #{predictor_forward.1} parent=135 // pred_region
          _
        $region228: #{predictor_forward.1} parent=135 // pred_fallthru
          _
      $region136: #{predictor_forward.1} parent=5 // pred_fallthru
        _
      %p3194 = scmp.le.s32.totalorder 2, %s96
      // Predicated region
      $region229: #{predictor_forward.1} parent=5 // pred_check
        %p3195 = pneg %p3194
      $region230: #{predictor_forward.1} parent=5 // pred_check_branch
        %3197 = sbr.rel (%p3195) target = $region232
      $region231: #{predictor_forward.1} parent=5 // pred_region
        %s3198 = ssub.s32 %s96, 2
        // Predicated region
        $region233: #{predictor_forward.1} parent=231 // pred_check
          %p3199 = pneg %p744
        $region234: #{predictor_forward.1} parent=231 // pred_check_branch
          %3201 = sbr.rel (%p3199) target = $region236
        $region235: #{predictor_forward.1} parent=231 // pred_region
          %p3202 = scmp.lt.s32.totalorder %s102, 1
          %s3203 = scalar_select %p3202, %s102, 1
          %s3204 = smul.addr %s3203, 8
          %s3205 = scalar_lea.vmem %s63, %s3204
        $region236: #{predictor_forward.1} parent=231 // pred_fallthru
          _
        // Predicated region
        $region237: #{predictor_forward.1} parent=231 // pred_check
          %p3206 = pneg %p770
        $region238: #{predictor_forward.1} parent=231 // pred_check_branch
          %3208 = sbr.rel (%p3206) target = $region240
        $region239: #{predictor_forward.1} parent=231 // pred_region
          %p3209 = scmp.lt.s32.totalorder %s102, 1
          %s3210 = scalar_select %p3209, %s102, 1
          %s3211 = scalar_lea.vmem %s65, %s3210
        $region240: #{predictor_forward.1} parent=231 // pred_fallthru
          _
      $region232: #{predictor_forward.1} parent=5 // pred_fallthru
        _
    $region6: #{predictor_forward.1} parent=1 // loop_footer
      %s100 = sadd.s32 1, %s96
    $region7: #{predictor_forward.1} parent=1 // loop_footer_branch
      %95 = sbr.rel target = $region3
    $region8: #{predictor_forward.1} parent=1 // loop_exit
      _
    %3212 = vsyncpa [#allocation6], 1
    %s3213 = scalar_lea.sflag [#allocation6], 1
    %3214 = vsyncpa %s3213, 1
    %3215 = vsyncpa [#allocation8], 1
    %3216 = vsyncpa [#allocation11], 1
    %3217 = vsyncpa [#allocation14], 1
    %3218 = vsyncpa [#allocation17], 1
    %3219 = vsyncpa [#allocation20], 1
    %3220 = vsyncpa [#allocation23], 1
    %3221 = vsyncpa [#allocation26], 1
    %3222 = vsyncpa [#allocation29], 1
    %3223 = vsyncpa [#allocation32], 1
    %3224 = vsyncpa [#allocation35], 1

</llo_original>
